<compile_context>
chip_gen: v7x
topology: tpu7x:2x2x1
jax: 0.10.0
libtpu: 0.0.40
codegen_flags: <defaults>
</compile_context>

<pallas_src>
import jax
import jax.numpy as jnp
from jax.experimental import pallas as pl
from jax.experimental.pallas import tpu as pltpu


def _leaky_relu_bf16(x32, slope=0.2):
    """LeakyReLU applied packed in bf16 (input is the f32 matmul acc + bias)."""
    xb = x32.astype(jnp.bfloat16)
    return jnp.where(xb > 0, xb, slope * xb)


def discriminator_mlp_kernel(a_ref, s_ref,
                             w1a_ref, w1s_ref, b1_ref,
                             w2_ref, b2_ref,
                             w3_ref, b3_ref,
                             w4_ref, b4_ref,
                             o_ref):
    # Fused concat: x @ w1 == a_flat @ w1[:Da] + s_flat @ w1[Da:]
    a = a_ref[...]                                              # bf16 (TB, Da)
    s = s_ref[...]                                              # bf16 (TB, Ds)
    h = (jnp.dot(a, w1a_ref[...], preferred_element_type=jnp.float32)
         + jnp.dot(s, w1s_ref[...], preferred_element_type=jnp.float32)
         + b1_ref[...])
    h = _leaky_relu_bf16(h)                                     # bf16 (TB, 1024)
    # Dropout(0.3) -> identity in eval mode

    h = jnp.dot(h, w2_ref[...], preferred_element_type=jnp.float32) + b2_ref[...]
    h = _leaky_relu_bf16(h)                                     # bf16 (TB, 512)

    h = jnp.dot(h, w3_ref[...], preferred_element_type=jnp.float32) + b3_ref[...]
    h = _leaky_relu_bf16(h)                                     # bf16 (TB, 256)

    # Final layer zero-padded to 128 output lanes (only column 0 meaningful)
    # to keep the output store lane-dense; sigmoid in f32 (EUP), store bf16.
    h = jnp.dot(h, w4_ref[...], preferred_element_type=jnp.float32) + b4_ref[...]
    o_ref[...] = jax.nn.sigmoid(h).astype(o_ref.dtype)          # bf16 (TB, 128)


def prepare_params(params, d_actions):
    """One-time parameter prep: bf16 weights, w1 split (actions/scenes halves),
    final layer zero-padded to 128 output lanes."""
    w1, b1, w2, b2, w3, b3, w4, b4 = params
    w1a = w1[:d_actions].astype(jnp.bfloat16)
    w1s = w1[d_actions:].astype(jnp.bfloat16)
    w4p = (jnp.zeros((w4.shape[0], 128), jnp.float32)
           .at[:, 0:1].set(w4).astype(jnp.bfloat16))
    b4p = jnp.zeros((1, 128), jnp.float32).at[:, 0:1].set(b4)
    return (w1a, w1s, b1.astype(jnp.float32),
            w2.astype(jnp.bfloat16), b2.astype(jnp.float32),
            w3.astype(jnp.bfloat16), b3.astype(jnp.float32),
            w4p, b4p)


def _round_up(x, m):
    return ((x + m - 1) // m) * m


def discriminator_forward(actions, scenes, prep, *, batch_tile=512):
    """actions: (B, a_chan, W, W); scenes: (B, s_chan, W, W). Returns (B,)."""
    B = actions.shape[0]
    # Ship the streamed activation tiles as bf16.
    a_flat = actions.reshape(B, -1).astype(jnp.bfloat16)        # (B, Da)
    s_flat = scenes.reshape(B, -1).astype(jnp.bfloat16)         # (B, Ds)
    Da, Ds = a_flat.shape[1], s_flat.shape[1]

    # Batch tile: multiple of 16 (bf16 sublane packing), capped at batch_tile.
    # For mid-size batches force >= 2 grid steps so ("parallel",) can split the
    # batch across both TensorCores on v7x.
    TB = min(batch_tile, _round_up(B, 16))
    if B > 32 and pl.cdiv(B, TB) < 2:
        TB = _round_up(pl.cdiv(B, 2), 16)
    grid = (pl.cdiv(B, TB),)
    # No jnp.pad of the inputs: the (possibly partial) last block is handled by
    # Pallas -- OOB rows compute garbage that never crosses rows and is masked
    # away on the output writeback.

    w1a, w1s, b1, w2, b2, w3, b3, w4p, b4p = prep

    def batch_spec(ncols):
        # Tiled over the batch grid axis -> pipelined (double-buffered).
        return pl.BlockSpec((TB, ncols), lambda i: (i, 0))

    def resident(arr):
        # Full-array block with a constant block index: DMA'd once, stays
        # VMEM-resident across all grid steps.
        return pl.BlockSpec(arr.shape, lambda i: (0, 0))

    out_full = pl.pallas_call(
        discriminator_mlp_kernel,
        out_shape=jax.ShapeDtypeStruct((B, 128), jnp.bfloat16),
        grid=grid,
        in_specs=[batch_spec(Da), batch_spec(Ds),
                  resident(w1a), resident(w1s), resident(b1),
                  resident(w2), resident(b2),
                  resident(w3), resident(b3),
                  resident(w4p), resident(b4p)],
        out_specs=batch_spec(128),
        compiler_params=pltpu.CompilerParams(
            dimension_semantics=("parallel",),
            vmem_limit_bytes=32 * 1024 * 1024),
    )(a_flat, s_flat, w1a, w1s, b1, w2, b2, w3, b3, w4p, b4p)

    out = out_full[:, 0:1].astype(jnp.float32)   # (B, 1) == self.model(x) output
    return jnp.squeeze(out)                      # (B,)   == out.squeeze()


def init_linear(key, fan_in, fan_out):
    """PyTorch nn.Linear default init, weight stored as (in, out)."""
    k = 1.0 / jnp.sqrt(jnp.float32(fan_in))
    kw, kb = jax.random.split(key)
    w = jax.random.uniform(kw, (fan_in, fan_out), jnp.float32, -k, k)
    b = jax.random.uniform(kb, (1, fan_out), jnp.float32, -k, k)
    return w, b


def reference_forward(actions, scenes, params):
    """Plain-JAX reference emulating the kernel's mixed precision (bf16
    weights/activations, f32 accumulation, eval-mode dropout = identity)."""
    B = actions.shape[0]
    x = jnp.concatenate([actions.reshape(B, -1), scenes.reshape(B, -1)],
                        axis=1)
    w1, b1, w2, b2, w3, b3, w4, b4 = params

    def bf(v):
        return v.astype(jnp.bfloat16)

    def layer(h_bf, w, b):
        return jnp.dot(h_bf, bf(w), preferred_element_type=jnp.float32) + b

    h = _leaky_relu_bf16(layer(bf(x), w1, b1))
    h = _leaky_relu_bf16(layer(h, w2, b2))
    h = _leaky_relu_bf16(layer(h, w3, b3))
    out = jax.nn.sigmoid(layer(h, w4, b4))
    out = out.astype(jnp.bfloat16).astype(jnp.float32)   # kernel stores bf16
    return jnp.squeeze(out)


if __name__ == "__main__":
    # Small shapes consistent with the module:
    # width=16, s_chan=2, a_chan=2 -> D = width**2 * (s_chan + a_chan) = 1024
    B, W, S_CHAN, A_CHAN = 2, 16, 2, 2
    Da = W * W * A_CHAN
    D = W * W * (S_CHAN + A_CHAN)

    key = jax.random.PRNGKey(0)
    k_act, k_scn, k1, k2, k3, k4 = jax.random.split(key, 6)

    actions = jax.random.normal(k_act, (B, A_CHAN, W, W), jnp.float32)
    scenes = jax.random.normal(k_scn, (B, S_CHAN, W, W), jnp.float32)

    w1, b1 = init_linear(k1, D, 1024)
    w2, b2 = init_linear(k2, 1024, 512)
    w3, b3 = init_linear(k3, 512, 256)
    w4, b4 = init_linear(k4, 256, 1)
    params = (w1, b1, w2, b2, w3, b3, w4, b4)

    prep = prepare_params(params, Da)   # one-time prep (bf16 cast, split, pad)

    out = discriminator_forward(actions, scenes, prep)
    out = jax.block_until_ready(out)

    ref = jax.block_until_ready(reference_forward(actions, scenes, params))
    assert out.shape == (B,), out.shape
    assert jnp.allclose(out, ref, atol=1e-2, rtol=1e-2), (out, ref)

    print("KERNEL_OK")
</pallas_src>

<mosaic_0001>
module attributes {stable_mosaic.version = 11 : i64} {
  func.func @discriminator_mlp_kernel(%arg0: i32, %arg1: memref<16x512xbf16, #tpu.memory_space<vmem>>, %arg2: memref<16x512xbf16, #tpu.memory_space<vmem>>, %arg3: memref<512x1024xbf16, #tpu.memory_space<vmem>>, %arg4: memref<512x1024xbf16, #tpu.memory_space<vmem>>, %arg5: memref<1x1024xf32, #tpu.memory_space<vmem>>, %arg6: memref<1024x512xbf16, #tpu.memory_space<vmem>>, %arg7: memref<1x512xf32, #tpu.memory_space<vmem>>, %arg8: memref<512x256xbf16, #tpu.memory_space<vmem>>, %arg9: memref<1x256xf32, #tpu.memory_space<vmem>>, %arg10: memref<256x128xbf16, #tpu.memory_space<vmem>>, %arg11: memref<1x128xf32, #tpu.memory_space<vmem>>, %arg12: memref<16x128xbf16, #tpu.memory_space<vmem>>) attributes {dimension_semantics = [#tpu.dimension_semantics<parallel>], iteration_bounds = array<i64: 1>, scalar_prefetch = 0 : i64, scratch_operands = 0 : i64, tpu.core_type = #tpu.core_type<tc>, window_params = [{transform_indices = @transform_0, window_bounds = array<i64: 16, 512>}, {transform_indices = @transform_1, window_bounds = array<i64: 16, 512>}, {pipeline_mode = #tpu.pipeline_mode<synchronous>, transform_indices = @transform_2, window_bounds = array<i64: 512, 1024>}, {pipeline_mode = #tpu.pipeline_mode<synchronous>, transform_indices = @transform_3, window_bounds = array<i64: 512, 1024>}, {pipeline_mode = #tpu.pipeline_mode<synchronous>, transform_indices = @transform_4, window_bounds = array<i64: 1, 1024>}, {pipeline_mode = #tpu.pipeline_mode<synchronous>, transform_indices = @transform_5, window_bounds = array<i64: 1024, 512>}, {pipeline_mode = #tpu.pipeline_mode<synchronous>, transform_indices = @transform_6, window_bounds = array<i64: 1, 512>}, {pipeline_mode = #tpu.pipeline_mode<synchronous>, transform_indices = @transform_7, window_bounds = array<i64: 512, 256>}, {pipeline_mode = #tpu.pipeline_mode<synchronous>, transform_indices = @transform_8, window_bounds = array<i64: 1, 256>}, {pipeline_mode = #tpu.pipeline_mode<synchronous>, transform_indices = @transform_9, window_bounds = array<i64: 256, 128>}, {pipeline_mode = #tpu.pipeline_mode<synchronous>, transform_indices = @transform_10, window_bounds = array<i64: 1, 128>}, {transform_indices = @transform_11, window_bounds = array<i64: 16, 128>}]} {
    %c0 = arith.constant 0 : index
    %c0_0 = arith.constant 0 : index
    %0 = vector.load %arg1[%c0, %c0_0] : memref<16x512xbf16, #tpu.memory_space<vmem>>, vector<16x512xbf16>
    %c0_1 = arith.constant 0 : index
    %c0_2 = arith.constant 0 : index
    %1 = vector.load %arg2[%c0_1, %c0_2] : memref<16x512xbf16, #tpu.memory_space<vmem>>, vector<16x512xbf16>
    %c0_3 = arith.constant 0 : index
    %c0_4 = arith.constant 0 : index
    %2 = vector.load %arg3[%c0_3, %c0_4] : memref<512x1024xbf16, #tpu.memory_space<vmem>>, vector<512x1024xbf16>
    %cst = arith.constant dense<0.000000e+00> : vector<16x1024xf32>
    %3 = tpu.matmul %0, %2, %cst {dimension_numbers = #tpu.dot_dimension_numbers<[1], [0], [0], [1], [0, 0, 1, 1], [], []>} : vector<16x512xbf16>, vector<512x1024xbf16>, vector<16x1024xf32> -> vector<16x1024xf32>
    %c0_5 = arith.constant 0 : index
    %c0_6 = arith.constant 0 : index
    %4 = vector.load %arg4[%c0_5, %c0_6] : memref<512x1024xbf16, #tpu.memory_space<vmem>>, vector<512x1024xbf16>
    %cst_7 = arith.constant dense<0.000000e+00> : vector<16x1024xf32>
    %5 = tpu.matmul %1, %4, %cst_7 {dimension_numbers = #tpu.dot_dimension_numbers<[1], [0], [0], [1], [0, 0, 1, 1], [], []>} : vector<16x512xbf16>, vector<512x1024xbf16>, vector<16x1024xf32> -> vector<16x1024xf32>
    %6 = arith.addf %3, %5 : vector<16x1024xf32>
    %c0_8 = arith.constant 0 : index
    %c0_9 = arith.constant 0 : index
    %7 = vector.load %arg5[%c0_8, %c0_9] : memref<1x1024xf32, #tpu.memory_space<vmem>>, vector<1x1024xf32>
    %8 = vector.broadcast %7 : vector<1x1024xf32> to vector<16x1024xf32>
    %9 = arith.addf %6, %8 : vector<16x1024xf32>
    %10 = arith.truncf %9 : vector<16x1024xf32> to vector<16x1024xbf16>
    %cst_10 = arith.constant 0.000000e+00 : bf16
    %11 = vector.broadcast %cst_10 : bf16 to vector<16x1024xbf16>
    %12 = arith.cmpf ogt, %10, %11 : vector<16x1024xbf16>
    %cst_11 = arith.constant 2.001950e-01 : bf16
    %13 = vector.broadcast %cst_11 : bf16 to vector<16x1024xbf16>
    %14 = arith.mulf %13, %10 : vector<16x1024xbf16>
    %15 = arith.select %12, %10, %14 : vector<16x1024xi1>, vector<16x1024xbf16>
    %c0_12 = arith.constant 0 : index
    %c0_13 = arith.constant 0 : index
    %16 = vector.load %arg6[%c0_12, %c0_13] : memref<1024x512xbf16, #tpu.memory_space<vmem>>, vector<1024x512xbf16>
    %cst_14 = arith.constant dense<0.000000e+00> : vector<16x512xf32>
    %17 = tpu.matmul %15, %16, %cst_14 {dimension_numbers = #tpu.dot_dimension_numbers<[1], [0], [0], [1], [0, 0, 1, 1], [], []>} : vector<16x1024xbf16>, vector<1024x512xbf16>, vector<16x512xf32> -> vector<16x512xf32>
    %c0_15 = arith.constant 0 : index
    %c0_16 = arith.constant 0 : index
    %18 = vector.load %arg7[%c0_15, %c0_16] : memref<1x512xf32, #tpu.memory_space<vmem>>, vector<1x512xf32>
    %19 = vector.broadcast %18 : vector<1x512xf32> to vector<16x512xf32>
    %20 = arith.addf %17, %19 : vector<16x512xf32>
    %21 = arith.truncf %20 : vector<16x512xf32> to vector<16x512xbf16>
    %cst_17 = arith.constant 0.000000e+00 : bf16
    %22 = vector.broadcast %cst_17 : bf16 to vector<16x512xbf16>
    %23 = arith.cmpf ogt, %21, %22 : vector<16x512xbf16>
    %cst_18 = arith.constant 2.001950e-01 : bf16
    %24 = vector.broadcast %cst_18 : bf16 to vector<16x512xbf16>
    %25 = arith.mulf %24, %21 : vector<16x512xbf16>
    %26 = arith.select %23, %21, %25 : vector<16x512xi1>, vector<16x512xbf16>
    %c0_19 = arith.constant 0 : index
    %c0_20 = arith.constant 0 : index
    %27 = vector.load %arg8[%c0_19, %c0_20] : memref<512x256xbf16, #tpu.memory_space<vmem>>, vector<512x256xbf16>
    %cst_21 = arith.constant dense<0.000000e+00> : vector<16x256xf32>
    %28 = tpu.matmul %26, %27, %cst_21 {dimension_numbers = #tpu.dot_dimension_numbers<[1], [0], [0], [1], [0, 0, 1, 1], [], []>} : vector<16x512xbf16>, vector<512x256xbf16>, vector<16x256xf32> -> vector<16x256xf32>
    %c0_22 = arith.constant 0 : index
    %c0_23 = arith.constant 0 : index
    %29 = vector.load %arg9[%c0_22, %c0_23] : memref<1x256xf32, #tpu.memory_space<vmem>>, vector<1x256xf32>
    %30 = vector.broadcast %29 : vector<1x256xf32> to vector<16x256xf32>
    %31 = arith.addf %28, %30 : vector<16x256xf32>
    %32 = arith.truncf %31 : vector<16x256xf32> to vector<16x256xbf16>
    %cst_24 = arith.constant 0.000000e+00 : bf16
    %33 = vector.broadcast %cst_24 : bf16 to vector<16x256xbf16>
    %34 = arith.cmpf ogt, %32, %33 : vector<16x256xbf16>
    %cst_25 = arith.constant 2.001950e-01 : bf16
    %35 = vector.broadcast %cst_25 : bf16 to vector<16x256xbf16>
    %36 = arith.mulf %35, %32 : vector<16x256xbf16>
    %37 = arith.select %34, %32, %36 : vector<16x256xi1>, vector<16x256xbf16>
    %c0_26 = arith.constant 0 : index
    %c0_27 = arith.constant 0 : index
    %38 = vector.load %arg10[%c0_26, %c0_27] : memref<256x128xbf16, #tpu.memory_space<vmem>>, vector<256x128xbf16>
    %cst_28 = arith.constant dense<0.000000e+00> : vector<16x128xf32>
    %39 = tpu.matmul %37, %38, %cst_28 {dimension_numbers = #tpu.dot_dimension_numbers<[1], [0], [0], [1], [0, 0, 1, 1], [], []>} : vector<16x256xbf16>, vector<256x128xbf16>, vector<16x128xf32> -> vector<16x128xf32>
    %c0_29 = arith.constant 0 : index
    %c0_30 = arith.constant 0 : index
    %40 = vector.load %arg11[%c0_29, %c0_30] : memref<1x128xf32, #tpu.memory_space<vmem>>, vector<1x128xf32>
    %41 = vector.broadcast %40 : vector<1x128xf32> to vector<16x128xf32>
    %42 = arith.addf %39, %41 : vector<16x128xf32>
    %43 = arith.negf %42 : vector<16x128xf32>
    %44 = math.exp %43 : vector<16x128xf32>
    %cst_31 = arith.constant 1.000000e+00 : f32
    %45 = vector.broadcast %cst_31 : f32 to vector<16x128xf32>
    %46 = arith.addf %45, %44 : vector<16x128xf32>
    %47 = arith.divf %45, %46 : vector<16x128xf32>
    %48 = arith.truncf %47 : vector<16x128xf32> to vector<16x128xbf16>
    %c0_32 = arith.constant 0 : index
    %c0_33 = arith.constant 0 : index
    %49 = vector.load %arg12[%c0_32, %c0_33] : memref<16x128xbf16, #tpu.memory_space<vmem>>, vector<16x128xbf16>
    tpu.vector_store %arg12[%c0_32, %c0_33], %48 {strides = array<i32>} : memref<16x128xbf16, #tpu.memory_space<vmem>>, vector<16x128xbf16>,
    return
  }
  func.func @transform_0(%arg0: i32) -> (i32, i32) {
    %c0_i32 = arith.constant 0 : i32
    %c0_i32_0 = arith.constant 0 : i32
    return %arg0, %c0_i32 : i32, i32
  }
  func.func @transform_1(%arg0: i32) -> (i32, i32) {
    %c0_i32 = arith.constant 0 : i32
    %c0_i32_0 = arith.constant 0 : i32
    return %arg0, %c0_i32 : i32, i32
  }
  func.func @transform_2(%arg0: i32) -> (i32, i32) {
    %c0_i32 = arith.constant 0 : i32
    %c0_i32_0 = arith.constant 0 : i32
    %c0_i32_1 = arith.constant 0 : i32
    return %c0_i32, %c0_i32_0 : i32, i32
  }
  func.func @transform_3(%arg0: i32) -> (i32, i32) {
    %c0_i32 = arith.constant 0 : i32
    %c0_i32_0 = arith.constant 0 : i32
    %c0_i32_1 = arith.constant 0 : i32
    return %c0_i32, %c0_i32_0 : i32, i32
  }
  func.func @transform_4(%arg0: i32) -> (i32, i32) {
    %c0_i32 = arith.constant 0 : i32
    %c0_i32_0 = arith.constant 0 : i32
    %c0_i32_1 = arith.constant 0 : i32
    return %c0_i32, %c0_i32_0 : i32, i32
  }
  func.func @transform_5(%arg0: i32) -> (i32, i32) {
    %c0_i32 = arith.constant 0 : i32
    %c0_i32_0 = arith.constant 0 : i32
    %c0_i32_1 = arith.constant 0 : i32
    return %c0_i32, %c0_i32_0 : i32, i32
  }
  func.func @transform_6(%arg0: i32) -> (i32, i32) {
    %c0_i32 = arith.constant 0 : i32
    %c0_i32_0 = arith.constant 0 : i32
    %c0_i32_1 = arith.constant 0 : i32
    return %c0_i32, %c0_i32_0 : i32, i32
  }
  func.func @transform_7(%arg0: i32) -> (i32, i32) {
    %c0_i32 = arith.constant 0 : i32
    %c0_i32_0 = arith.constant 0 : i32
    %c0_i32_1 = arith.constant 0 : i32
    return %c0_i32, %c0_i32_0 : i32, i32
  }
  func.func @transform_8(%arg0: i32) -> (i32, i32) {
    %c0_i32 = arith.constant 0 : i32
    %c0_i32_0 = arith.constant 0 : i32
    %c0_i32_1 = arith.constant 0 : i32
    return %c0_i32, %c0_i32_0 : i32, i32
  }
  func.func @transform_9(%arg0: i32) -> (i32, i32) {
    %c0_i32 = arith.constant 0 : i32
    %c0_i32_0 = arith.constant 0 : i32
    %c0_i32_1 = arith.constant 0 : i32
    return %c0_i32, %c0_i32_0 : i32, i32
  }
  func.func @transform_10(%arg0: i32) -> (i32, i32) {
    %c0_i32 = arith.constant 0 : i32
    %c0_i32_0 = arith.constant 0 : i32
    %c0_i32_1 = arith.constant 0 : i32
    return %c0_i32, %c0_i32_0 : i32, i32
  }
  func.func @transform_11(%arg0: i32) -> (i32, i32) {
    %c0_i32 = arith.constant 0 : i32
    %c0_i32_0 = arith.constant 0 : i32
    return %arg0, %c0_i32 : i32, i32
  }
}

</mosaic_0001>

<llo_original>
// kernel: tpu_custom_call.1
$region0: #{tpu_custom_call.1}
  #allocation0 [shape = 'u32[]', space=smem, size = 0x4, offset = 0x4, fixed_abs, tag = 'smem constant byte address 0x4 - core index']
  #allocation1 [shape = 'u32[144,128]{1,0:T(1,128)}', space=vmem, size = 0x12000, scoped, tag = 'internal scratch']
  %s0 = inlined_call_operand.hbm [shape: bf16[2,512], index: 0, kind: input, shape index: {}]
  %s1 = inlined_call_operand.hbm [shape: bf16[2,512], index: 1, kind: input, shape index: {}]
  %s2 = inlined_call_operand.hbm [shape: bf16[512,1024], index: 2, kind: input, shape index: {}]
  %s3 = inlined_call_operand.hbm [shape: bf16[512,1024], index: 3, kind: input, shape index: {}]
  %s4 = inlined_call_operand.vmem [shape: f32[1,1024], index: 4, kind: input, shape index: {}]
  %s5 = inlined_call_operand.hbm [shape: bf16[1024,512], index: 5, kind: input, shape index: {}]
  %s6 = inlined_call_operand.vmem [shape: f32[1,512], index: 6, kind: input, shape index: {}]
  %s7 = inlined_call_operand.hbm [shape: bf16[512,256], index: 7, kind: input, shape index: {}]
  %s8 = inlined_call_operand.vmem [shape: f32[1,256], index: 8, kind: input, shape index: {}]
  %s9 = inlined_call_operand.hbm [shape: bf16[256,128], index: 9, kind: input, shape index: {}]
  %s10 = inlined_call_operand.vmem [shape: f32[1,128], index: 10, kind: input, shape index: {}]
  %s11 = inlined_call_operand.hbm [shape: bf16[2,128], index: 11, kind: output, shape index: {}]
  %s12 = sld [smem:[#allocation0]]
  $region82: #{tpu_custom_call.1} parent=0
    _
  %s14 = ssub.s32 1, %s12
  %s15 = scalar_select 0, %s14, %s12
  $region1: #{tpu_custom_call.1} parent=0
    #allocation2 [shape = 'u8[16384]{0}', space=vmem, size = 0x4000, scoped, tag = 'input window, operand 0, single buffered']
    #allocation3 [shape = 's32[1]{0}', space=sflag, size = 0x4, scoped, tag = 'scoped memory for tpu_custom_call.1']
    #allocation4 [shape = 's32[1]{0}', space=sflag, size = 0x4, scoped, tag = 'scoped memory for tpu_custom_call.1']
    #allocation5 [shape = 'u8[16384]{0}', space=vmem, size = 0x4000, scoped, tag = 'input window, operand 1, single buffered']
    #allocation6 [shape = 's32[1]{0}', space=sflag, size = 0x4, scoped, tag = 'scoped memory for tpu_custom_call.1']
    #allocation7 [shape = 'u8[1048576]{0}', space=vmem, size = 0x100000, scoped, tag = 'input window, operand 2, single buffered']
    #allocation8 [shape = 'u8[1048576]{0}', space=vmem, size = 0x100000, scoped, tag = 'input window, operand 3, single buffered']
    #allocation9 [shape = 's32[1]{0}', space=sflag, size = 0x4, scoped, tag = 'scoped memory for tpu_custom_call.1']
    #allocation10 [shape = 'u8[1048576]{0}', space=vmem, size = 0x100000, scoped, tag = 'input window, operand 5, single buffered']
    #allocation11 [shape = 'u8[262144]{0}', space=vmem, size = 0x40000, scoped, tag = 'input window, operand 7, single buffered']
    #allocation12 [shape = 's32[1]{0}', space=sflag, size = 0x4, scoped, tag = 'scoped memory for tpu_custom_call.1']
    #allocation13 [shape = 'u8[65536]{0}', space=vmem, size = 0x10000, scoped, tag = 'input window, operand 9, single buffered']
    #allocation14 [shape = 'u8[4096]{0}', space=vmem, size = 0x1000, scoped, tag = 'output window, operand 0, single buffered']
    %16 = vsyncpa [#allocation3], 0
    %17 = vsyncpa [#allocation6], 0
    %18 = vsyncpa [#allocation9], 0
    %19 = vsyncpa [#allocation12], 0
    %20 = vsyncpa [#allocation4], 0
    // Predicated region
    $region2: #{tpu_custom_call.1} parent=1 // pred_check
      _
    $region3: #{tpu_custom_call.1} parent=1 // pred_check_branch
      %22 = sbr.rel (0) target = $region5
    $region4: #{tpu_custom_call.1} parent=1 // pred_region
      %s24 = ssub.s32 512, 64
      %25 = vsyncadd [#allocation3], %s24
      %s26 = sshll.u32 [#allocation2], 4
      %s27 = int_to_ptr.vmem [resolvable:$true] %s26
      %32 = dma.hbm_to_vmem [thread:$0]  %s0, 64, %s27, [#allocation3], 64, 64, 4
    $region5: #{tpu_custom_call.1} parent=1 // pred_fallthru
      _
    // Predicated region
    $region6: #{tpu_custom_call.1} parent=1 // pred_check
      _
    $region7: #{tpu_custom_call.1} parent=1 // pred_check_branch
      %34 = sbr.rel (0) target = $region9
    $region8: #{tpu_custom_call.1} parent=1 // pred_region
      %s36 = ssub.s32 512, 64
      %37 = vsyncadd [#allocation6], %s36
      %s38 = sshll.u32 [#allocation5], 4
      %s39 = int_to_ptr.vmem [resolvable:$true] %s38
      %44 = dma.hbm_to_vmem [thread:$0]  %s1, 64, %s39, [#allocation6], 64, 64, 4
    $region9: #{tpu_custom_call.1} parent=1 // pred_fallthru
      _
    // Predicated region
    $region10: #{tpu_custom_call.1} parent=1 // pred_check
      _
    $region11: #{tpu_custom_call.1} parent=1 // pred_check_branch
      %46 = sbr.rel (0) target = $region13
    $region12: #{tpu_custom_call.1} parent=1 // pred_region
      %s48 = ssub.s32 32768, 32768
      %49 = vsyncadd [#allocation6], %s48
      %s50 = sshll.u32 [#allocation7], 4
      %s51 = int_to_ptr.vmem [resolvable:$true] %s50
      %56 = dma.hbm_to_vmem [thread:$0]  %s2, 32768, %s51, [#allocation6], 512, 512, 32
    $region13: #{tpu_custom_call.1} parent=1 // pred_fallthru
      _
    // Predicated region
    $region14: #{tpu_custom_call.1} parent=1 // pred_check
      _
    $region15: #{tpu_custom_call.1} parent=1 // pred_check_branch
      %58 = sbr.rel (0) target = $region17
    $region16: #{tpu_custom_call.1} parent=1 // pred_region
      %s60 = ssub.s32 32768, 32768
      %61 = vsyncadd [#allocation9], %s60
      %s62 = sshll.u32 [#allocation8], 4
      %s63 = int_to_ptr.vmem [resolvable:$true] %s62
      %68 = dma.hbm_to_vmem [thread:$0]  %s3, 32768, %s63, [#allocation9], 512, 512, 32
    $region17: #{tpu_custom_call.1} parent=1 // pred_fallthru
      _
    // Predicated region
    $region18: #{tpu_custom_call.1} parent=1 // pred_check
      _
    $region19: #{tpu_custom_call.1} parent=1 // pred_check_branch
      %70 = sbr.rel (0) target = $region21
    $region20: #{tpu_custom_call.1} parent=1 // pred_region
      _
    $region21: #{tpu_custom_call.1} parent=1 // pred_fallthru
      _
    // Predicated region
    $region22: #{tpu_custom_call.1} parent=1 // pred_check
      _
    $region23: #{tpu_custom_call.1} parent=1 // pred_check_branch
      %72 = sbr.rel (0) target = $region25
    $region24: #{tpu_custom_call.1} parent=1 // pred_region
      %s74 = ssub.s32 32768, 32768
      %75 = vsyncadd [#allocation9], %s74
      %s76 = sshll.u32 [#allocation10], 4
      %s77 = int_to_ptr.vmem [resolvable:$true] %s76
      %82 = dma.hbm_to_vmem [thread:$0]  %s5, 32768, %s77, [#allocation9], 256, 256, 16
    $region25: #{tpu_custom_call.1} parent=1 // pred_fallthru
      _
    // Predicated region
    $region26: #{tpu_custom_call.1} parent=1 // pred_check
      _
    $region27: #{tpu_custom_call.1} parent=1 // pred_check_branch
      %84 = sbr.rel (0) target = $region29
    $region28: #{tpu_custom_call.1} parent=1 // pred_region
      _
    $region29: #{tpu_custom_call.1} parent=1 // pred_fallthru
      _
    // Predicated region
    $region30: #{tpu_custom_call.1} parent=1 // pred_check
      _
    $region31: #{tpu_custom_call.1} parent=1 // pred_check_branch
      %86 = sbr.rel (0) target = $region33
    $region32: #{tpu_custom_call.1} parent=1 // pred_region
      %s88 = ssub.s32 8192, 8192
      %89 = vsyncadd [#allocation12], %s88
      %s90 = sshll.u32 [#allocation11], 4
      %s91 = int_to_ptr.vmem [resolvable:$true] %s90
      %96 = dma.hbm_to_vmem [thread:$0]  %s7, 8192, %s91, [#allocation12], 128, 128, 8
    $region33: #{tpu_custom_call.1} parent=1 // pred_fallthru
      _
    // Predicated region
    $region34: #{tpu_custom_call.1} parent=1 // pred_check
      _
    $region35: #{tpu_custom_call.1} parent=1 // pred_check_branch
      %98 = sbr.rel (0) target = $region37
    $region36: #{tpu_custom_call.1} parent=1 // pred_region
      _
    $region37: #{tpu_custom_call.1} parent=1 // pred_fallthru
      _
    // Predicated region
    $region38: #{tpu_custom_call.1} parent=1 // pred_check
      _
    $region39: #{tpu_custom_call.1} parent=1 // pred_check_branch
      %100 = sbr.rel (0) target = $region41
    $region40: #{tpu_custom_call.1} parent=1 // pred_region
      %s102 = ssub.s32 2048, 2048
      %103 = vsyncadd [#allocation12], %s102
      %s104 = sshll.u32 [#allocation13], 4
      %s105 = int_to_ptr.vmem [resolvable:$true] %s104
      %110 = dma.hbm_to_vmem [thread:$0]  %s9, 2048, %s105, [#allocation12], 64, 64, 4
    $region41: #{tpu_custom_call.1} parent=1 // pred_fallthru
      _
    // Predicated region
    $region42: #{tpu_custom_call.1} parent=1 // pred_check
      _
    $region43: #{tpu_custom_call.1} parent=1 // pred_check_branch
      %112 = sbr.rel (0) target = $region45
    $region44: #{tpu_custom_call.1} parent=1 // pred_region
      _
    $region45: #{tpu_custom_call.1} parent=1 // pred_fallthru
      _
    // Predicated region
    $region46: #{tpu_custom_call.1} parent=1 // pred_check
      _
    $region47: #{tpu_custom_call.1} parent=1 // pred_check_branch
      %114 = sbr.rel (0) target = $region49
    $region48: #{tpu_custom_call.1} parent=1 // pred_region
      %115 = dma.done [#allocation3], 512
    $region49: #{tpu_custom_call.1} parent=1 // pred_fallthru
      _
    // Predicated region
    $region50: #{tpu_custom_call.1} parent=1 // pred_check
      _
    $region51: #{tpu_custom_call.1} parent=1 // pred_check_branch
      %117 = sbr.rel (0) target = $region53
    $region52: #{tpu_custom_call.1} parent=1 // pred_region
      %118 = dma.done [#allocation6], 512
    $region53: #{tpu_custom_call.1} parent=1 // pred_fallthru
      _
    // Predicated region
    $region54: #{tpu_custom_call.1} parent=1 // pred_check
      _
    $region55: #{tpu_custom_call.1} parent=1 // pred_check_branch
      %120 = sbr.rel (0) target = $region57
    $region56: #{tpu_custom_call.1} parent=1 // pred_region
      %121 = dma.done [#allocation6], 32768
    $region57: #{tpu_custom_call.1} parent=1 // pred_fallthru
      _
    // Predicated region
    $region58: #{tpu_custom_call.1} parent=1 // pred_check
      _
    $region59: #{tpu_custom_call.1} parent=1 // pred_check_branch
      %123 = sbr.rel (0) target = $region61
    $region60: #{tpu_custom_call.1} parent=1 // pred_region
      %124 = dma.done [#allocation9], 32768
    $region61: #{tpu_custom_call.1} parent=1 // pred_fallthru
      _
    // Predicated region
    $region62: #{tpu_custom_call.1} parent=1 // pred_check
      _
    $region63: #{tpu_custom_call.1} parent=1 // pred_check_branch
      %126 = sbr.rel (0) target = $region65
    $region64: #{tpu_custom_call.1} parent=1 // pred_region
      %127 = dma.done [#allocation9], 32768
    $region65: #{tpu_custom_call.1} parent=1 // pred_fallthru
      _
    // Predicated region
    $region66: #{tpu_custom_call.1} parent=1 // pred_check
      _
    $region67: #{tpu_custom_call.1} parent=1 // pred_check_branch
      %129 = sbr.rel (0) target = $region69
    $region68: #{tpu_custom_call.1} parent=1 // pred_region
      %130 = dma.done [#allocation12], 8192
    $region69: #{tpu_custom_call.1} parent=1 // pred_fallthru
      _
    // Predicated region
    $region70: #{tpu_custom_call.1} parent=1 // pred_check
      _
    $region71: #{tpu_custom_call.1} parent=1 // pred_check_branch
      %132 = sbr.rel (0) target = $region73
    $region72: #{tpu_custom_call.1} parent=1 // pred_region
      %133 = dma.done [#allocation12], 2048
    $region73: #{tpu_custom_call.1} parent=1 // pred_fallthru
      _
    %v136 = vld [vmem:[#allocation2] sm:$0xf]
    %v137 = vld [vmem:[#allocation2 + $0x4] sm:$0xf]
    %v138 = vld [vmem:[#allocation2 + $0x8] sm:$0xf]
    %v139 = vld [vmem:[#allocation2 + $0xc] sm:$0xf]
    %v140 = vld [vmem:[#allocation2 + $0x10] sm:$0xf]
    %v141 = vld [vmem:[#allocation2 + $0x14] sm:$0xf]
    %v142 = vld [vmem:[#allocation2 + $0x18] sm:$0xf]
    %v143 = vld [vmem:[#allocation2 + $0x1c] sm:$0xf]
    %v144 = vld [vmem:[#allocation5] sm:$0xf]
    %v145 = vld [vmem:[#allocation5 + $0x4] sm:$0xf]
    %v146 = vld [vmem:[#allocation5 + $0x8] sm:$0xf]
    %v147 = vld [vmem:[#allocation5 + $0xc] sm:$0xf]
    %v148 = vld [vmem:[#allocation5 + $0x10] sm:$0xf]
    %v149 = vld [vmem:[#allocation5 + $0x14] sm:$0xf]
    %v150 = vld [vmem:[#allocation5 + $0x18] sm:$0xf]
    %v151 = vld [vmem:[#allocation5 + $0x1c] sm:$0xf]
    %v152 = vld [vmem:[#allocation7] sm:$0xff]
    %v153 = vld [vmem:[#allocation7 + $0x8] sm:$0xff]
    %v154 = vld [vmem:[#allocation7 + $0x10] sm:$0xff]
    %v155 = vld [vmem:[#allocation7 + $0x18] sm:$0xff]
    %v156 = vld [vmem:[#allocation7 + $0x20] sm:$0xff]
    %v157 = vld [vmem:[#allocation7 + $0x28] sm:$0xff]
    %v158 = vld [vmem:[#allocation7 + $0x30] sm:$0xff]
    %v159 = vld [vmem:[#allocation7 + $0x38] sm:$0xff]
    %v160 = vld [vmem:[#allocation7 + $0x40] sm:$0xff]
    %v161 = vld [vmem:[#allocation7 + $0x48] sm:$0xff]
    %v162 = vld [vmem:[#allocation7 + $0x50] sm:$0xff]
    %v163 = vld [vmem:[#allocation7 + $0x58] sm:$0xff]
    %v164 = vld [vmem:[#allocation7 + $0x60] sm:$0xff]
    %v165 = vld [vmem:[#allocation7 + $0x68] sm:$0xff]
    %v166 = vld [vmem:[#allocation7 + $0x70] sm:$0xff]
    %v167 = vld [vmem:[#allocation7 + $0x78] sm:$0xff]
    %v168 = vld [vmem:[#allocation7 + $0x80] sm:$0xff]
    %v169 = vld [vmem:[#allocation7 + $0x88] sm:$0xff]
    %v170 = vld [vmem:[#allocation7 + $0x90] sm:$0xff]
    %v171 = vld [vmem:[#allocation7 + $0x98] sm:$0xff]
    %v172 = vld [vmem:[#allocation7 + $0xa0] sm:$0xff]
    %v173 = vld [vmem:[#allocation7 + $0xa8] sm:$0xff]
    %v174 = vld [vmem:[#allocation7 + $0xb0] sm:$0xff]
    %v175 = vld [vmem:[#allocation7 + $0xb8] sm:$0xff]
    %v176 = vld [vmem:[#allocation7 + $0xc0] sm:$0xff]
    %v177 = vld [vmem:[#allocation7 + $0xc8] sm:$0xff]
    %v178 = vld [vmem:[#allocation7 + $0xd0] sm:$0xff]
    %v179 = vld [vmem:[#allocation7 + $0xd8] sm:$0xff]
    %v180 = vld [vmem:[#allocation7 + $0xe0] sm:$0xff]
    %v181 = vld [vmem:[#allocation7 + $0xe8] sm:$0xff]
    %v182 = vld [vmem:[#allocation7 + $0xf0] sm:$0xff]
    %v183 = vld [vmem:[#allocation7 + $0xf8] sm:$0xff]
    %v184 = vld [vmem:[#allocation7 + $0x100] sm:$0xff]
    %v185 = vld [vmem:[#allocation7 + $0x108] sm:$0xff]
    %v186 = vld [vmem:[#allocation7 + $0x110] sm:$0xff]
    %v187 = vld [vmem:[#allocation7 + $0x118] sm:$0xff]
    %v188 = vld [vmem:[#allocation7 + $0x120] sm:$0xff]
    %v189 = vld [vmem:[#allocation7 + $0x128] sm:$0xff]
    %v190 = vld [vmem:[#allocation7 + $0x130] sm:$0xff]
    %v191 = vld [vmem:[#allocation7 + $0x138] sm:$0xff]
    %v192 = vld [vmem:[#allocation7 + $0x140] sm:$0xff]
    %v193 = vld [vmem:[#allocation7 + $0x148] sm:$0xff]
    %v194 = vld [vmem:[#allocation7 + $0x150] sm:$0xff]
    %v195 = vld [vmem:[#allocation7 + $0x158] sm:$0xff]
    %v196 = vld [vmem:[#allocation7 + $0x160] sm:$0xff]
    %v197 = vld [vmem:[#allocation7 + $0x168] sm:$0xff]
    %v198 = vld [vmem:[#allocation7 + $0x170] sm:$0xff]
    %v199 = vld [vmem:[#allocation7 + $0x178] sm:$0xff]
    %v200 = vld [vmem:[#allocation7 + $0x180] sm:$0xff]
    %v201 = vld [vmem:[#allocation7 + $0x188] sm:$0xff]
    %v202 = vld [vmem:[#allocation7 + $0x190] sm:$0xff]
    %v203 = vld [vmem:[#allocation7 + $0x198] sm:$0xff]
    %v204 = vld [vmem:[#allocation7 + $0x1a0] sm:$0xff]
    %v205 = vld [vmem:[#allocation7 + $0x1a8] sm:$0xff]
    %v206 = vld [vmem:[#allocation7 + $0x1b0] sm:$0xff]
    %v207 = vld [vmem:[#allocation7 + $0x1b8] sm:$0xff]
    %v208 = vld [vmem:[#allocation7 + $0x1c0] sm:$0xff]
    %v209 = vld [vmem:[#allocation7 + $0x1c8] sm:$0xff]
    %v210 = vld [vmem:[#allocation7 + $0x1d0] sm:$0xff]
    %v211 = vld [vmem:[#allocation7 + $0x1d8] sm:$0xff]
    %v212 = vld [vmem:[#allocation7 + $0x1e0] sm:$0xff]
    %v213 = vld [vmem:[#allocation7 + $0x1e8] sm:$0xff]
    %v214 = vld [vmem:[#allocation7 + $0x1f0] sm:$0xff]
    %v215 = vld [vmem:[#allocation7 + $0x1f8] sm:$0xff]
    %v216 = vld [vmem:[#allocation7 + $0x200] sm:$0xff]
    %v217 = vld [vmem:[#allocation7 + $0x208] sm:$0xff]
    %v218 = vld [vmem:[#allocation7 + $0x210] sm:$0xff]
    %v219 = vld [vmem:[#allocation7 + $0x218] sm:$0xff]
    %v220 = vld [vmem:[#allocation7 + $0x220] sm:$0xff]
    %v221 = vld [vmem:[#allocation7 + $0x228] sm:$0xff]
    %v222 = vld [vmem:[#allocation7 + $0x230] sm:$0xff]
    %v223 = vld [vmem:[#allocation7 + $0x238] sm:$0xff]
    %v224 = vld [vmem:[#allocation7 + $0x240] sm:$0xff]
    %v225 = vld [vmem:[#allocation7 + $0x248] sm:$0xff]
    %v226 = vld [vmem:[#allocation7 + $0x250] sm:$0xff]
    %v227 = vld [vmem:[#allocation7 + $0x258] sm:$0xff]
    %v228 = vld [vmem:[#allocation7 + $0x260] sm:$0xff]
    %v229 = vld [vmem:[#allocation7 + $0x268] sm:$0xff]
    %v230 = vld [vmem:[#allocation7 + $0x270] sm:$0xff]
    %v231 = vld [vmem:[#allocation7 + $0x278] sm:$0xff]
    %v232 = vld [vmem:[#allocation7 + $0x280] sm:$0xff]
    %v233 = vld [vmem:[#allocation7 + $0x288] sm:$0xff]
    %v234 = vld [vmem:[#allocation7 + $0x290] sm:$0xff]
    %v235 = vld [vmem:[#allocation7 + $0x298] sm:$0xff]
    %v236 = vld [vmem:[#allocation7 + $0x2a0] sm:$0xff]
    %v237 = vld [vmem:[#allocation7 + $0x2a8] sm:$0xff]
    %v238 = vld [vmem:[#allocation7 + $0x2b0] sm:$0xff]
    %v239 = vld [vmem:[#allocation7 + $0x2b8] sm:$0xff]
    %v240 = vld [vmem:[#allocation7 + $0x2c0] sm:$0xff]
    %v241 = vld [vmem:[#allocation7 + $0x2c8] sm:$0xff]
    %v242 = vld [vmem:[#allocation7 + $0x2d0] sm:$0xff]
    %v243 = vld [vmem:[#allocation7 + $0x2d8] sm:$0xff]
    %v244 = vld [vmem:[#allocation7 + $0x2e0] sm:$0xff]
    %v245 = vld [vmem:[#allocation7 + $0x2e8] sm:$0xff]
    %v246 = vld [vmem:[#allocation7 + $0x2f0] sm:$0xff]
    %v247 = vld [vmem:[#allocation7 + $0x2f8] sm:$0xff]
    %v248 = vld [vmem:[#allocation7 + $0x300] sm:$0xff]
    %v249 = vld [vmem:[#allocation7 + $0x308] sm:$0xff]
    %v250 = vld [vmem:[#allocation7 + $0x310] sm:$0xff]
    %v251 = vld [vmem:[#allocation7 + $0x318] sm:$0xff]
    %v252 = vld [vmem:[#allocation7 + $0x320] sm:$0xff]
    %v253 = vld [vmem:[#allocation7 + $0x328] sm:$0xff]
    %v254 = vld [vmem:[#allocation7 + $0x330] sm:$0xff]
    %v255 = vld [vmem:[#allocation7 + $0x338] sm:$0xff]
    %v256 = vld [vmem:[#allocation7 + $0x340] sm:$0xff]
    %v257 = vld [vmem:[#allocation7 + $0x348] sm:$0xff]
    %v258 = vld [vmem:[#allocation7 + $0x350] sm:$0xff]
    %v259 = vld [vmem:[#allocation7 + $0x358] sm:$0xff]
    %v260 = vld [vmem:[#allocation7 + $0x360] sm:$0xff]
    %v261 = vld [vmem:[#allocation7 + $0x368] sm:$0xff]
    %v262 = vld [vmem:[#allocation7 + $0x370] sm:$0xff]
    %v263 = vld [vmem:[#allocation7 + $0x378] sm:$0xff]
    %v264 = vld [vmem:[#allocation7 + $0x380] sm:$0xff]
    %v265 = vld [vmem:[#allocation7 + $0x388] sm:$0xff]
    %v266 = vld [vmem:[#allocation7 + $0x390] sm:$0xff]
    %v267 = vld [vmem:[#allocation7 + $0x398] sm:$0xff]
    %v268 = vld [vmem:[#allocation7 + $0x3a0] sm:$0xff]
    %v269 = vld [vmem:[#allocation7 + $0x3a8] sm:$0xff]
    %v270 = vld [vmem:[#allocation7 + $0x3b0] sm:$0xff]
    %v271 = vld [vmem:[#allocation7 + $0x3b8] sm:$0xff]
    %v272 = vld [vmem:[#allocation7 + $0x3c0] sm:$0xff]
    %v273 = vld [vmem:[#allocation7 + $0x3c8] sm:$0xff]
    %v274 = vld [vmem:[#allocation7 + $0x3d0] sm:$0xff]
    %v275 = vld [vmem:[#allocation7 + $0x3d8] sm:$0xff]
    %v276 = vld [vmem:[#allocation7 + $0x3e0] sm:$0xff]
    %v277 = vld [vmem:[#allocation7 + $0x3e8] sm:$0xff]
    %v278 = vld [vmem:[#allocation7 + $0x3f0] sm:$0xff]
    %v279 = vld [vmem:[#allocation7 + $0x3f8] sm:$0xff]
    %v280 = vld [vmem:[#allocation7 + $0x400] sm:$0xff]
    %v281 = vld [vmem:[#allocation7 + $0x408] sm:$0xff]
    %v282 = vld [vmem:[#allocation7 + $0x410] sm:$0xff]
    %v283 = vld [vmem:[#allocation7 + $0x418] sm:$0xff]
    %v284 = vld [vmem:[#allocation7 + $0x420] sm:$0xff]
    %v285 = vld [vmem:[#allocation7 + $0x428] sm:$0xff]
    %v286 = vld [vmem:[#allocation7 + $0x430] sm:$0xff]
    %v287 = vld [vmem:[#allocation7 + $0x438] sm:$0xff]
    %v288 = vld [vmem:[#allocation7 + $0x440] sm:$0xff]
    %v289 = vld [vmem:[#allocation7 + $0x448] sm:$0xff]
    %v290 = vld [vmem:[#allocation7 + $0x450] sm:$0xff]
    %v291 = vld [vmem:[#allocation7 + $0x458] sm:$0xff]
    %v292 = vld [vmem:[#allocation7 + $0x460] sm:$0xff]
    %v293 = vld [vmem:[#allocation7 + $0x468] sm:$0xff]
    %v294 = vld [vmem:[#allocation7 + $0x470] sm:$0xff]
    %v295 = vld [vmem:[#allocation7 + $0x478] sm:$0xff]
    %v296 = vld [vmem:[#allocation7 + $0x480] sm:$0xff]
    %v297 = vld [vmem:[#allocation7 + $0x488] sm:$0xff]
    %v298 = vld [vmem:[#allocation7 + $0x490] sm:$0xff]
    %v299 = vld [vmem:[#allocation7 + $0x498] sm:$0xff]
    %v300 = vld [vmem:[#allocation7 + $0x4a0] sm:$0xff]
    %v301 = vld [vmem:[#allocation7 + $0x4a8] sm:$0xff]
    %v302 = vld [vmem:[#allocation7 + $0x4b0] sm:$0xff]
    %v303 = vld [vmem:[#allocation7 + $0x4b8] sm:$0xff]
    %v304 = vld [vmem:[#allocation7 + $0x4c0] sm:$0xff]
    %v305 = vld [vmem:[#allocation7 + $0x4c8] sm:$0xff]
    %v306 = vld [vmem:[#allocation7 + $0x4d0] sm:$0xff]
    %v307 = vld [vmem:[#allocation7 + $0x4d8] sm:$0xff]
    %v308 = vld [vmem:[#allocation7 + $0x4e0] sm:$0xff]
    %v309 = vld [vmem:[#allocation7 + $0x4e8] sm:$0xff]
    %v310 = vld [vmem:[#allocation7 + $0x4f0] sm:$0xff]
    %v311 = vld [vmem:[#allocation7 + $0x4f8] sm:$0xff]
    %v312 = vld [vmem:[#allocation7 + $0x500] sm:$0xff]
    %v313 = vld [vmem:[#allocation7 + $0x508] sm:$0xff]
    %v314 = vld [vmem:[#allocation7 + $0x510] sm:$0xff]
    %v315 = vld [vmem:[#allocation7 + $0x518] sm:$0xff]
    %v316 = vld [vmem:[#allocation7 + $0x520] sm:$0xff]
    %v317 = vld [vmem:[#allocation7 + $0x528] sm:$0xff]
    %v318 = vld [vmem:[#allocation7 + $0x530] sm:$0xff]
    %v319 = vld [vmem:[#allocation7 + $0x538] sm:$0xff]
    %v320 = vld [vmem:[#allocation7 + $0x540] sm:$0xff]
    %v321 = vld [vmem:[#allocation7 + $0x548] sm:$0xff]
    %v322 = vld [vmem:[#allocation7 + $0x550] sm:$0xff]
    %v323 = vld [vmem:[#allocation7 + $0x558] sm:$0xff]
    %v324 = vld [vmem:[#allocation7 + $0x560] sm:$0xff]
    %v325 = vld [vmem:[#allocation7 + $0x568] sm:$0xff]
    %v326 = vld [vmem:[#allocation7 + $0x570] sm:$0xff]
    %v327 = vld [vmem:[#allocation7 + $0x578] sm:$0xff]
    %v328 = vld [vmem:[#allocation7 + $0x580] sm:$0xff]
    %v329 = vld [vmem:[#allocation7 + $0x588] sm:$0xff]
    %v330 = vld [vmem:[#allocation7 + $0x590] sm:$0xff]
    %v331 = vld [vmem:[#allocation7 + $0x598] sm:$0xff]
    %v332 = vld [vmem:[#allocation7 + $0x5a0] sm:$0xff]
    %v333 = vld [vmem:[#allocation7 + $0x5a8] sm:$0xff]
    %v334 = vld [vmem:[#allocation7 + $0x5b0] sm:$0xff]
    %v335 = vld [vmem:[#allocation7 + $0x5b8] sm:$0xff]
    %v336 = vld [vmem:[#allocation7 + $0x5c0] sm:$0xff]
    %v337 = vld [vmem:[#allocation7 + $0x5c8] sm:$0xff]
    %v338 = vld [vmem:[#allocation7 + $0x5d0] sm:$0xff]
    %v339 = vld [vmem:[#allocation7 + $0x5d8] sm:$0xff]
    %v340 = vld [vmem:[#allocation7 + $0x5e0] sm:$0xff]
    %v341 = vld [vmem:[#allocation7 + $0x5e8] sm:$0xff]
    %v342 = vld [vmem:[#allocation7 + $0x5f0] sm:$0xff]
    %v343 = vld [vmem:[#allocation7 + $0x5f8] sm:$0xff]
    %v344 = vld [vmem:[#allocation7 + $0x600] sm:$0xff]
    %v345 = vld [vmem:[#allocation7 + $0x608] sm:$0xff]
    %v346 = vld [vmem:[#allocation7 + $0x610] sm:$0xff]
    %v347 = vld [vmem:[#allocation7 + $0x618] sm:$0xff]
    %v348 = vld [vmem:[#allocation7 + $0x620] sm:$0xff]
    %v349 = vld [vmem:[#allocation7 + $0x628] sm:$0xff]
    %v350 = vld [vmem:[#allocation7 + $0x630] sm:$0xff]
    %v351 = vld [vmem:[#allocation7 + $0x638] sm:$0xff]
    %v352 = vld [vmem:[#allocation7 + $0x640] sm:$0xff]
    %v353 = vld [vmem:[#allocation7 + $0x648] sm:$0xff]
    %v354 = vld [vmem:[#allocation7 + $0x650] sm:$0xff]
    %v355 = vld [vmem:[#allocation7 + $0x658] sm:$0xff]
    %v356 = vld [vmem:[#allocation7 + $0x660] sm:$0xff]
    %v357 = vld [vmem:[#allocation7 + $0x668] sm:$0xff]
    %v358 = vld [vmem:[#allocation7 + $0x670] sm:$0xff]
    %v359 = vld [vmem:[#allocation7 + $0x678] sm:$0xff]
    %v360 = vld [vmem:[#allocation7 + $0x680] sm:$0xff]
    %v361 = vld [vmem:[#allocation7 + $0x688] sm:$0xff]
    %v362 = vld [vmem:[#allocation7 + $0x690] sm:$0xff]
    %v363 = vld [vmem:[#allocation7 + $0x698] sm:$0xff]
    %v364 = vld [vmem:[#allocation7 + $0x6a0] sm:$0xff]
    %v365 = vld [vmem:[#allocation7 + $0x6a8] sm:$0xff]
    %v366 = vld [vmem:[#allocation7 + $0x6b0] sm:$0xff]
    %v367 = vld [vmem:[#allocation7 + $0x6b8] sm:$0xff]
    %v368 = vld [vmem:[#allocation7 + $0x6c0] sm:$0xff]
    %v369 = vld [vmem:[#allocation7 + $0x6c8] sm:$0xff]
    %v370 = vld [vmem:[#allocation7 + $0x6d0] sm:$0xff]
    %v371 = vld [vmem:[#allocation7 + $0x6d8] sm:$0xff]
    %v372 = vld [vmem:[#allocation7 + $0x6e0] sm:$0xff]
    %v373 = vld [vmem:[#allocation7 + $0x6e8] sm:$0xff]
    %v374 = vld [vmem:[#allocation7 + $0x6f0] sm:$0xff]
    %v375 = vld [vmem:[#allocation7 + $0x6f8] sm:$0xff]
    %v376 = vld [vmem:[#allocation7 + $0x700] sm:$0xff]
    %v377 = vld [vmem:[#allocation7 + $0x708] sm:$0xff]
    %v378 = vld [vmem:[#allocation7 + $0x710] sm:$0xff]
    %v379 = vld [vmem:[#allocation7 + $0x718] sm:$0xff]
    %v380 = vld [vmem:[#allocation7 + $0x720] sm:$0xff]
    %v381 = vld [vmem:[#allocation7 + $0x728] sm:$0xff]
    %v382 = vld [vmem:[#allocation7 + $0x730] sm:$0xff]
    %v383 = vld [vmem:[#allocation7 + $0x738] sm:$0xff]
    %v384 = vld [vmem:[#allocation7 + $0x740] sm:$0xff]
    %v385 = vld [vmem:[#allocation7 + $0x748] sm:$0xff]
    %v386 = vld [vmem:[#allocation7 + $0x750] sm:$0xff]
    %v387 = vld [vmem:[#allocation7 + $0x758] sm:$0xff]
    %v388 = vld [vmem:[#allocation7 + $0x760] sm:$0xff]
    %v389 = vld [vmem:[#allocation7 + $0x768] sm:$0xff]
    %v390 = vld [vmem:[#allocation7 + $0x770] sm:$0xff]
    %v391 = vld [vmem:[#allocation7 + $0x778] sm:$0xff]
    %v392 = vld [vmem:[#allocation7 + $0x780] sm:$0xff]
    %v393 = vld [vmem:[#allocation7 + $0x788] sm:$0xff]
    %v394 = vld [vmem:[#allocation7 + $0x790] sm:$0xff]
    %v395 = vld [vmem:[#allocation7 + $0x798] sm:$0xff]
    %v396 = vld [vmem:[#allocation7 + $0x7a0] sm:$0xff]
    %v397 = vld [vmem:[#allocation7 + $0x7a8] sm:$0xff]
    %v398 = vld [vmem:[#allocation7 + $0x7b0] sm:$0xff]
    %v399 = vld [vmem:[#allocation7 + $0x7b8] sm:$0xff]
    %v400 = vld [vmem:[#allocation7 + $0x7c0] sm:$0xff]
    %v401 = vld [vmem:[#allocation7 + $0x7c8] sm:$0xff]
    %v402 = vld [vmem:[#allocation7 + $0x7d0] sm:$0xff]
    %v403 = vld [vmem:[#allocation7 + $0x7d8] sm:$0xff]
    %v404 = vld [vmem:[#allocation7 + $0x7e0] sm:$0xff]
    %v405 = vld [vmem:[#allocation7 + $0x7e8] sm:$0xff]
    %v406 = vld [vmem:[#allocation7 + $0x7f0] sm:$0xff]
    %v407 = vld [vmem:[#allocation7 + $0x7f8] sm:$0xff]
    %v408 = vld [vmem:[#allocation8] sm:$0xff]
    %v409 = vld [vmem:[#allocation8 + $0x8] sm:$0xff]
    %v410 = vld [vmem:[#allocation8 + $0x10] sm:$0xff]
    %v411 = vld [vmem:[#allocation8 + $0x18] sm:$0xff]
    %v412 = vld [vmem:[#allocation8 + $0x20] sm:$0xff]
    %v413 = vld [vmem:[#allocation8 + $0x28] sm:$0xff]
    %v414 = vld [vmem:[#allocation8 + $0x30] sm:$0xff]
    %v415 = vld [vmem:[#allocation8 + $0x38] sm:$0xff]
    %v416 = vld [vmem:[#allocation8 + $0x40] sm:$0xff]
    %v417 = vld [vmem:[#allocation8 + $0x48] sm:$0xff]
    %v418 = vld [vmem:[#allocation8 + $0x50] sm:$0xff]
    %v419 = vld [vmem:[#allocation8 + $0x58] sm:$0xff]
    %v420 = vld [vmem:[#allocation8 + $0x60] sm:$0xff]
    %v421 = vld [vmem:[#allocation8 + $0x68] sm:$0xff]
    %v422 = vld [vmem:[#allocation8 + $0x70] sm:$0xff]
    %v423 = vld [vmem:[#allocation8 + $0x78] sm:$0xff]
    %v424 = vld [vmem:[#allocation8 + $0x80] sm:$0xff]
    %v425 = vld [vmem:[#allocation8 + $0x88] sm:$0xff]
    %v426 = vld [vmem:[#allocation8 + $0x90] sm:$0xff]
    %v427 = vld [vmem:[#allocation8 + $0x98] sm:$0xff]
    %v428 = vld [vmem:[#allocation8 + $0xa0] sm:$0xff]
    %v429 = vld [vmem:[#allocation8 + $0xa8] sm:$0xff]
    %v430 = vld [vmem:[#allocation8 + $0xb0] sm:$0xff]
    %v431 = vld [vmem:[#allocation8 + $0xb8] sm:$0xff]
    %v432 = vld [vmem:[#allocation8 + $0xc0] sm:$0xff]
    %v433 = vld [vmem:[#allocation8 + $0xc8] sm:$0xff]
    %v434 = vld [vmem:[#allocation8 + $0xd0] sm:$0xff]
    %v435 = vld [vmem:[#allocation8 + $0xd8] sm:$0xff]
    %v436 = vld [vmem:[#allocation8 + $0xe0] sm:$0xff]
    %v437 = vld [vmem:[#allocation8 + $0xe8] sm:$0xff]
    %v438 = vld [vmem:[#allocation8 + $0xf0] sm:$0xff]
    %v439 = vld [vmem:[#allocation8 + $0xf8] sm:$0xff]
    %v440 = vld [vmem:[#allocation8 + $0x100] sm:$0xff]
    %v441 = vld [vmem:[#allocation8 + $0x108] sm:$0xff]
    %v442 = vld [vmem:[#allocation8 + $0x110] sm:$0xff]
    %v443 = vld [vmem:[#allocation8 + $0x118] sm:$0xff]
    %v444 = vld [vmem:[#allocation8 + $0x120] sm:$0xff]
    %v445 = vld [vmem:[#allocation8 + $0x128] sm:$0xff]
    %v446 = vld [vmem:[#allocation8 + $0x130] sm:$0xff]
    %v447 = vld [vmem:[#allocation8 + $0x138] sm:$0xff]
    %v448 = vld [vmem:[#allocation8 + $0x140] sm:$0xff]
    %v449 = vld [vmem:[#allocation8 + $0x148] sm:$0xff]
    %v450 = vld [vmem:[#allocation8 + $0x150] sm:$0xff]
    %v451 = vld [vmem:[#allocation8 + $0x158] sm:$0xff]
    %v452 = vld [vmem:[#allocation8 + $0x160] sm:$0xff]
    %v453 = vld [vmem:[#allocation8 + $0x168] sm:$0xff]
    %v454 = vld [vmem:[#allocation8 + $0x170] sm:$0xff]
    %v455 = vld [vmem:[#allocation8 + $0x178] sm:$0xff]
    %v456 = vld [vmem:[#allocation8 + $0x180] sm:$0xff]
    %v457 = vld [vmem:[#allocation8 + $0x188] sm:$0xff]
    %v458 = vld [vmem:[#allocation8 + $0x190] sm:$0xff]
    %v459 = vld [vmem:[#allocation8 + $0x198] sm:$0xff]
    %v460 = vld [vmem:[#allocation8 + $0x1a0] sm:$0xff]
    %v461 = vld [vmem:[#allocation8 + $0x1a8] sm:$0xff]
    %v462 = vld [vmem:[#allocation8 + $0x1b0] sm:$0xff]
    %v463 = vld [vmem:[#allocation8 + $0x1b8] sm:$0xff]
    %v464 = vld [vmem:[#allocation8 + $0x1c0] sm:$0xff]
    %v465 = vld [vmem:[#allocation8 + $0x1c8] sm:$0xff]
    %v466 = vld [vmem:[#allocation8 + $0x1d0] sm:$0xff]
    %v467 = vld [vmem:[#allocation8 + $0x1d8] sm:$0xff]
    %v468 = vld [vmem:[#allocation8 + $0x1e0] sm:$0xff]
    %v469 = vld [vmem:[#allocation8 + $0x1e8] sm:$0xff]
    %v470 = vld [vmem:[#allocation8 + $0x1f0] sm:$0xff]
    %v471 = vld [vmem:[#allocation8 + $0x1f8] sm:$0xff]
    %v472 = vld [vmem:[#allocation8 + $0x200] sm:$0xff]
    %v473 = vld [vmem:[#allocation8 + $0x208] sm:$0xff]
    %v474 = vld [vmem:[#allocation8 + $0x210] sm:$0xff]
    %v475 = vld [vmem:[#allocation8 + $0x218] sm:$0xff]
    %v476 = vld [vmem:[#allocation8 + $0x220] sm:$0xff]
    %v477 = vld [vmem:[#allocation8 + $0x228] sm:$0xff]
    %v478 = vld [vmem:[#allocation8 + $0x230] sm:$0xff]
    %v479 = vld [vmem:[#allocation8 + $0x238] sm:$0xff]
    %v480 = vld [vmem:[#allocation8 + $0x240] sm:$0xff]
    %v481 = vld [vmem:[#allocation8 + $0x248] sm:$0xff]
    %v482 = vld [vmem:[#allocation8 + $0x250] sm:$0xff]
    %v483 = vld [vmem:[#allocation8 + $0x258] sm:$0xff]
    %v484 = vld [vmem:[#allocation8 + $0x260] sm:$0xff]
    %v485 = vld [vmem:[#allocation8 + $0x268] sm:$0xff]
    %v486 = vld [vmem:[#allocation8 + $0x270] sm:$0xff]
    %v487 = vld [vmem:[#allocation8 + $0x278] sm:$0xff]
    %v488 = vld [vmem:[#allocation8 + $0x280] sm:$0xff]
    %v489 = vld [vmem:[#allocation8 + $0x288] sm:$0xff]
    %v490 = vld [vmem:[#allocation8 + $0x290] sm:$0xff]
    %v491 = vld [vmem:[#allocation8 + $0x298] sm:$0xff]
    %v492 = vld [vmem:[#allocation8 + $0x2a0] sm:$0xff]
    %v493 = vld [vmem:[#allocation8 + $0x2a8] sm:$0xff]
    %v494 = vld [vmem:[#allocation8 + $0x2b0] sm:$0xff]
    %v495 = vld [vmem:[#allocation8 + $0x2b8] sm:$0xff]
    %v496 = vld [vmem:[#allocation8 + $0x2c0] sm:$0xff]
    %v497 = vld [vmem:[#allocation8 + $0x2c8] sm:$0xff]
    %v498 = vld [vmem:[#allocation8 + $0x2d0] sm:$0xff]
    %v499 = vld [vmem:[#allocation8 + $0x2d8] sm:$0xff]
    %v500 = vld [vmem:[#allocation8 + $0x2e0] sm:$0xff]
    %v501 = vld [vmem:[#allocation8 + $0x2e8] sm:$0xff]
    %v502 = vld [vmem:[#allocation8 + $0x2f0] sm:$0xff]
    %v503 = vld [vmem:[#allocation8 + $0x2f8] sm:$0xff]
    %v504 = vld [vmem:[#allocation8 + $0x300] sm:$0xff]
    %v505 = vld [vmem:[#allocation8 + $0x308] sm:$0xff]
    %v506 = vld [vmem:[#allocation8 + $0x310] sm:$0xff]
    %v507 = vld [vmem:[#allocation8 + $0x318] sm:$0xff]
    %v508 = vld [vmem:[#allocation8 + $0x320] sm:$0xff]
    %v509 = vld [vmem:[#allocation8 + $0x328] sm:$0xff]
    %v510 = vld [vmem:[#allocation8 + $0x330] sm:$0xff]
    %v511 = vld [vmem:[#allocation8 + $0x338] sm:$0xff]
    %v512 = vld [vmem:[#allocation8 + $0x340] sm:$0xff]
    %v513 = vld [vmem:[#allocation8 + $0x348] sm:$0xff]
    %v514 = vld [vmem:[#allocation8 + $0x350] sm:$0xff]
    %v515 = vld [vmem:[#allocation8 + $0x358] sm:$0xff]
    %v516 = vld [vmem:[#allocation8 + $0x360] sm:$0xff]
    %v517 = vld [vmem:[#allocation8 + $0x368] sm:$0xff]
    %v518 = vld [vmem:[#allocation8 + $0x370] sm:$0xff]
    %v519 = vld [vmem:[#allocation8 + $0x378] sm:$0xff]
    %v520 = vld [vmem:[#allocation8 + $0x380] sm:$0xff]
    %v521 = vld [vmem:[#allocation8 + $0x388] sm:$0xff]
    %v522 = vld [vmem:[#allocation8 + $0x390] sm:$0xff]
    %v523 = vld [vmem:[#allocation8 + $0x398] sm:$0xff]
    %v524 = vld [vmem:[#allocation8 + $0x3a0] sm:$0xff]
    %v525 = vld [vmem:[#allocation8 + $0x3a8] sm:$0xff]
    %v526 = vld [vmem:[#allocation8 + $0x3b0] sm:$0xff]
    %v527 = vld [vmem:[#allocation8 + $0x3b8] sm:$0xff]
    %v528 = vld [vmem:[#allocation8 + $0x3c0] sm:$0xff]
    %v529 = vld [vmem:[#allocation8 + $0x3c8] sm:$0xff]
    %v530 = vld [vmem:[#allocation8 + $0x3d0] sm:$0xff]
    %v531 = vld [vmem:[#allocation8 + $0x3d8] sm:$0xff]
    %v532 = vld [vmem:[#allocation8 + $0x3e0] sm:$0xff]
    %v533 = vld [vmem:[#allocation8 + $0x3e8] sm:$0xff]
    %v534 = vld [vmem:[#allocation8 + $0x3f0] sm:$0xff]
    %v535 = vld [vmem:[#allocation8 + $0x3f8] sm:$0xff]
    %v536 = vld [vmem:[#allocation8 + $0x400] sm:$0xff]
    %v537 = vld [vmem:[#allocation8 + $0x408] sm:$0xff]
    %v538 = vld [vmem:[#allocation8 + $0x410] sm:$0xff]
    %v539 = vld [vmem:[#allocation8 + $0x418] sm:$0xff]
    %v540 = vld [vmem:[#allocation8 + $0x420] sm:$0xff]
    %v541 = vld [vmem:[#allocation8 + $0x428] sm:$0xff]
    %v542 = vld [vmem:[#allocation8 + $0x430] sm:$0xff]
    %v543 = vld [vmem:[#allocation8 + $0x438] sm:$0xff]
    %v544 = vld [vmem:[#allocation8 + $0x440] sm:$0xff]
    %v545 = vld [vmem:[#allocation8 + $0x448] sm:$0xff]
    %v546 = vld [vmem:[#allocation8 + $0x450] sm:$0xff]
    %v547 = vld [vmem:[#allocation8 + $0x458] sm:$0xff]
    %v548 = vld [vmem:[#allocation8 + $0x460] sm:$0xff]
    %v549 = vld [vmem:[#allocation8 + $0x468] sm:$0xff]
    %v550 = vld [vmem:[#allocation8 + $0x470] sm:$0xff]
    %v551 = vld [vmem:[#allocation8 + $0x478] sm:$0xff]
    %v552 = vld [vmem:[#allocation8 + $0x480] sm:$0xff]
    %v553 = vld [vmem:[#allocation8 + $0x488] sm:$0xff]
    %v554 = vld [vmem:[#allocation8 + $0x490] sm:$0xff]
    %v555 = vld [vmem:[#allocation8 + $0x498] sm:$0xff]
    %v556 = vld [vmem:[#allocation8 + $0x4a0] sm:$0xff]
    %v557 = vld [vmem:[#allocation8 + $0x4a8] sm:$0xff]
    %v558 = vld [vmem:[#allocation8 + $0x4b0] sm:$0xff]
    %v559 = vld [vmem:[#allocation8 + $0x4b8] sm:$0xff]
    %v560 = vld [vmem:[#allocation8 + $0x4c0] sm:$0xff]
    %v561 = vld [vmem:[#allocation8 + $0x4c8] sm:$0xff]
    %v562 = vld [vmem:[#allocation8 + $0x4d0] sm:$0xff]
    %v563 = vld [vmem:[#allocation8 + $0x4d8] sm:$0xff]
    %v564 = vld [vmem:[#allocation8 + $0x4e0] sm:$0xff]
    %v565 = vld [vmem:[#allocation8 + $0x4e8] sm:$0xff]
    %v566 = vld [vmem:[#allocation8 + $0x4f0] sm:$0xff]
    %v567 = vld [vmem:[#allocation8 + $0x4f8] sm:$0xff]
    %v568 = vld [vmem:[#allocation8 + $0x500] sm:$0xff]
    %v569 = vld [vmem:[#allocation8 + $0x508] sm:$0xff]
    %v570 = vld [vmem:[#allocation8 + $0x510] sm:$0xff]
    %v571 = vld [vmem:[#allocation8 + $0x518] sm:$0xff]
    %v572 = vld [vmem:[#allocation8 + $0x520] sm:$0xff]
    %v573 = vld [vmem:[#allocation8 + $0x528] sm:$0xff]
    %v574 = vld [vmem:[#allocation8 + $0x530] sm:$0xff]
    %v575 = vld [vmem:[#allocation8 + $0x538] sm:$0xff]
    %v576 = vld [vmem:[#allocation8 + $0x540] sm:$0xff]
    %v577 = vld [vmem:[#allocation8 + $0x548] sm:$0xff]
    %v578 = vld [vmem:[#allocation8 + $0x550] sm:$0xff]
    %v579 = vld [vmem:[#allocation8 + $0x558] sm:$0xff]
    %v580 = vld [vmem:[#allocation8 + $0x560] sm:$0xff]
    %v581 = vld [vmem:[#allocation8 + $0x568] sm:$0xff]
    %v582 = vld [vmem:[#allocation8 + $0x570] sm:$0xff]
    %v583 = vld [vmem:[#allocation8 + $0x578] sm:$0xff]
    %v584 = vld [vmem:[#allocation8 + $0x580] sm:$0xff]
    %v585 = vld [vmem:[#allocation8 + $0x588] sm:$0xff]
    %v586 = vld [vmem:[#allocation8 + $0x590] sm:$0xff]
    %v587 = vld [vmem:[#allocation8 + $0x598] sm:$0xff]
    %v588 = vld [vmem:[#allocation8 + $0x5a0] sm:$0xff]
    %v589 = vld [vmem:[#allocation8 + $0x5a8] sm:$0xff]
    %v590 = vld [vmem:[#allocation8 + $0x5b0] sm:$0xff]
    %v591 = vld [vmem:[#allocation8 + $0x5b8] sm:$0xff]
    %v592 = vld [vmem:[#allocation8 + $0x5c0] sm:$0xff]
    %v593 = vld [vmem:[#allocation8 + $0x5c8] sm:$0xff]
    %v594 = vld [vmem:[#allocation8 + $0x5d0] sm:$0xff]
    %v595 = vld [vmem:[#allocation8 + $0x5d8] sm:$0xff]
    %v596 = vld [vmem:[#allocation8 + $0x5e0] sm:$0xff]
    %v597 = vld [vmem:[#allocation8 + $0x5e8] sm:$0xff]
    %v598 = vld [vmem:[#allocation8 + $0x5f0] sm:$0xff]
    %v599 = vld [vmem:[#allocation8 + $0x5f8] sm:$0xff]
    %v600 = vld [vmem:[#allocation8 + $0x600] sm:$0xff]
    %v601 = vld [vmem:[#allocation8 + $0x608] sm:$0xff]
    %v602 = vld [vmem:[#allocation8 + $0x610] sm:$0xff]
    %v603 = vld [vmem:[#allocation8 + $0x618] sm:$0xff]
    %v604 = vld [vmem:[#allocation8 + $0x620] sm:$0xff]
    %v605 = vld [vmem:[#allocation8 + $0x628] sm:$0xff]
    %v606 = vld [vmem:[#allocation8 + $0x630] sm:$0xff]
    %v607 = vld [vmem:[#allocation8 + $0x638] sm:$0xff]
    %v608 = vld [vmem:[#allocation8 + $0x640] sm:$0xff]
    %v609 = vld [vmem:[#allocation8 + $0x648] sm:$0xff]
    %v610 = vld [vmem:[#allocation8 + $0x650] sm:$0xff]
    %v611 = vld [vmem:[#allocation8 + $0x658] sm:$0xff]
    %v612 = vld [vmem:[#allocation8 + $0x660] sm:$0xff]
    %v613 = vld [vmem:[#allocation8 + $0x668] sm:$0xff]
    %v614 = vld [vmem:[#allocation8 + $0x670] sm:$0xff]
    %v615 = vld [vmem:[#allocation8 + $0x678] sm:$0xff]
    %v616 = vld [vmem:[#allocation8 + $0x680] sm:$0xff]
    %v617 = vld [vmem:[#allocation8 + $0x688] sm:$0xff]
    %v618 = vld [vmem:[#allocation8 + $0x690] sm:$0xff]
    %v619 = vld [vmem:[#allocation8 + $0x698] sm:$0xff]
    %v620 = vld [vmem:[#allocation8 + $0x6a0] sm:$0xff]
    %v621 = vld [vmem:[#allocation8 + $0x6a8] sm:$0xff]
    %v622 = vld [vmem:[#allocation8 + $0x6b0] sm:$0xff]
    %v623 = vld [vmem:[#allocation8 + $0x6b8] sm:$0xff]
    %v624 = vld [vmem:[#allocation8 + $0x6c0] sm:$0xff]
    %v625 = vld [vmem:[#allocation8 + $0x6c8] sm:$0xff]
    %v626 = vld [vmem:[#allocation8 + $0x6d0] sm:$0xff]
    %v627 = vld [vmem:[#allocation8 + $0x6d8] sm:$0xff]
    %v628 = vld [vmem:[#allocation8 + $0x6e0] sm:$0xff]
    %v629 = vld [vmem:[#allocation8 + $0x6e8] sm:$0xff]
    %v630 = vld [vmem:[#allocation8 + $0x6f0] sm:$0xff]
    %v631 = vld [vmem:[#allocation8 + $0x6f8] sm:$0xff]
    %v632 = vld [vmem:[#allocation8 + $0x700] sm:$0xff]
    %v633 = vld [vmem:[#allocation8 + $0x708] sm:$0xff]
    %v634 = vld [vmem:[#allocation8 + $0x710] sm:$0xff]
    %v635 = vld [vmem:[#allocation8 + $0x718] sm:$0xff]
    %v636 = vld [vmem:[#allocation8 + $0x720] sm:$0xff]
    %v637 = vld [vmem:[#allocation8 + $0x728] sm:$0xff]
    %v638 = vld [vmem:[#allocation8 + $0x730] sm:$0xff]
    %v639 = vld [vmem:[#allocation8 + $0x738] sm:$0xff]
    %v640 = vld [vmem:[#allocation8 + $0x740] sm:$0xff]
    %v641 = vld [vmem:[#allocation8 + $0x748] sm:$0xff]
    %v642 = vld [vmem:[#allocation8 + $0x750] sm:$0xff]
    %v643 = vld [vmem:[#allocation8 + $0x758] sm:$0xff]
    %v644 = vld [vmem:[#allocation8 + $0x760] sm:$0xff]
    %v645 = vld [vmem:[#allocation8 + $0x768] sm:$0xff]
    %v646 = vld [vmem:[#allocation8 + $0x770] sm:$0xff]
    %v647 = vld [vmem:[#allocation8 + $0x778] sm:$0xff]
    %v648 = vld [vmem:[#allocation8 + $0x780] sm:$0xff]
    %v649 = vld [vmem:[#allocation8 + $0x788] sm:$0xff]
    %v650 = vld [vmem:[#allocation8 + $0x790] sm:$0xff]
    %v651 = vld [vmem:[#allocation8 + $0x798] sm:$0xff]
    %v652 = vld [vmem:[#allocation8 + $0x7a0] sm:$0xff]
    %v653 = vld [vmem:[#allocation8 + $0x7a8] sm:$0xff]
    %v654 = vld [vmem:[#allocation8 + $0x7b0] sm:$0xff]
    %v655 = vld [vmem:[#allocation8 + $0x7b8] sm:$0xff]
    %v656 = vld [vmem:[#allocation8 + $0x7c0] sm:$0xff]
    %v657 = vld [vmem:[#allocation8 + $0x7c8] sm:$0xff]
    %v658 = vld [vmem:[#allocation8 + $0x7d0] sm:$0xff]
    %v659 = vld [vmem:[#allocation8 + $0x7d8] sm:$0xff]
    %v660 = vld [vmem:[#allocation8 + $0x7e0] sm:$0xff]
    %v661 = vld [vmem:[#allocation8 + $0x7e8] sm:$0xff]
    %v662 = vld [vmem:[#allocation8 + $0x7f0] sm:$0xff]
    %v663 = vld [vmem:[#allocation8 + $0x7f8] sm:$0xff]
    %v672 = vcombine.low %v144, %v145
    %v673 = vcombine.low %v146, %v147
    %v674 = vcombine.low %v148, %v149
    %v675 = vcombine.low %v150, %v151
    %v677 = vunpack.c.l.s4 1966171168
    %v678 = vunpack.c.0.s8 %v677
    %v679 = vlaneseq
    %v680 = vshrl.u32 %v679, 7
    %v681 = vsub.s32 %v678, %v680
    %v682 = vrot.slane %v672, %v681
    %v684 = vunpack.c.l.s4 1966171168
    %v685 = vunpack.c.0.s8 %v684
    %v686 = vlaneseq
    %v687 = vshrl.u32 %v686, 7
    %v688 = vsub.s32 %v685, %v687
    %v689 = vrot.slane %v673, %v688
    %v691 = vunpack.c.l.s4 1966171168
    %v692 = vunpack.c.0.s8 %v691
    %v693 = vlaneseq
    %v694 = vshrl.u32 %v693, 7
    %v695 = vsub.s32 %v692, %v694
    %v696 = vrot.slane %v674, %v695
    %v698 = vunpack.c.l.s4 1966171168
    %v699 = vunpack.c.0.s8 %v698
    %v700 = vlaneseq
    %v701 = vshrl.u32 %v700, 7
    %v702 = vsub.s32 %v699, %v701
    %v703 = vrot.slane %v675, %v702
    %v704 = vcombine.low %v682, %v689
    %v705 = vcombine.high %v682, %v689
    %v706 = vcombine.low %v696, %v703
    %v707 = vcombine.high %v696, %v703
    %v709 = vunpack.c.l.s4 1966171168
    %v710 = vunpack.c.0.s8 %v709
    %v711 = vlaneseq
    %v712 = vshrl.u32 %v711, 7
    %v713 = vsub.s32 %v710, %v712
    %v714 = vrot.slane %v704, %v713
    %v716 = vunpack.c.l.s4 1966171168
    %v717 = vunpack.c.0.s8 %v716
    %v718 = vlaneseq
    %v719 = vshrl.u32 %v718, 7
    %v720 = vsub.s32 %v717, %v719
    %v721 = vrot.slane %v705, %v720
    %v723 = vunpack.c.l.s4 1966171168
    %v724 = vunpack.c.0.s8 %v723
    %v725 = vlaneseq
    %v726 = vshrl.u32 %v725, 7
    %v727 = vsub.s32 %v724, %v726
    %v728 = vrot.slane %v706, %v727
    %v730 = vunpack.c.l.s4 1966171168
    %v731 = vunpack.c.0.s8 %v730
    %v732 = vlaneseq
    %v733 = vshrl.u32 %v732, 7
    %v734 = vsub.s32 %v731, %v733
    %v735 = vrot.slane %v707, %v734
    %v736 = vcombine.low %v714, %v728
    %v737 = vcombine.high %v714, %v728
    %v738 = vcombine.low %v721, %v735
    %v739 = vcombine.high %v721, %v735
    %v1000 = vunpack.c.l.b16 %v408
    %v1001 = vunpack.c.h.b16 %v408
    %v1002 = vunpack.c.l.b16 %v409
    %v1003 = vunpack.c.h.b16 %v409
    %v1004 = vunpack.c.l.b16 %v410
    %v1005 = vunpack.c.h.b16 %v410
    %v1006 = vunpack.c.l.b16 %v411
    %v1007 = vunpack.c.h.b16 %v411
    %v1008 = vunpack.c.l.b16 %v412
    %v1009 = vunpack.c.h.b16 %v412
    %v1010 = vunpack.c.l.b16 %v413
    %v1011 = vunpack.c.h.b16 %v413
    %v1012 = vunpack.c.l.b16 %v414
    %v1013 = vunpack.c.h.b16 %v414
    %v1014 = vunpack.c.l.b16 %v415
    %v1015 = vunpack.c.h.b16 %v415
    %v1016 = vunpack.c.l.b16 %v416
    %v1017 = vunpack.c.h.b16 %v416
    %v1018 = vunpack.c.l.b16 %v417
    %v1019 = vunpack.c.h.b16 %v417
    %v1020 = vunpack.c.l.b16 %v418
    %v1021 = vunpack.c.h.b16 %v418
    %v1022 = vunpack.c.l.b16 %v419
    %v1023 = vunpack.c.h.b16 %v419
    %v1024 = vunpack.c.l.b16 %v420
    %v1025 = vunpack.c.h.b16 %v420
    %v1026 = vunpack.c.l.b16 %v421
    %v1027 = vunpack.c.h.b16 %v421
    %v1028 = vunpack.c.l.b16 %v422
    %v1029 = vunpack.c.h.b16 %v422
    %v1030 = vunpack.c.l.b16 %v423
    %v1031 = vunpack.c.h.b16 %v423
    %v1032 = vunpack.c.l.b16 %v424
    %v1033 = vunpack.c.h.b16 %v424
    %v1034 = vunpack.c.l.b16 %v425
    %v1035 = vunpack.c.h.b16 %v425
    %v1036 = vunpack.c.l.b16 %v426
    %v1037 = vunpack.c.h.b16 %v426
    %v1038 = vunpack.c.l.b16 %v427
    %v1039 = vunpack.c.h.b16 %v427
    %v1040 = vunpack.c.l.b16 %v428
    %v1041 = vunpack.c.h.b16 %v428
    %v1042 = vunpack.c.l.b16 %v429
    %v1043 = vunpack.c.h.b16 %v429
    %v1044 = vunpack.c.l.b16 %v430
    %v1045 = vunpack.c.h.b16 %v430
    %v1046 = vunpack.c.l.b16 %v431
    %v1047 = vunpack.c.h.b16 %v431
    %v1048 = vunpack.c.l.b16 %v432
    %v1049 = vunpack.c.h.b16 %v432
    %v1050 = vunpack.c.l.b16 %v433
    %v1051 = vunpack.c.h.b16 %v433
    %v1052 = vunpack.c.l.b16 %v434
    %v1053 = vunpack.c.h.b16 %v434
    %v1054 = vunpack.c.l.b16 %v435
    %v1055 = vunpack.c.h.b16 %v435
    %v1056 = vunpack.c.l.b16 %v436
    %v1057 = vunpack.c.h.b16 %v436
    %v1058 = vunpack.c.l.b16 %v437
    %v1059 = vunpack.c.h.b16 %v437
    %v1060 = vunpack.c.l.b16 %v438
    %v1061 = vunpack.c.h.b16 %v438
    %v1062 = vunpack.c.l.b16 %v439
    %v1063 = vunpack.c.h.b16 %v439
    %v1064 = vunpack.c.l.b16 %v440
    %v1065 = vunpack.c.h.b16 %v440
    %v1066 = vunpack.c.l.b16 %v441
    %v1067 = vunpack.c.h.b16 %v441
    %v1068 = vunpack.c.l.b16 %v442
    %v1069 = vunpack.c.h.b16 %v442
    %v1070 = vunpack.c.l.b16 %v443
    %v1071 = vunpack.c.h.b16 %v443
    %v1072 = vunpack.c.l.b16 %v444
    %v1073 = vunpack.c.h.b16 %v444
    %v1074 = vunpack.c.l.b16 %v445
    %v1075 = vunpack.c.h.b16 %v445
    %v1076 = vunpack.c.l.b16 %v446
    %v1077 = vunpack.c.h.b16 %v446
    %v1078 = vunpack.c.l.b16 %v447
    %v1079 = vunpack.c.h.b16 %v447
    %v1080 = vunpack.c.l.b16 %v448
    %v1081 = vunpack.c.h.b16 %v448
    %v1082 = vunpack.c.l.b16 %v449
    %v1083 = vunpack.c.h.b16 %v449
    %v1084 = vunpack.c.l.b16 %v450
    %v1085 = vunpack.c.h.b16 %v450
    %v1086 = vunpack.c.l.b16 %v451
    %v1087 = vunpack.c.h.b16 %v451
    %v1088 = vunpack.c.l.b16 %v452
    %v1089 = vunpack.c.h.b16 %v452
    %v1090 = vunpack.c.l.b16 %v453
    %v1091 = vunpack.c.h.b16 %v453
    %v1092 = vunpack.c.l.b16 %v454
    %v1093 = vunpack.c.h.b16 %v454
    %v1094 = vunpack.c.l.b16 %v455
    %v1095 = vunpack.c.h.b16 %v455
    %v1096 = vunpack.c.l.b16 %v456
    %v1097 = vunpack.c.h.b16 %v456
    %v1098 = vunpack.c.l.b16 %v457
    %v1099 = vunpack.c.h.b16 %v457
    %v1100 = vunpack.c.l.b16 %v458
    %v1101 = vunpack.c.h.b16 %v458
    %v1102 = vunpack.c.l.b16 %v459
    %v1103 = vunpack.c.h.b16 %v459
    %v1104 = vunpack.c.l.b16 %v460
    %v1105 = vunpack.c.h.b16 %v460
    %v1106 = vunpack.c.l.b16 %v461
    %v1107 = vunpack.c.h.b16 %v461
    %v1108 = vunpack.c.l.b16 %v462
    %v1109 = vunpack.c.h.b16 %v462
    %v1110 = vunpack.c.l.b16 %v463
    %v1111 = vunpack.c.h.b16 %v463
    %v1112 = vunpack.c.l.b16 %v464
    %v1113 = vunpack.c.h.b16 %v464
    %v1114 = vunpack.c.l.b16 %v465
    %v1115 = vunpack.c.h.b16 %v465
    %v1116 = vunpack.c.l.b16 %v466
    %v1117 = vunpack.c.h.b16 %v466
    %v1118 = vunpack.c.l.b16 %v467
    %v1119 = vunpack.c.h.b16 %v467
    %v1120 = vunpack.c.l.b16 %v468
    %v1121 = vunpack.c.h.b16 %v468
    %v1122 = vunpack.c.l.b16 %v469
    %v1123 = vunpack.c.h.b16 %v469
    %v1124 = vunpack.c.l.b16 %v470
    %v1125 = vunpack.c.h.b16 %v470
    %v1126 = vunpack.c.l.b16 %v471
    %v1127 = vunpack.c.h.b16 %v471
    %v1128 = vunpack.c.l.b16 %v472
    %v1129 = vunpack.c.h.b16 %v472
    %v1130 = vunpack.c.l.b16 %v473
    %v1131 = vunpack.c.h.b16 %v473
    %v1132 = vunpack.c.l.b16 %v474
    %v1133 = vunpack.c.h.b16 %v474
    %v1134 = vunpack.c.l.b16 %v475
    %v1135 = vunpack.c.h.b16 %v475
    %v1136 = vunpack.c.l.b16 %v476
    %v1137 = vunpack.c.h.b16 %v476
    %v1138 = vunpack.c.l.b16 %v477
    %v1139 = vunpack.c.h.b16 %v477
    %v1140 = vunpack.c.l.b16 %v478
    %v1141 = vunpack.c.h.b16 %v478
    %v1142 = vunpack.c.l.b16 %v479
    %v1143 = vunpack.c.h.b16 %v479
    %v1144 = vunpack.c.l.b16 %v480
    %v1145 = vunpack.c.h.b16 %v480
    %v1146 = vunpack.c.l.b16 %v481
    %v1147 = vunpack.c.h.b16 %v481
    %v1148 = vunpack.c.l.b16 %v482
    %v1149 = vunpack.c.h.b16 %v482
    %v1150 = vunpack.c.l.b16 %v483
    %v1151 = vunpack.c.h.b16 %v483
    %v1152 = vunpack.c.l.b16 %v484
    %v1153 = vunpack.c.h.b16 %v484
    %v1154 = vunpack.c.l.b16 %v485
    %v1155 = vunpack.c.h.b16 %v485
    %v1156 = vunpack.c.l.b16 %v486
    %v1157 = vunpack.c.h.b16 %v486
    %v1158 = vunpack.c.l.b16 %v487
    %v1159 = vunpack.c.h.b16 %v487
    %v1160 = vunpack.c.l.b16 %v488
    %v1161 = vunpack.c.h.b16 %v488
    %v1162 = vunpack.c.l.b16 %v489
    %v1163 = vunpack.c.h.b16 %v489
    %v1164 = vunpack.c.l.b16 %v490
    %v1165 = vunpack.c.h.b16 %v490
    %v1166 = vunpack.c.l.b16 %v491
    %v1167 = vunpack.c.h.b16 %v491
    %v1168 = vunpack.c.l.b16 %v492
    %v1169 = vunpack.c.h.b16 %v492
    %v1170 = vunpack.c.l.b16 %v493
    %v1171 = vunpack.c.h.b16 %v493
    %v1172 = vunpack.c.l.b16 %v494
    %v1173 = vunpack.c.h.b16 %v494
    %v1174 = vunpack.c.l.b16 %v495
    %v1175 = vunpack.c.h.b16 %v495
    %v1176 = vunpack.c.l.b16 %v496
    %v1177 = vunpack.c.h.b16 %v496
    %v1178 = vunpack.c.l.b16 %v497
    %v1179 = vunpack.c.h.b16 %v497
    %v1180 = vunpack.c.l.b16 %v498
    %v1181 = vunpack.c.h.b16 %v498
    %v1182 = vunpack.c.l.b16 %v499
    %v1183 = vunpack.c.h.b16 %v499
    %v1184 = vunpack.c.l.b16 %v500
    %v1185 = vunpack.c.h.b16 %v500
    %v1186 = vunpack.c.l.b16 %v501
    %v1187 = vunpack.c.h.b16 %v501
    %v1188 = vunpack.c.l.b16 %v502
    %v1189 = vunpack.c.h.b16 %v502
    %v1190 = vunpack.c.l.b16 %v503
    %v1191 = vunpack.c.h.b16 %v503
    %v1192 = vunpack.c.l.b16 %v504
    %v1193 = vunpack.c.h.b16 %v504
    %v1194 = vunpack.c.l.b16 %v505
    %v1195 = vunpack.c.h.b16 %v505
    %v1196 = vunpack.c.l.b16 %v506
    %v1197 = vunpack.c.h.b16 %v506
    %v1198 = vunpack.c.l.b16 %v507
    %v1199 = vunpack.c.h.b16 %v507
    %v1200 = vunpack.c.l.b16 %v508
    %v1201 = vunpack.c.h.b16 %v508
    %v1202 = vunpack.c.l.b16 %v509
    %v1203 = vunpack.c.h.b16 %v509
    %v1204 = vunpack.c.l.b16 %v510
    %v1205 = vunpack.c.h.b16 %v510
    %v1206 = vunpack.c.l.b16 %v511
    %v1207 = vunpack.c.h.b16 %v511
    %v1208 = vunpack.c.l.b16 %v512
    %v1209 = vunpack.c.h.b16 %v512
    %v1210 = vunpack.c.l.b16 %v513
    %v1211 = vunpack.c.h.b16 %v513
    %v1212 = vunpack.c.l.b16 %v514
    %v1213 = vunpack.c.h.b16 %v514
    %v1214 = vunpack.c.l.b16 %v515
    %v1215 = vunpack.c.h.b16 %v515
    %v1216 = vunpack.c.l.b16 %v516
    %v1217 = vunpack.c.h.b16 %v516
    %v1218 = vunpack.c.l.b16 %v517
    %v1219 = vunpack.c.h.b16 %v517
    %v1220 = vunpack.c.l.b16 %v518
    %v1221 = vunpack.c.h.b16 %v518
    %v1222 = vunpack.c.l.b16 %v519
    %v1223 = vunpack.c.h.b16 %v519
    %v1224 = vunpack.c.l.b16 %v520
    %v1225 = vunpack.c.h.b16 %v520
    %v1226 = vunpack.c.l.b16 %v521
    %v1227 = vunpack.c.h.b16 %v521
    %v1228 = vunpack.c.l.b16 %v522
    %v1229 = vunpack.c.h.b16 %v522
    %v1230 = vunpack.c.l.b16 %v523
    %v1231 = vunpack.c.h.b16 %v523
    %v1232 = vunpack.c.l.b16 %v524
    %v1233 = vunpack.c.h.b16 %v524
    %v1234 = vunpack.c.l.b16 %v525
    %v1235 = vunpack.c.h.b16 %v525
    %v1236 = vunpack.c.l.b16 %v526
    %v1237 = vunpack.c.h.b16 %v526
    %v1238 = vunpack.c.l.b16 %v527
    %v1239 = vunpack.c.h.b16 %v527
    %v1240 = vunpack.c.l.b16 %v528
    %v1241 = vunpack.c.h.b16 %v528
    %v1242 = vunpack.c.l.b16 %v529
    %v1243 = vunpack.c.h.b16 %v529
    %v1244 = vunpack.c.l.b16 %v530
    %v1245 = vunpack.c.h.b16 %v530
    %v1246 = vunpack.c.l.b16 %v531
    %v1247 = vunpack.c.h.b16 %v531
    %v1248 = vunpack.c.l.b16 %v532
    %v1249 = vunpack.c.h.b16 %v532
    %v1250 = vunpack.c.l.b16 %v533
    %v1251 = vunpack.c.h.b16 %v533
    %v1252 = vunpack.c.l.b16 %v534
    %v1253 = vunpack.c.h.b16 %v534
    %v1254 = vunpack.c.l.b16 %v535
    %v1255 = vunpack.c.h.b16 %v535
    %v1256 = vunpack.c.l.b16 %v536
    %v1257 = vunpack.c.h.b16 %v536
    %v1258 = vunpack.c.l.b16 %v537
    %v1259 = vunpack.c.h.b16 %v537
    %v1260 = vunpack.c.l.b16 %v538
    %v1261 = vunpack.c.h.b16 %v538
    %v1262 = vunpack.c.l.b16 %v539
    %v1263 = vunpack.c.h.b16 %v539
    %v1264 = vunpack.c.l.b16 %v540
    %v1265 = vunpack.c.h.b16 %v540
    %v1266 = vunpack.c.l.b16 %v541
    %v1267 = vunpack.c.h.b16 %v541
    %v1268 = vunpack.c.l.b16 %v542
    %v1269 = vunpack.c.h.b16 %v542
    %v1270 = vunpack.c.l.b16 %v543
    %v1271 = vunpack.c.h.b16 %v543
    %v1272 = vunpack.c.l.b16 %v544
    %v1273 = vunpack.c.h.b16 %v544
    %v1274 = vunpack.c.l.b16 %v545
    %v1275 = vunpack.c.h.b16 %v545
    %v1276 = vunpack.c.l.b16 %v546
    %v1277 = vunpack.c.h.b16 %v546
    %v1278 = vunpack.c.l.b16 %v547
    %v1279 = vunpack.c.h.b16 %v547
    %v1280 = vunpack.c.l.b16 %v548
    %v1281 = vunpack.c.h.b16 %v548
    %v1282 = vunpack.c.l.b16 %v549
    %v1283 = vunpack.c.h.b16 %v549
    %v1284 = vunpack.c.l.b16 %v550
    %v1285 = vunpack.c.h.b16 %v550
    %v1286 = vunpack.c.l.b16 %v551
    %v1287 = vunpack.c.h.b16 %v551
    %v1288 = vunpack.c.l.b16 %v552
    %v1289 = vunpack.c.h.b16 %v552
    %v1290 = vunpack.c.l.b16 %v553
    %v1291 = vunpack.c.h.b16 %v553
    %v1292 = vunpack.c.l.b16 %v554
    %v1293 = vunpack.c.h.b16 %v554
    %v1294 = vunpack.c.l.b16 %v555
    %v1295 = vunpack.c.h.b16 %v555
    %v1296 = vunpack.c.l.b16 %v556
    %v1297 = vunpack.c.h.b16 %v556
    %v1298 = vunpack.c.l.b16 %v557
    %v1299 = vunpack.c.h.b16 %v557
    %v1300 = vunpack.c.l.b16 %v558
    %v1301 = vunpack.c.h.b16 %v558
    %v1302 = vunpack.c.l.b16 %v559
    %v1303 = vunpack.c.h.b16 %v559
    %v1304 = vunpack.c.l.b16 %v560
    %v1305 = vunpack.c.h.b16 %v560
    %v1306 = vunpack.c.l.b16 %v561
    %v1307 = vunpack.c.h.b16 %v561
    %v1308 = vunpack.c.l.b16 %v562
    %v1309 = vunpack.c.h.b16 %v562
    %v1310 = vunpack.c.l.b16 %v563
    %v1311 = vunpack.c.h.b16 %v563
    %v1312 = vunpack.c.l.b16 %v564
    %v1313 = vunpack.c.h.b16 %v564
    %v1314 = vunpack.c.l.b16 %v565
    %v1315 = vunpack.c.h.b16 %v565
    %v1316 = vunpack.c.l.b16 %v566
    %v1317 = vunpack.c.h.b16 %v566
    %v1318 = vunpack.c.l.b16 %v567
    %v1319 = vunpack.c.h.b16 %v567
    %v1320 = vunpack.c.l.b16 %v568
    %v1321 = vunpack.c.h.b16 %v568
    %v1322 = vunpack.c.l.b16 %v569
    %v1323 = vunpack.c.h.b16 %v569
    %v1324 = vunpack.c.l.b16 %v570
    %v1325 = vunpack.c.h.b16 %v570
    %v1326 = vunpack.c.l.b16 %v571
    %v1327 = vunpack.c.h.b16 %v571
    %v1328 = vunpack.c.l.b16 %v572
    %v1329 = vunpack.c.h.b16 %v572
    %v1330 = vunpack.c.l.b16 %v573
    %v1331 = vunpack.c.h.b16 %v573
    %v1332 = vunpack.c.l.b16 %v574
    %v1333 = vunpack.c.h.b16 %v574
    %v1334 = vunpack.c.l.b16 %v575
    %v1335 = vunpack.c.h.b16 %v575
    %v1336 = vunpack.c.l.b16 %v576
    %v1337 = vunpack.c.h.b16 %v576
    %v1338 = vunpack.c.l.b16 %v577
    %v1339 = vunpack.c.h.b16 %v577
    %v1340 = vunpack.c.l.b16 %v578
    %v1341 = vunpack.c.h.b16 %v578
    %v1342 = vunpack.c.l.b16 %v579
    %v1343 = vunpack.c.h.b16 %v579
    %v1344 = vunpack.c.l.b16 %v580
    %v1345 = vunpack.c.h.b16 %v580
    %v1346 = vunpack.c.l.b16 %v581
    %v1347 = vunpack.c.h.b16 %v581
    %v1348 = vunpack.c.l.b16 %v582
    %v1349 = vunpack.c.h.b16 %v582
    %v1350 = vunpack.c.l.b16 %v583
    %v1351 = vunpack.c.h.b16 %v583
    %v1352 = vunpack.c.l.b16 %v584
    %v1353 = vunpack.c.h.b16 %v584
    %v1354 = vunpack.c.l.b16 %v585
    %v1355 = vunpack.c.h.b16 %v585
    %v1356 = vunpack.c.l.b16 %v586
    %v1357 = vunpack.c.h.b16 %v586
    %v1358 = vunpack.c.l.b16 %v587
    %v1359 = vunpack.c.h.b16 %v587
    %v1360 = vunpack.c.l.b16 %v588
    %v1361 = vunpack.c.h.b16 %v588
    %v1362 = vunpack.c.l.b16 %v589
    %v1363 = vunpack.c.h.b16 %v589
    %v1364 = vunpack.c.l.b16 %v590
    %v1365 = vunpack.c.h.b16 %v590
    %v1366 = vunpack.c.l.b16 %v591
    %v1367 = vunpack.c.h.b16 %v591
    %v1368 = vunpack.c.l.b16 %v592
    %v1369 = vunpack.c.h.b16 %v592
    %v1370 = vunpack.c.l.b16 %v593
    %v1371 = vunpack.c.h.b16 %v593
    %v1372 = vunpack.c.l.b16 %v594
    %v1373 = vunpack.c.h.b16 %v594
    %v1374 = vunpack.c.l.b16 %v595
    %v1375 = vunpack.c.h.b16 %v595
    %v1376 = vunpack.c.l.b16 %v596
    %v1377 = vunpack.c.h.b16 %v596
    %v1378 = vunpack.c.l.b16 %v597
    %v1379 = vunpack.c.h.b16 %v597
    %v1380 = vunpack.c.l.b16 %v598
    %v1381 = vunpack.c.h.b16 %v598
    %v1382 = vunpack.c.l.b16 %v599
    %v1383 = vunpack.c.h.b16 %v599
    %v1384 = vunpack.c.l.b16 %v600
    %v1385 = vunpack.c.h.b16 %v600
    %v1386 = vunpack.c.l.b16 %v601
    %v1387 = vunpack.c.h.b16 %v601
    %v1388 = vunpack.c.l.b16 %v602
    %v1389 = vunpack.c.h.b16 %v602
    %v1390 = vunpack.c.l.b16 %v603
    %v1391 = vunpack.c.h.b16 %v603
    %v1392 = vunpack.c.l.b16 %v604
    %v1393 = vunpack.c.h.b16 %v604
    %v1394 = vunpack.c.l.b16 %v605
    %v1395 = vunpack.c.h.b16 %v605
    %v1396 = vunpack.c.l.b16 %v606
    %v1397 = vunpack.c.h.b16 %v606
    %v1398 = vunpack.c.l.b16 %v607
    %v1399 = vunpack.c.h.b16 %v607
    %v1400 = vunpack.c.l.b16 %v608
    %v1401 = vunpack.c.h.b16 %v608
    %v1402 = vunpack.c.l.b16 %v609
    %v1403 = vunpack.c.h.b16 %v609
    %v1404 = vunpack.c.l.b16 %v610
    %v1405 = vunpack.c.h.b16 %v610
    %v1406 = vunpack.c.l.b16 %v611
    %v1407 = vunpack.c.h.b16 %v611
    %v1408 = vunpack.c.l.b16 %v612
    %v1409 = vunpack.c.h.b16 %v612
    %v1410 = vunpack.c.l.b16 %v613
    %v1411 = vunpack.c.h.b16 %v613
    %v1412 = vunpack.c.l.b16 %v614
    %v1413 = vunpack.c.h.b16 %v614
    %v1414 = vunpack.c.l.b16 %v615
    %v1415 = vunpack.c.h.b16 %v615
    %v1416 = vunpack.c.l.b16 %v616
    %v1417 = vunpack.c.h.b16 %v616
    %v1418 = vunpack.c.l.b16 %v617
    %v1419 = vunpack.c.h.b16 %v617
    %v1420 = vunpack.c.l.b16 %v618
    %v1421 = vunpack.c.h.b16 %v618
    %v1422 = vunpack.c.l.b16 %v619
    %v1423 = vunpack.c.h.b16 %v619
    %v1424 = vunpack.c.l.b16 %v620
    %v1425 = vunpack.c.h.b16 %v620
    %v1426 = vunpack.c.l.b16 %v621
    %v1427 = vunpack.c.h.b16 %v621
    %v1428 = vunpack.c.l.b16 %v622
    %v1429 = vunpack.c.h.b16 %v622
    %v1430 = vunpack.c.l.b16 %v623
    %v1431 = vunpack.c.h.b16 %v623
    %v1432 = vunpack.c.l.b16 %v624
    %v1433 = vunpack.c.h.b16 %v624
    %v1434 = vunpack.c.l.b16 %v625
    %v1435 = vunpack.c.h.b16 %v625
    %v1436 = vunpack.c.l.b16 %v626
    %v1437 = vunpack.c.h.b16 %v626
    %v1438 = vunpack.c.l.b16 %v627
    %v1439 = vunpack.c.h.b16 %v627
    %v1440 = vunpack.c.l.b16 %v628
    %v1441 = vunpack.c.h.b16 %v628
    %v1442 = vunpack.c.l.b16 %v629
    %v1443 = vunpack.c.h.b16 %v629
    %v1444 = vunpack.c.l.b16 %v630
    %v1445 = vunpack.c.h.b16 %v630
    %v1446 = vunpack.c.l.b16 %v631
    %v1447 = vunpack.c.h.b16 %v631
    %v1448 = vunpack.c.l.b16 %v632
    %v1449 = vunpack.c.h.b16 %v632
    %v1450 = vunpack.c.l.b16 %v633
    %v1451 = vunpack.c.h.b16 %v633
    %v1452 = vunpack.c.l.b16 %v634
    %v1453 = vunpack.c.h.b16 %v634
    %v1454 = vunpack.c.l.b16 %v635
    %v1455 = vunpack.c.h.b16 %v635
    %v1456 = vunpack.c.l.b16 %v636
    %v1457 = vunpack.c.h.b16 %v636
    %v1458 = vunpack.c.l.b16 %v637
    %v1459 = vunpack.c.h.b16 %v637
    %v1460 = vunpack.c.l.b16 %v638
    %v1461 = vunpack.c.h.b16 %v638
    %v1462 = vunpack.c.l.b16 %v639
    %v1463 = vunpack.c.h.b16 %v639
    %v1464 = vunpack.c.l.b16 %v640
    %v1465 = vunpack.c.h.b16 %v640
    %v1466 = vunpack.c.l.b16 %v641
    %v1467 = vunpack.c.h.b16 %v641
    %v1468 = vunpack.c.l.b16 %v642
    %v1469 = vunpack.c.h.b16 %v642
    %v1470 = vunpack.c.l.b16 %v643
    %v1471 = vunpack.c.h.b16 %v643
    %v1472 = vunpack.c.l.b16 %v644
    %v1473 = vunpack.c.h.b16 %v644
    %v1474 = vunpack.c.l.b16 %v645
    %v1475 = vunpack.c.h.b16 %v645
    %v1476 = vunpack.c.l.b16 %v646
    %v1477 = vunpack.c.h.b16 %v646
    %v1478 = vunpack.c.l.b16 %v647
    %v1479 = vunpack.c.h.b16 %v647
    %v1480 = vunpack.c.l.b16 %v648
    %v1481 = vunpack.c.h.b16 %v648
    %v1482 = vunpack.c.l.b16 %v649
    %v1483 = vunpack.c.h.b16 %v649
    %v1484 = vunpack.c.l.b16 %v650
    %v1485 = vunpack.c.h.b16 %v650
    %v1486 = vunpack.c.l.b16 %v651
    %v1487 = vunpack.c.h.b16 %v651
    %v1488 = vunpack.c.l.b16 %v652
    %v1489 = vunpack.c.h.b16 %v652
    %v1490 = vunpack.c.l.b16 %v653
    %v1491 = vunpack.c.h.b16 %v653
    %v1492 = vunpack.c.l.b16 %v654
    %v1493 = vunpack.c.h.b16 %v654
    %v1494 = vunpack.c.l.b16 %v655
    %v1495 = vunpack.c.h.b16 %v655
    %v1496 = vunpack.c.l.b16 %v656
    %v1497 = vunpack.c.h.b16 %v656
    %v1498 = vunpack.c.l.b16 %v657
    %v1499 = vunpack.c.h.b16 %v657
    %v1500 = vunpack.c.l.b16 %v658
    %v1501 = vunpack.c.h.b16 %v658
    %v1502 = vunpack.c.l.b16 %v659
    %v1503 = vunpack.c.h.b16 %v659
    %v1504 = vunpack.c.l.b16 %v660
    %v1505 = vunpack.c.h.b16 %v660
    %v1506 = vunpack.c.l.b16 %v661
    %v1507 = vunpack.c.h.b16 %v661
    %v1508 = vunpack.c.l.b16 %v662
    %v1509 = vunpack.c.h.b16 %v662
    %v1510 = vunpack.c.l.b16 %v663
    %v1511 = vunpack.c.h.b16 %v663
    %v1512 = vpack.c.b16 %v1008, %v1000
    %v1513 = vpack.c.b16 %v1009, %v1001
    %v1514 = vpack.c.b16 %v1010, %v1002
    %v1515 = vpack.c.b16 %v1011, %v1003
    %v1516 = vpack.c.b16 %v1012, %v1004
    %v1517 = vpack.c.b16 %v1013, %v1005
    %v1518 = vpack.c.b16 %v1014, %v1006
    %v1519 = vpack.c.b16 %v1015, %v1007
    %v1520 = vpack.c.b16 %v1024, %v1016
    %v1521 = vpack.c.b16 %v1025, %v1017
    %v1522 = vpack.c.b16 %v1026, %v1018
    %v1523 = vpack.c.b16 %v1027, %v1019
    %v1524 = vpack.c.b16 %v1028, %v1020
    %v1525 = vpack.c.b16 %v1029, %v1021
    %v1526 = vpack.c.b16 %v1030, %v1022
    %v1527 = vpack.c.b16 %v1031, %v1023
    %v1528 = vpack.c.b16 %v1040, %v1032
    %v1529 = vpack.c.b16 %v1041, %v1033
    %v1530 = vpack.c.b16 %v1042, %v1034
    %v1531 = vpack.c.b16 %v1043, %v1035
    %v1532 = vpack.c.b16 %v1044, %v1036
    %v1533 = vpack.c.b16 %v1045, %v1037
    %v1534 = vpack.c.b16 %v1046, %v1038
    %v1535 = vpack.c.b16 %v1047, %v1039
    %v1536 = vpack.c.b16 %v1056, %v1048
    %v1537 = vpack.c.b16 %v1057, %v1049
    %v1538 = vpack.c.b16 %v1058, %v1050
    %v1539 = vpack.c.b16 %v1059, %v1051
    %v1540 = vpack.c.b16 %v1060, %v1052
    %v1541 = vpack.c.b16 %v1061, %v1053
    %v1542 = vpack.c.b16 %v1062, %v1054
    %v1543 = vpack.c.b16 %v1063, %v1055
    %v1544 = vpack.c.b16 %v1072, %v1064
    %v1545 = vpack.c.b16 %v1073, %v1065
    %v1546 = vpack.c.b16 %v1074, %v1066
    %v1547 = vpack.c.b16 %v1075, %v1067
    %v1548 = vpack.c.b16 %v1076, %v1068
    %v1549 = vpack.c.b16 %v1077, %v1069
    %v1550 = vpack.c.b16 %v1078, %v1070
    %v1551 = vpack.c.b16 %v1079, %v1071
    %v1552 = vpack.c.b16 %v1088, %v1080
    %v1553 = vpack.c.b16 %v1089, %v1081
    %v1554 = vpack.c.b16 %v1090, %v1082
    %v1555 = vpack.c.b16 %v1091, %v1083
    %v1556 = vpack.c.b16 %v1092, %v1084
    %v1557 = vpack.c.b16 %v1093, %v1085
    %v1558 = vpack.c.b16 %v1094, %v1086
    %v1559 = vpack.c.b16 %v1095, %v1087
    %v1560 = vpack.c.b16 %v1104, %v1096
    %v1561 = vpack.c.b16 %v1105, %v1097
    %v1562 = vpack.c.b16 %v1106, %v1098
    %v1563 = vpack.c.b16 %v1107, %v1099
    %v1564 = vpack.c.b16 %v1108, %v1100
    %v1565 = vpack.c.b16 %v1109, %v1101
    %v1566 = vpack.c.b16 %v1110, %v1102
    %v1567 = vpack.c.b16 %v1111, %v1103
    %v1568 = vpack.c.b16 %v1120, %v1112
    %v1569 = vpack.c.b16 %v1121, %v1113
    %v1570 = vpack.c.b16 %v1122, %v1114
    %v1571 = vpack.c.b16 %v1123, %v1115
    %v1572 = vpack.c.b16 %v1124, %v1116
    %v1573 = vpack.c.b16 %v1125, %v1117
    %v1574 = vpack.c.b16 %v1126, %v1118
    %v1575 = vpack.c.b16 %v1127, %v1119
    %v1576 = vpack.c.b16 %v1136, %v1128
    %v1577 = vpack.c.b16 %v1137, %v1129
    %v1578 = vpack.c.b16 %v1138, %v1130
    %v1579 = vpack.c.b16 %v1139, %v1131
    %v1580 = vpack.c.b16 %v1140, %v1132
    %v1581 = vpack.c.b16 %v1141, %v1133
    %v1582 = vpack.c.b16 %v1142, %v1134
    %v1583 = vpack.c.b16 %v1143, %v1135
    %v1584 = vpack.c.b16 %v1152, %v1144
    %v1585 = vpack.c.b16 %v1153, %v1145
    %v1586 = vpack.c.b16 %v1154, %v1146
    %v1587 = vpack.c.b16 %v1155, %v1147
    %v1588 = vpack.c.b16 %v1156, %v1148
    %v1589 = vpack.c.b16 %v1157, %v1149
    %v1590 = vpack.c.b16 %v1158, %v1150
    %v1591 = vpack.c.b16 %v1159, %v1151
    %v1592 = vpack.c.b16 %v1168, %v1160
    %v1593 = vpack.c.b16 %v1169, %v1161
    %v1594 = vpack.c.b16 %v1170, %v1162
    %v1595 = vpack.c.b16 %v1171, %v1163
    %v1596 = vpack.c.b16 %v1172, %v1164
    %v1597 = vpack.c.b16 %v1173, %v1165
    %v1598 = vpack.c.b16 %v1174, %v1166
    %v1599 = vpack.c.b16 %v1175, %v1167
    %v1600 = vpack.c.b16 %v1184, %v1176
    %v1601 = vpack.c.b16 %v1185, %v1177
    %v1602 = vpack.c.b16 %v1186, %v1178
    %v1603 = vpack.c.b16 %v1187, %v1179
    %v1604 = vpack.c.b16 %v1188, %v1180
    %v1605 = vpack.c.b16 %v1189, %v1181
    %v1606 = vpack.c.b16 %v1190, %v1182
    %v1607 = vpack.c.b16 %v1191, %v1183
    %v1608 = vpack.c.b16 %v1200, %v1192
    %v1609 = vpack.c.b16 %v1201, %v1193
    %v1610 = vpack.c.b16 %v1202, %v1194
    %v1611 = vpack.c.b16 %v1203, %v1195
    %v1612 = vpack.c.b16 %v1204, %v1196
    %v1613 = vpack.c.b16 %v1205, %v1197
    %v1614 = vpack.c.b16 %v1206, %v1198
    %v1615 = vpack.c.b16 %v1207, %v1199
    %v1616 = vpack.c.b16 %v1216, %v1208
    %v1617 = vpack.c.b16 %v1217, %v1209
    %v1618 = vpack.c.b16 %v1218, %v1210
    %v1619 = vpack.c.b16 %v1219, %v1211
    %v1620 = vpack.c.b16 %v1220, %v1212
    %v1621 = vpack.c.b16 %v1221, %v1213
    %v1622 = vpack.c.b16 %v1222, %v1214
    %v1623 = vpack.c.b16 %v1223, %v1215
    %v1624 = vpack.c.b16 %v1232, %v1224
    %v1625 = vpack.c.b16 %v1233, %v1225
    %v1626 = vpack.c.b16 %v1234, %v1226
    %v1627 = vpack.c.b16 %v1235, %v1227
    %v1628 = vpack.c.b16 %v1236, %v1228
    %v1629 = vpack.c.b16 %v1237, %v1229
    %v1630 = vpack.c.b16 %v1238, %v1230
    %v1631 = vpack.c.b16 %v1239, %v1231
    %v1632 = vpack.c.b16 %v1248, %v1240
    %v1633 = vpack.c.b16 %v1249, %v1241
    %v1634 = vpack.c.b16 %v1250, %v1242
    %v1635 = vpack.c.b16 %v1251, %v1243
    %v1636 = vpack.c.b16 %v1252, %v1244
    %v1637 = vpack.c.b16 %v1253, %v1245
    %v1638 = vpack.c.b16 %v1254, %v1246
    %v1639 = vpack.c.b16 %v1255, %v1247
    %v1640 = vpack.c.b16 %v1264, %v1256
    %v1641 = vpack.c.b16 %v1265, %v1257
    %v1642 = vpack.c.b16 %v1266, %v1258
    %v1643 = vpack.c.b16 %v1267, %v1259
    %v1644 = vpack.c.b16 %v1268, %v1260
    %v1645 = vpack.c.b16 %v1269, %v1261
    %v1646 = vpack.c.b16 %v1270, %v1262
    %v1647 = vpack.c.b16 %v1271, %v1263
    %v1648 = vpack.c.b16 %v1280, %v1272
    %v1649 = vpack.c.b16 %v1281, %v1273
    %v1650 = vpack.c.b16 %v1282, %v1274
    %v1651 = vpack.c.b16 %v1283, %v1275
    %v1652 = vpack.c.b16 %v1284, %v1276
    %v1653 = vpack.c.b16 %v1285, %v1277
    %v1654 = vpack.c.b16 %v1286, %v1278
    %v1655 = vpack.c.b16 %v1287, %v1279
    %v1656 = vpack.c.b16 %v1296, %v1288
    %v1657 = vpack.c.b16 %v1297, %v1289
    %v1658 = vpack.c.b16 %v1298, %v1290
    %v1659 = vpack.c.b16 %v1299, %v1291
    %v1660 = vpack.c.b16 %v1300, %v1292
    %v1661 = vpack.c.b16 %v1301, %v1293
    %v1662 = vpack.c.b16 %v1302, %v1294
    %v1663 = vpack.c.b16 %v1303, %v1295
    %v1664 = vpack.c.b16 %v1312, %v1304
    %v1665 = vpack.c.b16 %v1313, %v1305
    %v1666 = vpack.c.b16 %v1314, %v1306
    %v1667 = vpack.c.b16 %v1315, %v1307
    %v1668 = vpack.c.b16 %v1316, %v1308
    %v1669 = vpack.c.b16 %v1317, %v1309
    %v1670 = vpack.c.b16 %v1318, %v1310
    %v1671 = vpack.c.b16 %v1319, %v1311
    %v1672 = vpack.c.b16 %v1328, %v1320
    %v1673 = vpack.c.b16 %v1329, %v1321
    %v1674 = vpack.c.b16 %v1330, %v1322
    %v1675 = vpack.c.b16 %v1331, %v1323
    %v1676 = vpack.c.b16 %v1332, %v1324
    %v1677 = vpack.c.b16 %v1333, %v1325
    %v1678 = vpack.c.b16 %v1334, %v1326
    %v1679 = vpack.c.b16 %v1335, %v1327
    %v1680 = vpack.c.b16 %v1344, %v1336
    %v1681 = vpack.c.b16 %v1345, %v1337
    %v1682 = vpack.c.b16 %v1346, %v1338
    %v1683 = vpack.c.b16 %v1347, %v1339
    %v1684 = vpack.c.b16 %v1348, %v1340
    %v1685 = vpack.c.b16 %v1349, %v1341
    %v1686 = vpack.c.b16 %v1350, %v1342
    %v1687 = vpack.c.b16 %v1351, %v1343
    %v1688 = vpack.c.b16 %v1360, %v1352
    %v1689 = vpack.c.b16 %v1361, %v1353
    %v1690 = vpack.c.b16 %v1362, %v1354
    %v1691 = vpack.c.b16 %v1363, %v1355
    %v1692 = vpack.c.b16 %v1364, %v1356
    %v1693 = vpack.c.b16 %v1365, %v1357
    %v1694 = vpack.c.b16 %v1366, %v1358
    %v1695 = vpack.c.b16 %v1367, %v1359
    %v1696 = vpack.c.b16 %v1376, %v1368
    %v1697 = vpack.c.b16 %v1377, %v1369
    %v1698 = vpack.c.b16 %v1378, %v1370
    %v1699 = vpack.c.b16 %v1379, %v1371
    %v1700 = vpack.c.b16 %v1380, %v1372
    %v1701 = vpack.c.b16 %v1381, %v1373
    %v1702 = vpack.c.b16 %v1382, %v1374
    %v1703 = vpack.c.b16 %v1383, %v1375
    %v1704 = vpack.c.b16 %v1392, %v1384
    %v1705 = vpack.c.b16 %v1393, %v1385
    %v1706 = vpack.c.b16 %v1394, %v1386
    %v1707 = vpack.c.b16 %v1395, %v1387
    %v1708 = vpack.c.b16 %v1396, %v1388
    %v1709 = vpack.c.b16 %v1397, %v1389
    %v1710 = vpack.c.b16 %v1398, %v1390
    %v1711 = vpack.c.b16 %v1399, %v1391
    %v1712 = vpack.c.b16 %v1408, %v1400
    %v1713 = vpack.c.b16 %v1409, %v1401
    %v1714 = vpack.c.b16 %v1410, %v1402
    %v1715 = vpack.c.b16 %v1411, %v1403
    %v1716 = vpack.c.b16 %v1412, %v1404
    %v1717 = vpack.c.b16 %v1413, %v1405
    %v1718 = vpack.c.b16 %v1414, %v1406
    %v1719 = vpack.c.b16 %v1415, %v1407
    %v1720 = vpack.c.b16 %v1424, %v1416
    %v1721 = vpack.c.b16 %v1425, %v1417
    %v1722 = vpack.c.b16 %v1426, %v1418
    %v1723 = vpack.c.b16 %v1427, %v1419
    %v1724 = vpack.c.b16 %v1428, %v1420
    %v1725 = vpack.c.b16 %v1429, %v1421
    %v1726 = vpack.c.b16 %v1430, %v1422
    %v1727 = vpack.c.b16 %v1431, %v1423
    %v1728 = vpack.c.b16 %v1440, %v1432
    %v1729 = vpack.c.b16 %v1441, %v1433
    %v1730 = vpack.c.b16 %v1442, %v1434
    %v1731 = vpack.c.b16 %v1443, %v1435
    %v1732 = vpack.c.b16 %v1444, %v1436
    %v1733 = vpack.c.b16 %v1445, %v1437
    %v1734 = vpack.c.b16 %v1446, %v1438
    %v1735 = vpack.c.b16 %v1447, %v1439
    %v1736 = vpack.c.b16 %v1456, %v1448
    %v1737 = vpack.c.b16 %v1457, %v1449
    %v1738 = vpack.c.b16 %v1458, %v1450
    %v1739 = vpack.c.b16 %v1459, %v1451
    %v1740 = vpack.c.b16 %v1460, %v1452
    %v1741 = vpack.c.b16 %v1461, %v1453
    %v1742 = vpack.c.b16 %v1462, %v1454
    %v1743 = vpack.c.b16 %v1463, %v1455
    %v1744 = vpack.c.b16 %v1472, %v1464
    %v1745 = vpack.c.b16 %v1473, %v1465
    %v1746 = vpack.c.b16 %v1474, %v1466
    %v1747 = vpack.c.b16 %v1475, %v1467
    %v1748 = vpack.c.b16 %v1476, %v1468
    %v1749 = vpack.c.b16 %v1477, %v1469
    %v1750 = vpack.c.b16 %v1478, %v1470
    %v1751 = vpack.c.b16 %v1479, %v1471
    %v1752 = vpack.c.b16 %v1488, %v1480
    %v1753 = vpack.c.b16 %v1489, %v1481
    %v1754 = vpack.c.b16 %v1490, %v1482
    %v1755 = vpack.c.b16 %v1491, %v1483
    %v1756 = vpack.c.b16 %v1492, %v1484
    %v1757 = vpack.c.b16 %v1493, %v1485
    %v1758 = vpack.c.b16 %v1494, %v1486
    %v1759 = vpack.c.b16 %v1495, %v1487
    %v1760 = vpack.c.b16 %v1504, %v1496
    %v1761 = vpack.c.b16 %v1505, %v1497
    %v1762 = vpack.c.b16 %v1506, %v1498
    %v1763 = vpack.c.b16 %v1507, %v1499
    %v1764 = vpack.c.b16 %v1508, %v1500
    %v1765 = vpack.c.b16 %v1509, %v1501
    %v1766 = vpack.c.b16 %v1510, %v1502
    %v1767 = vpack.c.b16 %v1511, %v1503
    %2024 = vmatprep.subr.bf16.mxu0 %v1513
    %2025 = vmatpush1.bf16.msra.mxu0 %v1512
    %2026 = vmatprep.subr.bf16.mxu0 %v1521
    %2027 = vmatpush1.bf16.msra.mxu0 %v1520
    %2028 = vmatprep.subr.bf16.mxu0 %v1529
    %2029 = vmatpush1.bf16.msra.mxu0 %v1528
    %2030 = vmatprep.subr.bf16.mxu0 %v1537
    %2031 = vmatpush1.bf16.msra.mxu0 %v1536
    %2032 = vmatprep.subr.bf16.mxu0 %v1545
    %2033 = vmatpush1.bf16.msra.mxu0 %v1544
    %2034 = vmatprep.subr.bf16.mxu0 %v1553
    %2035 = vmatpush1.bf16.msra.mxu0 %v1552
    %2036 = vmatprep.subr.bf16.mxu0 %v1561
    %2037 = vmatpush1.bf16.msra.mxu0 %v1560
    %2038 = vmatprep.subr.bf16.mxu0 %v1569
    %2039 = vmatpush1.bf16.msra.mxu0 %v1568
    %2040 = vmatprep.subr.bf16.mxu0 %v1577
    %2041 = vmatpush1.bf16.msra.mxu0 %v1576
    %2042 = vmatprep.subr.bf16.mxu0 %v1585
    %2043 = vmatpush1.bf16.msra.mxu0 %v1584
    %2044 = vmatprep.subr.bf16.mxu0 %v1593
    %2045 = vmatpush1.bf16.msra.mxu0 %v1592
    %2046 = vmatprep.subr.bf16.mxu0 %v1601
    %2047 = vmatpush1.bf16.msra.mxu0 %v1600
    %2048 = vmatprep.subr.bf16.mxu0 %v1609
    %2049 = vmatpush1.bf16.msra.mxu0 %v1608
    %2050 = vmatprep.subr.bf16.mxu0 %v1617
    %2051 = vmatpush1.bf16.msra.mxu0 %v1616
    %2052 = vmatprep.subr.bf16.mxu0 %v1625
    %2053 = vmatpush1.bf16.msra.mxu0 %v1624
    %2054 = vmatprep.subr.bf16.mxu0 %v1633
    %2055 = vmatpush1.bf16.msra.mxu0 %v1632
    %2056 = vmatprep.mubr.bf16.mxu0 %v738
    %2057 = vmatmul.mubr.bf16.gmra.mrb[0].mxu0 %v736
    %v2058 = vpop.f32.mrb[0].mxu0
    %v2059 = vadd.f32 0.0, %v2058
    %v2060 = vpop.f32.mrb[0].mxu0
    %v2061 = vadd.f32 0.0, %v2060
    %v2062 = vpop.f32.mrb[0].mxu0
    %v2063 = vadd.f32 0.0, %v2062
    %v2064 = vpop.f32.mrb[0].mxu0
    %v2065 = vadd.f32 0.0, %v2064
    %2066 = vdwg.mxu0
    %2067 = vmatprep.subr.bf16.mxu0 %v1641
    %2068 = vmatpush1.bf16.msra.mxu0 %v1640
    %2069 = vmatprep.subr.bf16.mxu0 %v1649
    %2070 = vmatpush1.bf16.msra.mxu0 %v1648
    %2071 = vmatprep.subr.bf16.mxu0 %v1657
    %2072 = vmatpush1.bf16.msra.mxu0 %v1656
    %2073 = vmatprep.subr.bf16.mxu0 %v1665
    %2074 = vmatpush1.bf16.msra.mxu0 %v1664
    %2075 = vmatprep.subr.bf16.mxu0 %v1673
    %2076 = vmatpush1.bf16.msra.mxu0 %v1672
    %2077 = vmatprep.subr.bf16.mxu0 %v1681
    %2078 = vmatpush1.bf16.msra.mxu0 %v1680
    %2079 = vmatprep.subr.bf16.mxu0 %v1689
    %2080 = vmatpush1.bf16.msra.mxu0 %v1688
    %2081 = vmatprep.subr.bf16.mxu0 %v1697
    %2082 = vmatpush1.bf16.msra.mxu0 %v1696
    %2083 = vmatprep.subr.bf16.mxu0 %v1705
    %2084 = vmatpush1.bf16.msra.mxu0 %v1704
    %2085 = vmatprep.subr.bf16.mxu0 %v1713
    %2086 = vmatpush1.bf16.msra.mxu0 %v1712
    %2087 = vmatprep.subr.bf16.mxu0 %v1721
    %2088 = vmatpush1.bf16.msra.mxu0 %v1720
    %2089 = vmatprep.subr.bf16.mxu0 %v1729
    %2090 = vmatpush1.bf16.msra.mxu0 %v1728
    %2091 = vmatprep.subr.bf16.mxu0 %v1737
    %2092 = vmatpush1.bf16.msra.mxu0 %v1736
    %2093 = vmatprep.subr.bf16.mxu0 %v1745
    %2094 = vmatpush1.bf16.msra.mxu0 %v1744
    %2095 = vmatprep.subr.bf16.mxu0 %v1753
    %2096 = vmatpush1.bf16.msra.mxu0 %v1752
    %2097 = vmatprep.subr.bf16.mxu0 %v1761
    %2098 = vmatpush1.bf16.msra.mxu0 %v1760
    %2099 = vmatprep.mubr.bf16.mxu0 %v739
    %2100 = vmatmul.mubr.bf16.gmra.mrb[0].mxu0 %v737
    %v2101 = vpop.f32.mrb[0].mxu0
    %v2102 = vadd.f32 %v2059, %v2101
    %v2103 = vpop.f32.mrb[0].mxu0
    %v2104 = vadd.f32 %v2061, %v2103
    %v2105 = vpop.f32.mrb[0].mxu0
    %v2106 = vadd.f32 %v2063, %v2105
    %v2107 = vpop.f32.mrb[0].mxu0
    %v2108 = vadd.f32 %v2065, %v2107
    %2109 = vdwg.mxu0
    %2110 = vmatprep.subr.bf16.mxu0 %v1515
    %2111 = vmatpush1.bf16.msra.mxu0 %v1514
    %2112 = vmatprep.subr.bf16.mxu0 %v1523
    %2113 = vmatpush1.bf16.msra.mxu0 %v1522
    %2114 = vmatprep.subr.bf16.mxu0 %v1531
    %2115 = vmatpush1.bf16.msra.mxu0 %v1530
    %2116 = vmatprep.subr.bf16.mxu0 %v1539
    %2117 = vmatpush1.bf16.msra.mxu0 %v1538
    %2118 = vmatprep.subr.bf16.mxu0 %v1547
    %2119 = vmatpush1.bf16.msra.mxu0 %v1546
    %2120 = vmatprep.subr.bf16.mxu0 %v1555
    %2121 = vmatpush1.bf16.msra.mxu0 %v1554
    %2122 = vmatprep.subr.bf16.mxu0 %v1563
    %2123 = vmatpush1.bf16.msra.mxu0 %v1562
    %2124 = vmatprep.subr.bf16.mxu0 %v1571
    %2125 = vmatpush1.bf16.msra.mxu0 %v1570
    %2126 = vmatprep.subr.bf16.mxu0 %v1579
    %2127 = vmatpush1.bf16.msra.mxu0 %v1578
    %2128 = vmatprep.subr.bf16.mxu0 %v1587
    %2129 = vmatpush1.bf16.msra.mxu0 %v1586
    %2130 = vmatprep.subr.bf16.mxu0 %v1595
    %2131 = vmatpush1.bf16.msra.mxu0 %v1594
    %2132 = vmatprep.subr.bf16.mxu0 %v1603
    %2133 = vmatpush1.bf16.msra.mxu0 %v1602
    %2134 = vmatprep.subr.bf16.mxu0 %v1611
    %2135 = vmatpush1.bf16.msra.mxu0 %v1610
    %2136 = vmatprep.subr.bf16.mxu0 %v1619
    %2137 = vmatpush1.bf16.msra.mxu0 %v1618
    %2138 = vmatprep.subr.bf16.mxu0 %v1627
    %2139 = vmatpush1.bf16.msra.mxu0 %v1626
    %2140 = vmatprep.subr.bf16.mxu0 %v1635
    %2141 = vmatpush1.bf16.msra.mxu0 %v1634
    %2142 = vmatprep.mubr.bf16.mxu0 %v738
    %2143 = vmatmul.mubr.bf16.gmra.mrb[0].mxu0 %v736
    %v2144 = vpop.f32.mrb[0].mxu0
    %v2145 = vadd.f32 0.0, %v2144
    %v2146 = vpop.f32.mrb[0].mxu0
    %v2147 = vadd.f32 0.0, %v2146
    %v2148 = vpop.f32.mrb[0].mxu0
    %v2149 = vadd.f32 0.0, %v2148
    %v2150 = vpop.f32.mrb[0].mxu0
    %v2151 = vadd.f32 0.0, %v2150
    %2152 = vdwg.mxu0
    %2153 = vmatprep.subr.bf16.mxu0 %v1643
    %2154 = vmatpush1.bf16.msra.mxu0 %v1642
    %2155 = vmatprep.subr.bf16.mxu0 %v1651
    %2156 = vmatpush1.bf16.msra.mxu0 %v1650
    %2157 = vmatprep.subr.bf16.mxu0 %v1659
    %2158 = vmatpush1.bf16.msra.mxu0 %v1658
    %2159 = vmatprep.subr.bf16.mxu0 %v1667
    %2160 = vmatpush1.bf16.msra.mxu0 %v1666
    %2161 = vmatprep.subr.bf16.mxu0 %v1675
    %2162 = vmatpush1.bf16.msra.mxu0 %v1674
    %2163 = vmatprep.subr.bf16.mxu0 %v1683
    %2164 = vmatpush1.bf16.msra.mxu0 %v1682
    %2165 = vmatprep.subr.bf16.mxu0 %v1691
    %2166 = vmatpush1.bf16.msra.mxu0 %v1690
    %2167 = vmatprep.subr.bf16.mxu0 %v1699
    %2168 = vmatpush1.bf16.msra.mxu0 %v1698
    %2169 = vmatprep.subr.bf16.mxu0 %v1707
    %2170 = vmatpush1.bf16.msra.mxu0 %v1706
    %2171 = vmatprep.subr.bf16.mxu0 %v1715
    %2172 = vmatpush1.bf16.msra.mxu0 %v1714
    %2173 = vmatprep.subr.bf16.mxu0 %v1723
    %2174 = vmatpush1.bf16.msra.mxu0 %v1722
    %2175 = vmatprep.subr.bf16.mxu0 %v1731
    %2176 = vmatpush1.bf16.msra.mxu0 %v1730
    %2177 = vmatprep.subr.bf16.mxu0 %v1739
    %2178 = vmatpush1.bf16.msra.mxu0 %v1738
    %2179 = vmatprep.subr.bf16.mxu0 %v1747
    %2180 = vmatpush1.bf16.msra.mxu0 %v1746
    %2181 = vmatprep.subr.bf16.mxu0 %v1755
    %2182 = vmatpush1.bf16.msra.mxu0 %v1754
    %2183 = vmatprep.subr.bf16.mxu0 %v1763
    %2184 = vmatpush1.bf16.msra.mxu0 %v1762
    %2185 = vmatprep.mubr.bf16.mxu0 %v739
    %2186 = vmatmul.mubr.bf16.gmra.mrb[0].mxu0 %v737
    %v2187 = vpop.f32.mrb[0].mxu0
    %v2188 = vadd.f32 %v2145, %v2187
    %v2189 = vpop.f32.mrb[0].mxu0
    %v2190 = vadd.f32 %v2147, %v2189
    %v2191 = vpop.f32.mrb[0].mxu0
    %v2192 = vadd.f32 %v2149, %v2191
    %v2193 = vpop.f32.mrb[0].mxu0
    %v2194 = vadd.f32 %v2151, %v2193
    %2195 = vdwg.mxu0
    %2196 = vmatprep.subr.bf16.mxu0 %v1517
    %2197 = vmatpush1.bf16.msra.mxu0 %v1516
    %2198 = vmatprep.subr.bf16.mxu0 %v1525
    %2199 = vmatpush1.bf16.msra.mxu0 %v1524
    %2200 = vmatprep.subr.bf16.mxu0 %v1533
    %2201 = vmatpush1.bf16.msra.mxu0 %v1532
    %2202 = vmatprep.subr.bf16.mxu0 %v1541
    %2203 = vmatpush1.bf16.msra.mxu0 %v1540
    %2204 = vmatprep.subr.bf16.mxu0 %v1549
    %2205 = vmatpush1.bf16.msra.mxu0 %v1548
    %2206 = vmatprep.subr.bf16.mxu0 %v1557
    %2207 = vmatpush1.bf16.msra.mxu0 %v1556
    %2208 = vmatprep.subr.bf16.mxu0 %v1565
    %2209 = vmatpush1.bf16.msra.mxu0 %v1564
    %2210 = vmatprep.subr.bf16.mxu0 %v1573
    %2211 = vmatpush1.bf16.msra.mxu0 %v1572
    %2212 = vmatprep.subr.bf16.mxu0 %v1581
    %2213 = vmatpush1.bf16.msra.mxu0 %v1580
    %2214 = vmatprep.subr.bf16.mxu0 %v1589
    %2215 = vmatpush1.bf16.msra.mxu0 %v1588
    %2216 = vmatprep.subr.bf16.mxu0 %v1597
    %2217 = vmatpush1.bf16.msra.mxu0 %v1596
    %2218 = vmatprep.subr.bf16.mxu0 %v1605
    %2219 = vmatpush1.bf16.msra.mxu0 %v1604
    %2220 = vmatprep.subr.bf16.mxu0 %v1613
    %2221 = vmatpush1.bf16.msra.mxu0 %v1612
    %2222 = vmatprep.subr.bf16.mxu0 %v1621
    %2223 = vmatpush1.bf16.msra.mxu0 %v1620
    %2224 = vmatprep.subr.bf16.mxu0 %v1629
    %2225 = vmatpush1.bf16.msra.mxu0 %v1628
    %2226 = vmatprep.subr.bf16.mxu0 %v1637
    %2227 = vmatpush1.bf16.msra.mxu0 %v1636
    %2228 = vmatprep.mubr.bf16.mxu0 %v738
    %2229 = vmatmul.mubr.bf16.gmra.mrb[0].mxu0 %v736
    %v2230 = vpop.f32.mrb[0].mxu0
    %v2231 = vadd.f32 0.0, %v2230
    %v2232 = vpop.f32.mrb[0].mxu0
    %v2233 = vadd.f32 0.0, %v2232
    %v2234 = vpop.f32.mrb[0].mxu0
    %v2235 = vadd.f32 0.0, %v2234
    %v2236 = vpop.f32.mrb[0].mxu0
    %v2237 = vadd.f32 0.0, %v2236
    %2238 = vdwg.mxu0
    %2239 = vmatprep.subr.bf16.mxu0 %v1645
    %2240 = vmatpush1.bf16.msra.mxu0 %v1644
    %2241 = vmatprep.subr.bf16.mxu0 %v1653
    %2242 = vmatpush1.bf16.msra.mxu0 %v1652
    %2243 = vmatprep.subr.bf16.mxu0 %v1661
    %2244 = vmatpush1.bf16.msra.mxu0 %v1660
    %2245 = vmatprep.subr.bf16.mxu0 %v1669
    %2246 = vmatpush1.bf16.msra.mxu0 %v1668
    %2247 = vmatprep.subr.bf16.mxu0 %v1677
    %2248 = vmatpush1.bf16.msra.mxu0 %v1676
    %2249 = vmatprep.subr.bf16.mxu0 %v1685
    %2250 = vmatpush1.bf16.msra.mxu0 %v1684
    %2251 = vmatprep.subr.bf16.mxu0 %v1693
    %2252 = vmatpush1.bf16.msra.mxu0 %v1692
    %2253 = vmatprep.subr.bf16.mxu0 %v1701
    %2254 = vmatpush1.bf16.msra.mxu0 %v1700
    %2255 = vmatprep.subr.bf16.mxu0 %v1709
    %2256 = vmatpush1.bf16.msra.mxu0 %v1708
    %2257 = vmatprep.subr.bf16.mxu0 %v1717
    %2258 = vmatpush1.bf16.msra.mxu0 %v1716
    %2259 = vmatprep.subr.bf16.mxu0 %v1725
    %2260 = vmatpush1.bf16.msra.mxu0 %v1724
    %2261 = vmatprep.subr.bf16.mxu0 %v1733
    %2262 = vmatpush1.bf16.msra.mxu0 %v1732
    %2263 = vmatprep.subr.bf16.mxu0 %v1741
    %2264 = vmatpush1.bf16.msra.mxu0 %v1740
    %2265 = vmatprep.subr.bf16.mxu0 %v1749
    %2266 = vmatpush1.bf16.msra.mxu0 %v1748
    %2267 = vmatprep.subr.bf16.mxu0 %v1757
    %2268 = vmatpush1.bf16.msra.mxu0 %v1756
    %2269 = vmatprep.subr.bf16.mxu0 %v1765
    %2270 = vmatpush1.bf16.msra.mxu0 %v1764
    %2271 = vmatprep.mubr.bf16.mxu0 %v739
    %2272 = vmatmul.mubr.bf16.gmra.mrb[0].mxu0 %v737
    %v2273 = vpop.f32.mrb[0].mxu0
    %v2274 = vadd.f32 %v2231, %v2273
    %v2275 = vpop.f32.mrb[0].mxu0
    %v2276 = vadd.f32 %v2233, %v2275
    %v2277 = vpop.f32.mrb[0].mxu0
    %v2278 = vadd.f32 %v2235, %v2277
    %v2279 = vpop.f32.mrb[0].mxu0
    %v2280 = vadd.f32 %v2237, %v2279
    %2281 = vdwg.mxu0
    %2282 = vmatprep.subr.bf16.mxu0 %v1519
    %2283 = vmatpush1.bf16.msra.mxu0 %v1518
    %2284 = vmatprep.subr.bf16.mxu0 %v1527
    %2285 = vmatpush1.bf16.msra.mxu0 %v1526
    %2286 = vmatprep.subr.bf16.mxu0 %v1535
    %2287 = vmatpush1.bf16.msra.mxu0 %v1534
    %2288 = vmatprep.subr.bf16.mxu0 %v1543
    %2289 = vmatpush1.bf16.msra.mxu0 %v1542
    %2290 = vmatprep.subr.bf16.mxu0 %v1551
    %2291 = vmatpush1.bf16.msra.mxu0 %v1550
    %2292 = vmatprep.subr.bf16.mxu0 %v1559
    %2293 = vmatpush1.bf16.msra.mxu0 %v1558
    %2294 = vmatprep.subr.bf16.mxu0 %v1567
    %2295 = vmatpush1.bf16.msra.mxu0 %v1566
    %2296 = vmatprep.subr.bf16.mxu0 %v1575
    %2297 = vmatpush1.bf16.msra.mxu0 %v1574
    %2298 = vmatprep.subr.bf16.mxu0 %v1583
    %2299 = vmatpush1.bf16.msra.mxu0 %v1582
    %2300 = vmatprep.subr.bf16.mxu0 %v1591
    %2301 = vmatpush1.bf16.msra.mxu0 %v1590
    %2302 = vmatprep.subr.bf16.mxu0 %v1599
    %2303 = vmatpush1.bf16.msra.mxu0 %v1598
    %2304 = vmatprep.subr.bf16.mxu0 %v1607
    %2305 = vmatpush1.bf16.msra.mxu0 %v1606
    %2306 = vmatprep.subr.bf16.mxu0 %v1615
    %2307 = vmatpush1.bf16.msra.mxu0 %v1614
    %2308 = vmatprep.subr.bf16.mxu0 %v1623
    %2309 = vmatpush1.bf16.msra.mxu0 %v1622
    %2310 = vmatprep.subr.bf16.mxu0 %v1631
    %2311 = vmatpush1.bf16.msra.mxu0 %v1630
    %2312 = vmatprep.subr.bf16.mxu0 %v1639
    %2313 = vmatpush1.bf16.msra.mxu0 %v1638
    %2314 = vmatprep.mubr.bf16.mxu0 %v738
    %2315 = vmatmul.mubr.bf16.gmra.mrb[0].mxu0 %v736
    %v2316 = vpop.f32.mrb[0].mxu0
    %v2317 = vadd.f32 0.0, %v2316
    %v2318 = vpop.f32.mrb[0].mxu0
    %v2319 = vadd.f32 0.0, %v2318
    %v2320 = vpop.f32.mrb[0].mxu0
    %v2321 = vadd.f32 0.0, %v2320
    %v2322 = vpop.f32.mrb[0].mxu0
    %v2323 = vadd.f32 0.0, %v2322
    %2324 = vdwg.mxu0
    %2325 = vmatprep.subr.bf16.mxu0 %v1647
    %2326 = vmatpush1.bf16.msra.mxu0 %v1646
    %2327 = vmatprep.subr.bf16.mxu0 %v1655
    %2328 = vmatpush1.bf16.msra.mxu0 %v1654
    %2329 = vmatprep.subr.bf16.mxu0 %v1663
    %2330 = vmatpush1.bf16.msra.mxu0 %v1662
    %2331 = vmatprep.subr.bf16.mxu0 %v1671
    %2332 = vmatpush1.bf16.msra.mxu0 %v1670
    %2333 = vmatprep.subr.bf16.mxu0 %v1679
    %2334 = vmatpush1.bf16.msra.mxu0 %v1678
    %2335 = vmatprep.subr.bf16.mxu0 %v1687
    %2336 = vmatpush1.bf16.msra.mxu0 %v1686
    %2337 = vmatprep.subr.bf16.mxu0 %v1695
    %2338 = vmatpush1.bf16.msra.mxu0 %v1694
    %2339 = vmatprep.subr.bf16.mxu0 %v1703
    %2340 = vmatpush1.bf16.msra.mxu0 %v1702
    %2341 = vmatprep.subr.bf16.mxu0 %v1711
    %2342 = vmatpush1.bf16.msra.mxu0 %v1710
    %2343 = vmatprep.subr.bf16.mxu0 %v1719
    %2344 = vmatpush1.bf16.msra.mxu0 %v1718
    %2345 = vmatprep.subr.bf16.mxu0 %v1727
    %2346 = vmatpush1.bf16.msra.mxu0 %v1726
    %2347 = vmatprep.subr.bf16.mxu0 %v1735
    %2348 = vmatpush1.bf16.msra.mxu0 %v1734
    %2349 = vmatprep.subr.bf16.mxu0 %v1743
    %2350 = vmatpush1.bf16.msra.mxu0 %v1742
    %2351 = vmatprep.subr.bf16.mxu0 %v1751
    %2352 = vmatpush1.bf16.msra.mxu0 %v1750
    %2353 = vmatprep.subr.bf16.mxu0 %v1759
    %2354 = vmatpush1.bf16.msra.mxu0 %v1758
    %2355 = vmatprep.subr.bf16.mxu0 %v1767
    %2356 = vmatpush1.bf16.msra.mxu0 %v1766
    %2357 = vmatprep.mubr.bf16.mxu0 %v739
    %2358 = vmatmul.mubr.bf16.gmra.mrb[0].mxu0 %v737
    %v2359 = vpop.f32.mrb[0].mxu0
    %v2360 = vadd.f32 %v2317, %v2359
    %v2361 = vpop.f32.mrb[0].mxu0
    %v2362 = vadd.f32 %v2319, %v2361
    %v2363 = vpop.f32.mrb[0].mxu0
    %v2364 = vadd.f32 %v2321, %v2363
    %v2365 = vpop.f32.mrb[0].mxu0
    %v2366 = vadd.f32 %v2323, %v2365
    %2367 = vdwg.mxu0
    %v2376 = vcombine.low %v136, %v137
    %v2377 = vcombine.low %v138, %v139
    %v2378 = vcombine.low %v140, %v141
    %v2379 = vcombine.low %v142, %v143
    %v2381 = vunpack.c.l.s4 1966171168
    %v2382 = vunpack.c.0.s8 %v2381
    %v2383 = vlaneseq
    %v2384 = vshrl.u32 %v2383, 7
    %v2385 = vsub.s32 %v2382, %v2384
    %v2386 = vrot.slane %v2376, %v2385
    %v2388 = vunpack.c.l.s4 1966171168
    %v2389 = vunpack.c.0.s8 %v2388
    %v2390 = vlaneseq
    %v2391 = vshrl.u32 %v2390, 7
    %v2392 = vsub.s32 %v2389, %v2391
    %v2393 = vrot.slane %v2377, %v2392
    %v2395 = vunpack.c.l.s4 1966171168
    %v2396 = vunpack.c.0.s8 %v2395
    %v2397 = vlaneseq
    %v2398 = vshrl.u32 %v2397, 7
    %v2399 = vsub.s32 %v2396, %v2398
    %v2400 = vrot.slane %v2378, %v2399
    %v2402 = vunpack.c.l.s4 1966171168
    %v2403 = vunpack.c.0.s8 %v2402
    %v2404 = vlaneseq
    %v2405 = vshrl.u32 %v2404, 7
    %v2406 = vsub.s32 %v2403, %v2405
    %v2407 = vrot.slane %v2379, %v2406
    %v2408 = vcombine.low %v2386, %v2393
    %v2409 = vcombine.high %v2386, %v2393
    %v2410 = vcombine.low %v2400, %v2407
    %v2411 = vcombine.high %v2400, %v2407
    %v2413 = vunpack.c.l.s4 1966171168
    %v2414 = vunpack.c.0.s8 %v2413
    %v2415 = vlaneseq
    %v2416 = vshrl.u32 %v2415, 7
    %v2417 = vsub.s32 %v2414, %v2416
    %v2418 = vrot.slane %v2408, %v2417
    %v2420 = vunpack.c.l.s4 1966171168
    %v2421 = vunpack.c.0.s8 %v2420
    %v2422 = vlaneseq
    %v2423 = vshrl.u32 %v2422, 7
    %v2424 = vsub.s32 %v2421, %v2423
    %v2425 = vrot.slane %v2409, %v2424
    %v2427 = vunpack.c.l.s4 1966171168
    %v2428 = vunpack.c.0.s8 %v2427
    %v2429 = vlaneseq
    %v2430 = vshrl.u32 %v2429, 7
    %v2431 = vsub.s32 %v2428, %v2430
    %v2432 = vrot.slane %v2410, %v2431
    %v2434 = vunpack.c.l.s4 1966171168
    %v2435 = vunpack.c.0.s8 %v2434
    %v2436 = vlaneseq
    %v2437 = vshrl.u32 %v2436, 7
    %v2438 = vsub.s32 %v2435, %v2437
    %v2439 = vrot.slane %v2411, %v2438
    %v2440 = vcombine.low %v2418, %v2432
    %v2441 = vcombine.high %v2418, %v2432
    %v2442 = vcombine.low %v2425, %v2439
    %v2443 = vcombine.high %v2425, %v2439
    %v2704 = vunpack.c.l.b16 %v152
    %v2705 = vunpack.c.h.b16 %v152
    %v2706 = vunpack.c.l.b16 %v153
    %v2707 = vunpack.c.h.b16 %v153
    %v2708 = vunpack.c.l.b16 %v154
    %v2709 = vunpack.c.h.b16 %v154
    %v2710 = vunpack.c.l.b16 %v155
    %v2711 = vunpack.c.h.b16 %v155
    %v2712 = vunpack.c.l.b16 %v156
    %v2713 = vunpack.c.h.b16 %v156
    %v2714 = vunpack.c.l.b16 %v157
    %v2715 = vunpack.c.h.b16 %v157
    %v2716 = vunpack.c.l.b16 %v158
    %v2717 = vunpack.c.h.b16 %v158
    %v2718 = vunpack.c.l.b16 %v159
    %v2719 = vunpack.c.h.b16 %v159
    %v2720 = vunpack.c.l.b16 %v160
    %v2721 = vunpack.c.h.b16 %v160
    %v2722 = vunpack.c.l.b16 %v161
    %v2723 = vunpack.c.h.b16 %v161
    %v2724 = vunpack.c.l.b16 %v162
    %v2725 = vunpack.c.h.b16 %v162
    %v2726 = vunpack.c.l.b16 %v163
    %v2727 = vunpack.c.h.b16 %v163
    %v2728 = vunpack.c.l.b16 %v164
    %v2729 = vunpack.c.h.b16 %v164
    %v2730 = vunpack.c.l.b16 %v165
    %v2731 = vunpack.c.h.b16 %v165
    %v2732 = vunpack.c.l.b16 %v166
    %v2733 = vunpack.c.h.b16 %v166
    %v2734 = vunpack.c.l.b16 %v167
    %v2735 = vunpack.c.h.b16 %v167
    %v2736 = vunpack.c.l.b16 %v168
    %v2737 = vunpack.c.h.b16 %v168
    %v2738 = vunpack.c.l.b16 %v169
    %v2739 = vunpack.c.h.b16 %v169
    %v2740 = vunpack.c.l.b16 %v170
    %v2741 = vunpack.c.h.b16 %v170
    %v2742 = vunpack.c.l.b16 %v171
    %v2743 = vunpack.c.h.b16 %v171
    %v2744 = vunpack.c.l.b16 %v172
    %v2745 = vunpack.c.h.b16 %v172
    %v2746 = vunpack.c.l.b16 %v173
    %v2747 = vunpack.c.h.b16 %v173
    %v2748 = vunpack.c.l.b16 %v174
    %v2749 = vunpack.c.h.b16 %v174
    %v2750 = vunpack.c.l.b16 %v175
    %v2751 = vunpack.c.h.b16 %v175
    %v2752 = vunpack.c.l.b16 %v176
    %v2753 = vunpack.c.h.b16 %v176
    %v2754 = vunpack.c.l.b16 %v177
    %v2755 = vunpack.c.h.b16 %v177
    %v2756 = vunpack.c.l.b16 %v178
    %v2757 = vunpack.c.h.b16 %v178
    %v2758 = vunpack.c.l.b16 %v179
    %v2759 = vunpack.c.h.b16 %v179
    %v2760 = vunpack.c.l.b16 %v180
    %v2761 = vunpack.c.h.b16 %v180
    %v2762 = vunpack.c.l.b16 %v181
    %v2763 = vunpack.c.h.b16 %v181
    %v2764 = vunpack.c.l.b16 %v182
    %v2765 = vunpack.c.h.b16 %v182
    %v2766 = vunpack.c.l.b16 %v183
    %v2767 = vunpack.c.h.b16 %v183
    %v2768 = vunpack.c.l.b16 %v184
    %v2769 = vunpack.c.h.b16 %v184
    %v2770 = vunpack.c.l.b16 %v185
    %v2771 = vunpack.c.h.b16 %v185
    %v2772 = vunpack.c.l.b16 %v186
    %v2773 = vunpack.c.h.b16 %v186
    %v2774 = vunpack.c.l.b16 %v187
    %v2775 = vunpack.c.h.b16 %v187
    %v2776 = vunpack.c.l.b16 %v188
    %v2777 = vunpack.c.h.b16 %v188
    %v2778 = vunpack.c.l.b16 %v189
    %v2779 = vunpack.c.h.b16 %v189
    %v2780 = vunpack.c.l.b16 %v190
    %v2781 = vunpack.c.h.b16 %v190
    %v2782 = vunpack.c.l.b16 %v191
    %v2783 = vunpack.c.h.b16 %v191
    %v2784 = vunpack.c.l.b16 %v192
    %v2785 = vunpack.c.h.b16 %v192
    %v2786 = vunpack.c.l.b16 %v193
    %v2787 = vunpack.c.h.b16 %v193
    %v2788 = vunpack.c.l.b16 %v194
    %v2789 = vunpack.c.h.b16 %v194
    %v2790 = vunpack.c.l.b16 %v195
    %v2791 = vunpack.c.h.b16 %v195
    %v2792 = vunpack.c.l.b16 %v196
    %v2793 = vunpack.c.h.b16 %v196
    %v2794 = vunpack.c.l.b16 %v197
    %v2795 = vunpack.c.h.b16 %v197
    %v2796 = vunpack.c.l.b16 %v198
    %v2797 = vunpack.c.h.b16 %v198
    %v2798 = vunpack.c.l.b16 %v199
    %v2799 = vunpack.c.h.b16 %v199
    %v2800 = vunpack.c.l.b16 %v200
    %v2801 = vunpack.c.h.b16 %v200
    %v2802 = vunpack.c.l.b16 %v201
    %v2803 = vunpack.c.h.b16 %v201
    %v2804 = vunpack.c.l.b16 %v202
    %v2805 = vunpack.c.h.b16 %v202
    %v2806 = vunpack.c.l.b16 %v203
    %v2807 = vunpack.c.h.b16 %v203
    %v2808 = vunpack.c.l.b16 %v204
    %v2809 = vunpack.c.h.b16 %v204
    %v2810 = vunpack.c.l.b16 %v205
    %v2811 = vunpack.c.h.b16 %v205
    %v2812 = vunpack.c.l.b16 %v206
    %v2813 = vunpack.c.h.b16 %v206
    %v2814 = vunpack.c.l.b16 %v207
    %v2815 = vunpack.c.h.b16 %v207
    %v2816 = vunpack.c.l.b16 %v208
    %v2817 = vunpack.c.h.b16 %v208
    %v2818 = vunpack.c.l.b16 %v209
    %v2819 = vunpack.c.h.b16 %v209
    %v2820 = vunpack.c.l.b16 %v210
    %v2821 = vunpack.c.h.b16 %v210
    %v2822 = vunpack.c.l.b16 %v211
    %v2823 = vunpack.c.h.b16 %v211
    %v2824 = vunpack.c.l.b16 %v212
    %v2825 = vunpack.c.h.b16 %v212
    %v2826 = vunpack.c.l.b16 %v213
    %v2827 = vunpack.c.h.b16 %v213
    %v2828 = vunpack.c.l.b16 %v214
    %v2829 = vunpack.c.h.b16 %v214
    %v2830 = vunpack.c.l.b16 %v215
    %v2831 = vunpack.c.h.b16 %v215
    %v2832 = vunpack.c.l.b16 %v216
    %v2833 = vunpack.c.h.b16 %v216
    %v2834 = vunpack.c.l.b16 %v217
    %v2835 = vunpack.c.h.b16 %v217
    %v2836 = vunpack.c.l.b16 %v218
    %v2837 = vunpack.c.h.b16 %v218
    %v2838 = vunpack.c.l.b16 %v219
    %v2839 = vunpack.c.h.b16 %v219
    %v2840 = vunpack.c.l.b16 %v220
    %v2841 = vunpack.c.h.b16 %v220
    %v2842 = vunpack.c.l.b16 %v221
    %v2843 = vunpack.c.h.b16 %v221
    %v2844 = vunpack.c.l.b16 %v222
    %v2845 = vunpack.c.h.b16 %v222
    %v2846 = vunpack.c.l.b16 %v223
    %v2847 = vunpack.c.h.b16 %v223
    %v2848 = vunpack.c.l.b16 %v224
    %v2849 = vunpack.c.h.b16 %v224
    %v2850 = vunpack.c.l.b16 %v225
    %v2851 = vunpack.c.h.b16 %v225
    %v2852 = vunpack.c.l.b16 %v226
    %v2853 = vunpack.c.h.b16 %v226
    %v2854 = vunpack.c.l.b16 %v227
    %v2855 = vunpack.c.h.b16 %v227
    %v2856 = vunpack.c.l.b16 %v228
    %v2857 = vunpack.c.h.b16 %v228
    %v2858 = vunpack.c.l.b16 %v229
    %v2859 = vunpack.c.h.b16 %v229
    %v2860 = vunpack.c.l.b16 %v230
    %v2861 = vunpack.c.h.b16 %v230
    %v2862 = vunpack.c.l.b16 %v231
    %v2863 = vunpack.c.h.b16 %v231
    %v2864 = vunpack.c.l.b16 %v232
    %v2865 = vunpack.c.h.b16 %v232
    %v2866 = vunpack.c.l.b16 %v233
    %v2867 = vunpack.c.h.b16 %v233
    %v2868 = vunpack.c.l.b16 %v234
    %v2869 = vunpack.c.h.b16 %v234
    %v2870 = vunpack.c.l.b16 %v235
    %v2871 = vunpack.c.h.b16 %v235
    %v2872 = vunpack.c.l.b16 %v236
    %v2873 = vunpack.c.h.b16 %v236
    %v2874 = vunpack.c.l.b16 %v237
    %v2875 = vunpack.c.h.b16 %v237
    %v2876 = vunpack.c.l.b16 %v238
    %v2877 = vunpack.c.h.b16 %v238
    %v2878 = vunpack.c.l.b16 %v239
    %v2879 = vunpack.c.h.b16 %v239
    %v2880 = vunpack.c.l.b16 %v240
    %v2881 = vunpack.c.h.b16 %v240
    %v2882 = vunpack.c.l.b16 %v241
    %v2883 = vunpack.c.h.b16 %v241
    %v2884 = vunpack.c.l.b16 %v242
    %v2885 = vunpack.c.h.b16 %v242
    %v2886 = vunpack.c.l.b16 %v243
    %v2887 = vunpack.c.h.b16 %v243
    %v2888 = vunpack.c.l.b16 %v244
    %v2889 = vunpack.c.h.b16 %v244
    %v2890 = vunpack.c.l.b16 %v245
    %v2891 = vunpack.c.h.b16 %v245
    %v2892 = vunpack.c.l.b16 %v246
    %v2893 = vunpack.c.h.b16 %v246
    %v2894 = vunpack.c.l.b16 %v247
    %v2895 = vunpack.c.h.b16 %v247
    %v2896 = vunpack.c.l.b16 %v248
    %v2897 = vunpack.c.h.b16 %v248
    %v2898 = vunpack.c.l.b16 %v249
    %v2899 = vunpack.c.h.b16 %v249
    %v2900 = vunpack.c.l.b16 %v250
    %v2901 = vunpack.c.h.b16 %v250
    %v2902 = vunpack.c.l.b16 %v251
    %v2903 = vunpack.c.h.b16 %v251
    %v2904 = vunpack.c.l.b16 %v252
    %v2905 = vunpack.c.h.b16 %v252
    %v2906 = vunpack.c.l.b16 %v253
    %v2907 = vunpack.c.h.b16 %v253
    %v2908 = vunpack.c.l.b16 %v254
    %v2909 = vunpack.c.h.b16 %v254
    %v2910 = vunpack.c.l.b16 %v255
    %v2911 = vunpack.c.h.b16 %v255
    %v2912 = vunpack.c.l.b16 %v256
    %v2913 = vunpack.c.h.b16 %v256
    %v2914 = vunpack.c.l.b16 %v257
    %v2915 = vunpack.c.h.b16 %v257
    %v2916 = vunpack.c.l.b16 %v258
    %v2917 = vunpack.c.h.b16 %v258
    %v2918 = vunpack.c.l.b16 %v259
    %v2919 = vunpack.c.h.b16 %v259
    %v2920 = vunpack.c.l.b16 %v260
    %v2921 = vunpack.c.h.b16 %v260
    %v2922 = vunpack.c.l.b16 %v261
    %v2923 = vunpack.c.h.b16 %v261
    %v2924 = vunpack.c.l.b16 %v262
    %v2925 = vunpack.c.h.b16 %v262
    %v2926 = vunpack.c.l.b16 %v263
    %v2927 = vunpack.c.h.b16 %v263
    %v2928 = vunpack.c.l.b16 %v264
    %v2929 = vunpack.c.h.b16 %v264
    %v2930 = vunpack.c.l.b16 %v265
    %v2931 = vunpack.c.h.b16 %v265
    %v2932 = vunpack.c.l.b16 %v266
    %v2933 = vunpack.c.h.b16 %v266
    %v2934 = vunpack.c.l.b16 %v267
    %v2935 = vunpack.c.h.b16 %v267
    %v2936 = vunpack.c.l.b16 %v268
    %v2937 = vunpack.c.h.b16 %v268
    %v2938 = vunpack.c.l.b16 %v269
    %v2939 = vunpack.c.h.b16 %v269
    %v2940 = vunpack.c.l.b16 %v270
    %v2941 = vunpack.c.h.b16 %v270
    %v2942 = vunpack.c.l.b16 %v271
    %v2943 = vunpack.c.h.b16 %v271
    %v2944 = vunpack.c.l.b16 %v272
    %v2945 = vunpack.c.h.b16 %v272
    %v2946 = vunpack.c.l.b16 %v273
    %v2947 = vunpack.c.h.b16 %v273
    %v2948 = vunpack.c.l.b16 %v274
    %v2949 = vunpack.c.h.b16 %v274
    %v2950 = vunpack.c.l.b16 %v275
    %v2951 = vunpack.c.h.b16 %v275
    %v2952 = vunpack.c.l.b16 %v276
    %v2953 = vunpack.c.h.b16 %v276
    %v2954 = vunpack.c.l.b16 %v277
    %v2955 = vunpack.c.h.b16 %v277
    %v2956 = vunpack.c.l.b16 %v278
    %v2957 = vunpack.c.h.b16 %v278
    %v2958 = vunpack.c.l.b16 %v279
    %v2959 = vunpack.c.h.b16 %v279
    %v2960 = vunpack.c.l.b16 %v280
    %v2961 = vunpack.c.h.b16 %v280
    %v2962 = vunpack.c.l.b16 %v281
    %v2963 = vunpack.c.h.b16 %v281
    %v2964 = vunpack.c.l.b16 %v282
    %v2965 = vunpack.c.h.b16 %v282
    %v2966 = vunpack.c.l.b16 %v283
    %v2967 = vunpack.c.h.b16 %v283
    %v2968 = vunpack.c.l.b16 %v284
    %v2969 = vunpack.c.h.b16 %v284
    %v2970 = vunpack.c.l.b16 %v285
    %v2971 = vunpack.c.h.b16 %v285
    %v2972 = vunpack.c.l.b16 %v286
    %v2973 = vunpack.c.h.b16 %v286
    %v2974 = vunpack.c.l.b16 %v287
    %v2975 = vunpack.c.h.b16 %v287
    %v2976 = vunpack.c.l.b16 %v288
    %v2977 = vunpack.c.h.b16 %v288
    %v2978 = vunpack.c.l.b16 %v289
    %v2979 = vunpack.c.h.b16 %v289
    %v2980 = vunpack.c.l.b16 %v290
    %v2981 = vunpack.c.h.b16 %v290
    %v2982 = vunpack.c.l.b16 %v291
    %v2983 = vunpack.c.h.b16 %v291
    %v2984 = vunpack.c.l.b16 %v292
    %v2985 = vunpack.c.h.b16 %v292
    %v2986 = vunpack.c.l.b16 %v293
    %v2987 = vunpack.c.h.b16 %v293
    %v2988 = vunpack.c.l.b16 %v294
    %v2989 = vunpack.c.h.b16 %v294
    %v2990 = vunpack.c.l.b16 %v295
    %v2991 = vunpack.c.h.b16 %v295
    %v2992 = vunpack.c.l.b16 %v296
    %v2993 = vunpack.c.h.b16 %v296
    %v2994 = vunpack.c.l.b16 %v297
    %v2995 = vunpack.c.h.b16 %v297
    %v2996 = vunpack.c.l.b16 %v298
    %v2997 = vunpack.c.h.b16 %v298
    %v2998 = vunpack.c.l.b16 %v299
    %v2999 = vunpack.c.h.b16 %v299
    %v3000 = vunpack.c.l.b16 %v300
    %v3001 = vunpack.c.h.b16 %v300
    %v3002 = vunpack.c.l.b16 %v301
    %v3003 = vunpack.c.h.b16 %v301
    %v3004 = vunpack.c.l.b16 %v302
    %v3005 = vunpack.c.h.b16 %v302
    %v3006 = vunpack.c.l.b16 %v303
    %v3007 = vunpack.c.h.b16 %v303
    %v3008 = vunpack.c.l.b16 %v304
    %v3009 = vunpack.c.h.b16 %v304
    %v3010 = vunpack.c.l.b16 %v305
    %v3011 = vunpack.c.h.b16 %v305
    %v3012 = vunpack.c.l.b16 %v306
    %v3013 = vunpack.c.h.b16 %v306
    %v3014 = vunpack.c.l.b16 %v307
    %v3015 = vunpack.c.h.b16 %v307
    %v3016 = vunpack.c.l.b16 %v308
    %v3017 = vunpack.c.h.b16 %v308
    %v3018 = vunpack.c.l.b16 %v309
    %v3019 = vunpack.c.h.b16 %v309
    %v3020 = vunpack.c.l.b16 %v310
    %v3021 = vunpack.c.h.b16 %v310
    %v3022 = vunpack.c.l.b16 %v311
    %v3023 = vunpack.c.h.b16 %v311
    %v3024 = vunpack.c.l.b16 %v312
    %v3025 = vunpack.c.h.b16 %v312
    %v3026 = vunpack.c.l.b16 %v313
    %v3027 = vunpack.c.h.b16 %v313
    %v3028 = vunpack.c.l.b16 %v314
    %v3029 = vunpack.c.h.b16 %v314
    %v3030 = vunpack.c.l.b16 %v315
    %v3031 = vunpack.c.h.b16 %v315
    %v3032 = vunpack.c.l.b16 %v316
    %v3033 = vunpack.c.h.b16 %v316
    %v3034 = vunpack.c.l.b16 %v317
    %v3035 = vunpack.c.h.b16 %v317
    %v3036 = vunpack.c.l.b16 %v318
    %v3037 = vunpack.c.h.b16 %v318
    %v3038 = vunpack.c.l.b16 %v319
    %v3039 = vunpack.c.h.b16 %v319
    %v3040 = vunpack.c.l.b16 %v320
    %v3041 = vunpack.c.h.b16 %v320
    %v3042 = vunpack.c.l.b16 %v321
    %v3043 = vunpack.c.h.b16 %v321
    %v3044 = vunpack.c.l.b16 %v322
    %v3045 = vunpack.c.h.b16 %v322
    %v3046 = vunpack.c.l.b16 %v323
    %v3047 = vunpack.c.h.b16 %v323
    %v3048 = vunpack.c.l.b16 %v324
    %v3049 = vunpack.c.h.b16 %v324
    %v3050 = vunpack.c.l.b16 %v325
    %v3051 = vunpack.c.h.b16 %v325
    %v3052 = vunpack.c.l.b16 %v326
    %v3053 = vunpack.c.h.b16 %v326
    %v3054 = vunpack.c.l.b16 %v327
    %v3055 = vunpack.c.h.b16 %v327
    %v3056 = vunpack.c.l.b16 %v328
    %v3057 = vunpack.c.h.b16 %v328
    %v3058 = vunpack.c.l.b16 %v329
    %v3059 = vunpack.c.h.b16 %v329
    %v3060 = vunpack.c.l.b16 %v330
    %v3061 = vunpack.c.h.b16 %v330
    %v3062 = vunpack.c.l.b16 %v331
    %v3063 = vunpack.c.h.b16 %v331
    %v3064 = vunpack.c.l.b16 %v332
    %v3065 = vunpack.c.h.b16 %v332
    %v3066 = vunpack.c.l.b16 %v333
    %v3067 = vunpack.c.h.b16 %v333
    %v3068 = vunpack.c.l.b16 %v334
    %v3069 = vunpack.c.h.b16 %v334
    %v3070 = vunpack.c.l.b16 %v335
    %v3071 = vunpack.c.h.b16 %v335
    %v3072 = vunpack.c.l.b16 %v336
    %v3073 = vunpack.c.h.b16 %v336
    %v3074 = vunpack.c.l.b16 %v337
    %v3075 = vunpack.c.h.b16 %v337
    %v3076 = vunpack.c.l.b16 %v338
    %v3077 = vunpack.c.h.b16 %v338
    %v3078 = vunpack.c.l.b16 %v339
    %v3079 = vunpack.c.h.b16 %v339
    %v3080 = vunpack.c.l.b16 %v340
    %v3081 = vunpack.c.h.b16 %v340
    %v3082 = vunpack.c.l.b16 %v341
    %v3083 = vunpack.c.h.b16 %v341
    %v3084 = vunpack.c.l.b16 %v342
    %v3085 = vunpack.c.h.b16 %v342
    %v3086 = vunpack.c.l.b16 %v343
    %v3087 = vunpack.c.h.b16 %v343
    %v3088 = vunpack.c.l.b16 %v344
    %v3089 = vunpack.c.h.b16 %v344
    %v3090 = vunpack.c.l.b16 %v345
    %v3091 = vunpack.c.h.b16 %v345
    %v3092 = vunpack.c.l.b16 %v346
    %v3093 = vunpack.c.h.b16 %v346
    %v3094 = vunpack.c.l.b16 %v347
    %v3095 = vunpack.c.h.b16 %v347
    %v3096 = vunpack.c.l.b16 %v348
    %v3097 = vunpack.c.h.b16 %v348
    %v3098 = vunpack.c.l.b16 %v349
    %v3099 = vunpack.c.h.b16 %v349
    %v3100 = vunpack.c.l.b16 %v350
    %v3101 = vunpack.c.h.b16 %v350
    %v3102 = vunpack.c.l.b16 %v351
    %v3103 = vunpack.c.h.b16 %v351
    %v3104 = vunpack.c.l.b16 %v352
    %v3105 = vunpack.c.h.b16 %v352
    %v3106 = vunpack.c.l.b16 %v353
    %v3107 = vunpack.c.h.b16 %v353
    %v3108 = vunpack.c.l.b16 %v354
    %v3109 = vunpack.c.h.b16 %v354
    %v3110 = vunpack.c.l.b16 %v355
    %v3111 = vunpack.c.h.b16 %v355
    %v3112 = vunpack.c.l.b16 %v356
    %v3113 = vunpack.c.h.b16 %v356
    %v3114 = vunpack.c.l.b16 %v357
    %v3115 = vunpack.c.h.b16 %v357
    %v3116 = vunpack.c.l.b16 %v358
    %v3117 = vunpack.c.h.b16 %v358
    %v3118 = vunpack.c.l.b16 %v359
    %v3119 = vunpack.c.h.b16 %v359
    %v3120 = vunpack.c.l.b16 %v360
    %v3121 = vunpack.c.h.b16 %v360
    %v3122 = vunpack.c.l.b16 %v361
    %v3123 = vunpack.c.h.b16 %v361
    %v3124 = vunpack.c.l.b16 %v362
    %v3125 = vunpack.c.h.b16 %v362
    %v3126 = vunpack.c.l.b16 %v363
    %v3127 = vunpack.c.h.b16 %v363
    %v3128 = vunpack.c.l.b16 %v364
    %v3129 = vunpack.c.h.b16 %v364
    %v3130 = vunpack.c.l.b16 %v365
    %v3131 = vunpack.c.h.b16 %v365
    %v3132 = vunpack.c.l.b16 %v366
    %v3133 = vunpack.c.h.b16 %v366
    %v3134 = vunpack.c.l.b16 %v367
    %v3135 = vunpack.c.h.b16 %v367
    %v3136 = vunpack.c.l.b16 %v368
    %v3137 = vunpack.c.h.b16 %v368
    %v3138 = vunpack.c.l.b16 %v369
    %v3139 = vunpack.c.h.b16 %v369
    %v3140 = vunpack.c.l.b16 %v370
    %v3141 = vunpack.c.h.b16 %v370
    %v3142 = vunpack.c.l.b16 %v371
    %v3143 = vunpack.c.h.b16 %v371
    %v3144 = vunpack.c.l.b16 %v372
    %v3145 = vunpack.c.h.b16 %v372
    %v3146 = vunpack.c.l.b16 %v373
    %v3147 = vunpack.c.h.b16 %v373
    %v3148 = vunpack.c.l.b16 %v374
    %v3149 = vunpack.c.h.b16 %v374
    %v3150 = vunpack.c.l.b16 %v375
    %v3151 = vunpack.c.h.b16 %v375
    %v3152 = vunpack.c.l.b16 %v376
    %v3153 = vunpack.c.h.b16 %v376
    %v3154 = vunpack.c.l.b16 %v377
    %v3155 = vunpack.c.h.b16 %v377
    %v3156 = vunpack.c.l.b16 %v378
    %v3157 = vunpack.c.h.b16 %v378
    %v3158 = vunpack.c.l.b16 %v379
    %v3159 = vunpack.c.h.b16 %v379
    %v3160 = vunpack.c.l.b16 %v380
    %v3161 = vunpack.c.h.b16 %v380
    %v3162 = vunpack.c.l.b16 %v381
    %v3163 = vunpack.c.h.b16 %v381
    %v3164 = vunpack.c.l.b16 %v382
    %v3165 = vunpack.c.h.b16 %v382
    %v3166 = vunpack.c.l.b16 %v383
    %v3167 = vunpack.c.h.b16 %v383
    %v3168 = vunpack.c.l.b16 %v384
    %v3169 = vunpack.c.h.b16 %v384
    %v3170 = vunpack.c.l.b16 %v385
    %v3171 = vunpack.c.h.b16 %v385
    %v3172 = vunpack.c.l.b16 %v386
    %v3173 = vunpack.c.h.b16 %v386
    %v3174 = vunpack.c.l.b16 %v387
    %v3175 = vunpack.c.h.b16 %v387
    %v3176 = vunpack.c.l.b16 %v388
    %v3177 = vunpack.c.h.b16 %v388
    %v3178 = vunpack.c.l.b16 %v389
    %v3179 = vunpack.c.h.b16 %v389
    %v3180 = vunpack.c.l.b16 %v390
    %v3181 = vunpack.c.h.b16 %v390
    %v3182 = vunpack.c.l.b16 %v391
    %v3183 = vunpack.c.h.b16 %v391
    %v3184 = vunpack.c.l.b16 %v392
    %v3185 = vunpack.c.h.b16 %v392
    %v3186 = vunpack.c.l.b16 %v393
    %v3187 = vunpack.c.h.b16 %v393
    %v3188 = vunpack.c.l.b16 %v394
    %v3189 = vunpack.c.h.b16 %v394
    %v3190 = vunpack.c.l.b16 %v395
    %v3191 = vunpack.c.h.b16 %v395
    %v3192 = vunpack.c.l.b16 %v396
    %v3193 = vunpack.c.h.b16 %v396
    %v3194 = vunpack.c.l.b16 %v397
    %v3195 = vunpack.c.h.b16 %v397
    %v3196 = vunpack.c.l.b16 %v398
    %v3197 = vunpack.c.h.b16 %v398
    %v3198 = vunpack.c.l.b16 %v399
    %v3199 = vunpack.c.h.b16 %v399
    %v3200 = vunpack.c.l.b16 %v400
    %v3201 = vunpack.c.h.b16 %v400
    %v3202 = vunpack.c.l.b16 %v401
    %v3203 = vunpack.c.h.b16 %v401
    %v3204 = vunpack.c.l.b16 %v402
    %v3205 = vunpack.c.h.b16 %v402
    %v3206 = vunpack.c.l.b16 %v403
    %v3207 = vunpack.c.h.b16 %v403
    %v3208 = vunpack.c.l.b16 %v404
    %v3209 = vunpack.c.h.b16 %v404
    %v3210 = vunpack.c.l.b16 %v405
    %v3211 = vunpack.c.h.b16 %v405
    %v3212 = vunpack.c.l.b16 %v406
    %v3213 = vunpack.c.h.b16 %v406
    %v3214 = vunpack.c.l.b16 %v407
    %v3215 = vunpack.c.h.b16 %v407
    %v3216 = vpack.c.b16 %v2712, %v2704
    %v3217 = vpack.c.b16 %v2713, %v2705
    %v3218 = vpack.c.b16 %v2714, %v2706
    %v3219 = vpack.c.b16 %v2715, %v2707
    %v3220 = vpack.c.b16 %v2716, %v2708
    %v3221 = vpack.c.b16 %v2717, %v2709
    %v3222 = vpack.c.b16 %v2718, %v2710
    %v3223 = vpack.c.b16 %v2719, %v2711
    %v3224 = vpack.c.b16 %v2728, %v2720
    %v3225 = vpack.c.b16 %v2729, %v2721
    %v3226 = vpack.c.b16 %v2730, %v2722
    %v3227 = vpack.c.b16 %v2731, %v2723
    %v3228 = vpack.c.b16 %v2732, %v2724
    %v3229 = vpack.c.b16 %v2733, %v2725
    %v3230 = vpack.c.b16 %v2734, %v2726
    %v3231 = vpack.c.b16 %v2735, %v2727
    %v3232 = vpack.c.b16 %v2744, %v2736
    %v3233 = vpack.c.b16 %v2745, %v2737
    %v3234 = vpack.c.b16 %v2746, %v2738
    %v3235 = vpack.c.b16 %v2747, %v2739
    %v3236 = vpack.c.b16 %v2748, %v2740
    %v3237 = vpack.c.b16 %v2749, %v2741
    %v3238 = vpack.c.b16 %v2750, %v2742
    %v3239 = vpack.c.b16 %v2751, %v2743
    %v3240 = vpack.c.b16 %v2760, %v2752
    %v3241 = vpack.c.b16 %v2761, %v2753
    %v3242 = vpack.c.b16 %v2762, %v2754
    %v3243 = vpack.c.b16 %v2763, %v2755
    %v3244 = vpack.c.b16 %v2764, %v2756
    %v3245 = vpack.c.b16 %v2765, %v2757
    %v3246 = vpack.c.b16 %v2766, %v2758
    %v3247 = vpack.c.b16 %v2767, %v2759
    %v3248 = vpack.c.b16 %v2776, %v2768
    %v3249 = vpack.c.b16 %v2777, %v2769
    %v3250 = vpack.c.b16 %v2778, %v2770
    %v3251 = vpack.c.b16 %v2779, %v2771
    %v3252 = vpack.c.b16 %v2780, %v2772
    %v3253 = vpack.c.b16 %v2781, %v2773
    %v3254 = vpack.c.b16 %v2782, %v2774
    %v3255 = vpack.c.b16 %v2783, %v2775
    %v3256 = vpack.c.b16 %v2792, %v2784
    %v3257 = vpack.c.b16 %v2793, %v2785
    %v3258 = vpack.c.b16 %v2794, %v2786
    %v3259 = vpack.c.b16 %v2795, %v2787
    %v3260 = vpack.c.b16 %v2796, %v2788
    %v3261 = vpack.c.b16 %v2797, %v2789
    %v3262 = vpack.c.b16 %v2798, %v2790
    %v3263 = vpack.c.b16 %v2799, %v2791
    %v3264 = vpack.c.b16 %v2808, %v2800
    %v3265 = vpack.c.b16 %v2809, %v2801
    %v3266 = vpack.c.b16 %v2810, %v2802
    %v3267 = vpack.c.b16 %v2811, %v2803
    %v3268 = vpack.c.b16 %v2812, %v2804
    %v3269 = vpack.c.b16 %v2813, %v2805
    %v3270 = vpack.c.b16 %v2814, %v2806
    %v3271 = vpack.c.b16 %v2815, %v2807
    %v3272 = vpack.c.b16 %v2824, %v2816
    %v3273 = vpack.c.b16 %v2825, %v2817
    %v3274 = vpack.c.b16 %v2826, %v2818
    %v3275 = vpack.c.b16 %v2827, %v2819
    %v3276 = vpack.c.b16 %v2828, %v2820
    %v3277 = vpack.c.b16 %v2829, %v2821
    %v3278 = vpack.c.b16 %v2830, %v2822
    %v3279 = vpack.c.b16 %v2831, %v2823
    %v3280 = vpack.c.b16 %v2840, %v2832
    %v3281 = vpack.c.b16 %v2841, %v2833
    %v3282 = vpack.c.b16 %v2842, %v2834
    %v3283 = vpack.c.b16 %v2843, %v2835
    %v3284 = vpack.c.b16 %v2844, %v2836
    %v3285 = vpack.c.b16 %v2845, %v2837
    %v3286 = vpack.c.b16 %v2846, %v2838
    %v3287 = vpack.c.b16 %v2847, %v2839
    %v3288 = vpack.c.b16 %v2856, %v2848
    %v3289 = vpack.c.b16 %v2857, %v2849
    %v3290 = vpack.c.b16 %v2858, %v2850
    %v3291 = vpack.c.b16 %v2859, %v2851
    %v3292 = vpack.c.b16 %v2860, %v2852
    %v3293 = vpack.c.b16 %v2861, %v2853
    %v3294 = vpack.c.b16 %v2862, %v2854
    %v3295 = vpack.c.b16 %v2863, %v2855
    %v3296 = vpack.c.b16 %v2872, %v2864
    %v3297 = vpack.c.b16 %v2873, %v2865
    %v3298 = vpack.c.b16 %v2874, %v2866
    %v3299 = vpack.c.b16 %v2875, %v2867
    %v3300 = vpack.c.b16 %v2876, %v2868
    %v3301 = vpack.c.b16 %v2877, %v2869
    %v3302 = vpack.c.b16 %v2878, %v2870
    %v3303 = vpack.c.b16 %v2879, %v2871
    %v3304 = vpack.c.b16 %v2888, %v2880
    %v3305 = vpack.c.b16 %v2889, %v2881
    %v3306 = vpack.c.b16 %v2890, %v2882
    %v3307 = vpack.c.b16 %v2891, %v2883
    %v3308 = vpack.c.b16 %v2892, %v2884
    %v3309 = vpack.c.b16 %v2893, %v2885
    %v3310 = vpack.c.b16 %v2894, %v2886
    %v3311 = vpack.c.b16 %v2895, %v2887
    %v3312 = vpack.c.b16 %v2904, %v2896
    %v3313 = vpack.c.b16 %v2905, %v2897
    %v3314 = vpack.c.b16 %v2906, %v2898
    %v3315 = vpack.c.b16 %v2907, %v2899
    %v3316 = vpack.c.b16 %v2908, %v2900
    %v3317 = vpack.c.b16 %v2909, %v2901
    %v3318 = vpack.c.b16 %v2910, %v2902
    %v3319 = vpack.c.b16 %v2911, %v2903
    %v3320 = vpack.c.b16 %v2920, %v2912
    %v3321 = vpack.c.b16 %v2921, %v2913
    %v3322 = vpack.c.b16 %v2922, %v2914
    %v3323 = vpack.c.b16 %v2923, %v2915
    %v3324 = vpack.c.b16 %v2924, %v2916
    %v3325 = vpack.c.b16 %v2925, %v2917
    %v3326 = vpack.c.b16 %v2926, %v2918
    %v3327 = vpack.c.b16 %v2927, %v2919
    %v3328 = vpack.c.b16 %v2936, %v2928
    %v3329 = vpack.c.b16 %v2937, %v2929
    %v3330 = vpack.c.b16 %v2938, %v2930
    %v3331 = vpack.c.b16 %v2939, %v2931
    %v3332 = vpack.c.b16 %v2940, %v2932
    %v3333 = vpack.c.b16 %v2941, %v2933
    %v3334 = vpack.c.b16 %v2942, %v2934
    %v3335 = vpack.c.b16 %v2943, %v2935
    %v3336 = vpack.c.b16 %v2952, %v2944
    %v3337 = vpack.c.b16 %v2953, %v2945
    %v3338 = vpack.c.b16 %v2954, %v2946
    %v3339 = vpack.c.b16 %v2955, %v2947
    %v3340 = vpack.c.b16 %v2956, %v2948
    %v3341 = vpack.c.b16 %v2957, %v2949
    %v3342 = vpack.c.b16 %v2958, %v2950
    %v3343 = vpack.c.b16 %v2959, %v2951
    %v3344 = vpack.c.b16 %v2968, %v2960
    %v3345 = vpack.c.b16 %v2969, %v2961
    %v3346 = vpack.c.b16 %v2970, %v2962
    %v3347 = vpack.c.b16 %v2971, %v2963
    %v3348 = vpack.c.b16 %v2972, %v2964
    %v3349 = vpack.c.b16 %v2973, %v2965
    %v3350 = vpack.c.b16 %v2974, %v2966
    %v3351 = vpack.c.b16 %v2975, %v2967
    %v3352 = vpack.c.b16 %v2984, %v2976
    %v3353 = vpack.c.b16 %v2985, %v2977
    %v3354 = vpack.c.b16 %v2986, %v2978
    %v3355 = vpack.c.b16 %v2987, %v2979
    %v3356 = vpack.c.b16 %v2988, %v2980
    %v3357 = vpack.c.b16 %v2989, %v2981
    %v3358 = vpack.c.b16 %v2990, %v2982
    %v3359 = vpack.c.b16 %v2991, %v2983
    %v3360 = vpack.c.b16 %v3000, %v2992
    %v3361 = vpack.c.b16 %v3001, %v2993
    %v3362 = vpack.c.b16 %v3002, %v2994
    %v3363 = vpack.c.b16 %v3003, %v2995
    %v3364 = vpack.c.b16 %v3004, %v2996
    %v3365 = vpack.c.b16 %v3005, %v2997
    %v3366 = vpack.c.b16 %v3006, %v2998
    %v3367 = vpack.c.b16 %v3007, %v2999
    %v3368 = vpack.c.b16 %v3016, %v3008
    %v3369 = vpack.c.b16 %v3017, %v3009
    %v3370 = vpack.c.b16 %v3018, %v3010
    %v3371 = vpack.c.b16 %v3019, %v3011
    %v3372 = vpack.c.b16 %v3020, %v3012
    %v3373 = vpack.c.b16 %v3021, %v3013
    %v3374 = vpack.c.b16 %v3022, %v3014
    %v3375 = vpack.c.b16 %v3023, %v3015
    %v3376 = vpack.c.b16 %v3032, %v3024
    %v3377 = vpack.c.b16 %v3033, %v3025
    %v3378 = vpack.c.b16 %v3034, %v3026
    %v3379 = vpack.c.b16 %v3035, %v3027
    %v3380 = vpack.c.b16 %v3036, %v3028
    %v3381 = vpack.c.b16 %v3037, %v3029
    %v3382 = vpack.c.b16 %v3038, %v3030
    %v3383 = vpack.c.b16 %v3039, %v3031
    %v3384 = vpack.c.b16 %v3048, %v3040
    %v3385 = vpack.c.b16 %v3049, %v3041
    %v3386 = vpack.c.b16 %v3050, %v3042
    %v3387 = vpack.c.b16 %v3051, %v3043
    %v3388 = vpack.c.b16 %v3052, %v3044
    %v3389 = vpack.c.b16 %v3053, %v3045
    %v3390 = vpack.c.b16 %v3054, %v3046
    %v3391 = vpack.c.b16 %v3055, %v3047
    %v3392 = vpack.c.b16 %v3064, %v3056
    %v3393 = vpack.c.b16 %v3065, %v3057
    %v3394 = vpack.c.b16 %v3066, %v3058
    %v3395 = vpack.c.b16 %v3067, %v3059
    %v3396 = vpack.c.b16 %v3068, %v3060
    %v3397 = vpack.c.b16 %v3069, %v3061
    %v3398 = vpack.c.b16 %v3070, %v3062
    %v3399 = vpack.c.b16 %v3071, %v3063
    %v3400 = vpack.c.b16 %v3080, %v3072
    %v3401 = vpack.c.b16 %v3081, %v3073
    %v3402 = vpack.c.b16 %v3082, %v3074
    %v3403 = vpack.c.b16 %v3083, %v3075
    %v3404 = vpack.c.b16 %v3084, %v3076
    %v3405 = vpack.c.b16 %v3085, %v3077
    %v3406 = vpack.c.b16 %v3086, %v3078
    %v3407 = vpack.c.b16 %v3087, %v3079
    %v3408 = vpack.c.b16 %v3096, %v3088
    %v3409 = vpack.c.b16 %v3097, %v3089
    %v3410 = vpack.c.b16 %v3098, %v3090
    %v3411 = vpack.c.b16 %v3099, %v3091
    %v3412 = vpack.c.b16 %v3100, %v3092
    %v3413 = vpack.c.b16 %v3101, %v3093
    %v3414 = vpack.c.b16 %v3102, %v3094
    %v3415 = vpack.c.b16 %v3103, %v3095
    %v3416 = vpack.c.b16 %v3112, %v3104
    %v3417 = vpack.c.b16 %v3113, %v3105
    %v3418 = vpack.c.b16 %v3114, %v3106
    %v3419 = vpack.c.b16 %v3115, %v3107
    %v3420 = vpack.c.b16 %v3116, %v3108
    %v3421 = vpack.c.b16 %v3117, %v3109
    %v3422 = vpack.c.b16 %v3118, %v3110
    %v3423 = vpack.c.b16 %v3119, %v3111
    %v3424 = vpack.c.b16 %v3128, %v3120
    %v3425 = vpack.c.b16 %v3129, %v3121
    %v3426 = vpack.c.b16 %v3130, %v3122
    %v3427 = vpack.c.b16 %v3131, %v3123
    %v3428 = vpack.c.b16 %v3132, %v3124
    %v3429 = vpack.c.b16 %v3133, %v3125
    %v3430 = vpack.c.b16 %v3134, %v3126
    %v3431 = vpack.c.b16 %v3135, %v3127
    %v3432 = vpack.c.b16 %v3144, %v3136
    %v3433 = vpack.c.b16 %v3145, %v3137
    %v3434 = vpack.c.b16 %v3146, %v3138
    %v3435 = vpack.c.b16 %v3147, %v3139
    %v3436 = vpack.c.b16 %v3148, %v3140
    %v3437 = vpack.c.b16 %v3149, %v3141
    %v3438 = vpack.c.b16 %v3150, %v3142
    %v3439 = vpack.c.b16 %v3151, %v3143
    %v3440 = vpack.c.b16 %v3160, %v3152
    %v3441 = vpack.c.b16 %v3161, %v3153
    %v3442 = vpack.c.b16 %v3162, %v3154
    %v3443 = vpack.c.b16 %v3163, %v3155
    %v3444 = vpack.c.b16 %v3164, %v3156
    %v3445 = vpack.c.b16 %v3165, %v3157
    %v3446 = vpack.c.b16 %v3166, %v3158
    %v3447 = vpack.c.b16 %v3167, %v3159
    %v3448 = vpack.c.b16 %v3176, %v3168
    %v3449 = vpack.c.b16 %v3177, %v3169
    %v3450 = vpack.c.b16 %v3178, %v3170
    %v3451 = vpack.c.b16 %v3179, %v3171
    %v3452 = vpack.c.b16 %v3180, %v3172
    %v3453 = vpack.c.b16 %v3181, %v3173
    %v3454 = vpack.c.b16 %v3182, %v3174
    %v3455 = vpack.c.b16 %v3183, %v3175
    %v3456 = vpack.c.b16 %v3192, %v3184
    %v3457 = vpack.c.b16 %v3193, %v3185
    %v3458 = vpack.c.b16 %v3194, %v3186
    %v3459 = vpack.c.b16 %v3195, %v3187
    %v3460 = vpack.c.b16 %v3196, %v3188
    %v3461 = vpack.c.b16 %v3197, %v3189
    %v3462 = vpack.c.b16 %v3198, %v3190
    %v3463 = vpack.c.b16 %v3199, %v3191
    %v3464 = vpack.c.b16 %v3208, %v3200
    %v3465 = vpack.c.b16 %v3209, %v3201
    %v3466 = vpack.c.b16 %v3210, %v3202
    %v3467 = vpack.c.b16 %v3211, %v3203
    %v3468 = vpack.c.b16 %v3212, %v3204
    %v3469 = vpack.c.b16 %v3213, %v3205
    %v3470 = vpack.c.b16 %v3214, %v3206
    %v3471 = vpack.c.b16 %v3215, %v3207
    %3728 = vmatprep.subr.bf16.mxu0 %v3217
    %3729 = vmatpush1.bf16.msra.mxu0 %v3216
    %3730 = vmatprep.subr.bf16.mxu0 %v3225
    %3731 = vmatpush1.bf16.msra.mxu0 %v3224
    %3732 = vmatprep.subr.bf16.mxu0 %v3233
    %3733 = vmatpush1.bf16.msra.mxu0 %v3232
    %3734 = vmatprep.subr.bf16.mxu0 %v3241
    %3735 = vmatpush1.bf16.msra.mxu0 %v3240
    %3736 = vmatprep.subr.bf16.mxu0 %v3249
    %3737 = vmatpush1.bf16.msra.mxu0 %v3248
    %3738 = vmatprep.subr.bf16.mxu0 %v3257
    %3739 = vmatpush1.bf16.msra.mxu0 %v3256
    %3740 = vmatprep.subr.bf16.mxu0 %v3265
    %3741 = vmatpush1.bf16.msra.mxu0 %v3264
    %3742 = vmatprep.subr.bf16.mxu0 %v3273
    %3743 = vmatpush1.bf16.msra.mxu0 %v3272
    %3744 = vmatprep.subr.bf16.mxu0 %v3281
    %3745 = vmatpush1.bf16.msra.mxu0 %v3280
    %3746 = vmatprep.subr.bf16.mxu0 %v3289
    %3747 = vmatpush1.bf16.msra.mxu0 %v3288
    %3748 = vmatprep.subr.bf16.mxu0 %v3297
    %3749 = vmatpush1.bf16.msra.mxu0 %v3296
    %3750 = vmatprep.subr.bf16.mxu0 %v3305
    %3751 = vmatpush1.bf16.msra.mxu0 %v3304
    %3752 = vmatprep.subr.bf16.mxu0 %v3313
    %3753 = vmatpush1.bf16.msra.mxu0 %v3312
    %3754 = vmatprep.subr.bf16.mxu0 %v3321
    %3755 = vmatpush1.bf16.msra.mxu0 %v3320
    %3756 = vmatprep.subr.bf16.mxu0 %v3329
    %3757 = vmatpush1.bf16.msra.mxu0 %v3328
    %3758 = vmatprep.subr.bf16.mxu0 %v3337
    %3759 = vmatpush1.bf16.msra.mxu0 %v3336
    %3760 = vmatprep.mubr.bf16.mxu0 %v2442
    %3761 = vmatmul.mubr.bf16.gmra.mrb[0].mxu0 %v2440
    %v3762 = vpop.f32.mrb[0].mxu0
    %v3763 = vadd.f32 %v2102, %v3762
    %v3764 = vpop.f32.mrb[0].mxu0
    %v3765 = vadd.f32 %v2104, %v3764
    %v3766 = vpop.f32.mrb[0].mxu0
    %v3767 = vadd.f32 %v2106, %v3766
    %v3768 = vpop.f32.mrb[0].mxu0
    %v3769 = vadd.f32 %v2108, %v3768
    %3770 = vdwg.mxu0
    %3771 = vmatprep.subr.bf16.mxu0 %v3345
    %3772 = vmatpush1.bf16.msra.mxu0 %v3344
    %3773 = vmatprep.subr.bf16.mxu0 %v3353
    %3774 = vmatpush1.bf16.msra.mxu0 %v3352
    %3775 = vmatprep.subr.bf16.mxu0 %v3361
    %3776 = vmatpush1.bf16.msra.mxu0 %v3360
    %3777 = vmatprep.subr.bf16.mxu0 %v3369
    %3778 = vmatpush1.bf16.msra.mxu0 %v3368
    %3779 = vmatprep.subr.bf16.mxu0 %v3377
    %3780 = vmatpush1.bf16.msra.mxu0 %v3376
    %3781 = vmatprep.subr.bf16.mxu0 %v3385
    %3782 = vmatpush1.bf16.msra.mxu0 %v3384
    %3783 = vmatprep.subr.bf16.mxu0 %v3393
    %3784 = vmatpush1.bf16.msra.mxu0 %v3392
    %3785 = vmatprep.subr.bf16.mxu0 %v3401
    %3786 = vmatpush1.bf16.msra.mxu0 %v3400
    %3787 = vmatprep.subr.bf16.mxu0 %v3409
    %3788 = vmatpush1.bf16.msra.mxu0 %v3408
    %3789 = vmatprep.subr.bf16.mxu0 %v3417
    %3790 = vmatpush1.bf16.msra.mxu0 %v3416
    %3791 = vmatprep.subr.bf16.mxu0 %v3425
    %3792 = vmatpush1.bf16.msra.mxu0 %v3424
    %3793 = vmatprep.subr.bf16.mxu0 %v3433
    %3794 = vmatpush1.bf16.msra.mxu0 %v3432
    %3795 = vmatprep.subr.bf16.mxu0 %v3441
    %3796 = vmatpush1.bf16.msra.mxu0 %v3440
    %3797 = vmatprep.subr.bf16.mxu0 %v3449
    %3798 = vmatpush1.bf16.msra.mxu0 %v3448
    %3799 = vmatprep.subr.bf16.mxu0 %v3457
    %3800 = vmatpush1.bf16.msra.mxu0 %v3456
    %3801 = vmatprep.subr.bf16.mxu0 %v3465
    %3802 = vmatpush1.bf16.msra.mxu0 %v3464
    %3803 = vmatprep.mubr.bf16.mxu0 %v2443
    %3804 = vmatmul.mubr.bf16.gmra.mrb[0].mxu0 %v2441
    %v3805 = vpop.f32.mrb[0].mxu0
    %v3806 = vadd.f32 %v3763, %v3805
    %v3807 = vpop.f32.mrb[0].mxu0
    %v3808 = vadd.f32 %v3765, %v3807
    %v3809 = vpop.f32.mrb[0].mxu0
    %v3810 = vadd.f32 %v3767, %v3809
    %v3811 = vpop.f32.mrb[0].mxu0
    %v3812 = vadd.f32 %v3769, %v3811
    %3813 = vdwg.mxu0
    %3814 = vmatprep.subr.bf16.mxu0 %v3219
    %3815 = vmatpush1.bf16.msra.mxu0 %v3218
    %3816 = vmatprep.subr.bf16.mxu0 %v3227
    %3817 = vmatpush1.bf16.msra.mxu0 %v3226
    %3818 = vmatprep.subr.bf16.mxu0 %v3235
    %3819 = vmatpush1.bf16.msra.mxu0 %v3234
    %3820 = vmatprep.subr.bf16.mxu0 %v3243
    %3821 = vmatpush1.bf16.msra.mxu0 %v3242
    %3822 = vmatprep.subr.bf16.mxu0 %v3251
    %3823 = vmatpush1.bf16.msra.mxu0 %v3250
    %3824 = vmatprep.subr.bf16.mxu0 %v3259
    %3825 = vmatpush1.bf16.msra.mxu0 %v3258
    %3826 = vmatprep.subr.bf16.mxu0 %v3267
    %3827 = vmatpush1.bf16.msra.mxu0 %v3266
    %3828 = vmatprep.subr.bf16.mxu0 %v3275
    %3829 = vmatpush1.bf16.msra.mxu0 %v3274
    %3830 = vmatprep.subr.bf16.mxu0 %v3283
    %3831 = vmatpush1.bf16.msra.mxu0 %v3282
    %3832 = vmatprep.subr.bf16.mxu0 %v3291
    %3833 = vmatpush1.bf16.msra.mxu0 %v3290
    %3834 = vmatprep.subr.bf16.mxu0 %v3299
    %3835 = vmatpush1.bf16.msra.mxu0 %v3298
    %3836 = vmatprep.subr.bf16.mxu0 %v3307
    %3837 = vmatpush1.bf16.msra.mxu0 %v3306
    %3838 = vmatprep.subr.bf16.mxu0 %v3315
    %3839 = vmatpush1.bf16.msra.mxu0 %v3314
    %3840 = vmatprep.subr.bf16.mxu0 %v3323
    %3841 = vmatpush1.bf16.msra.mxu0 %v3322
    %3842 = vmatprep.subr.bf16.mxu0 %v3331
    %3843 = vmatpush1.bf16.msra.mxu0 %v3330
    %3844 = vmatprep.subr.bf16.mxu0 %v3339
    %3845 = vmatpush1.bf16.msra.mxu0 %v3338
    %3846 = vmatprep.mubr.bf16.mxu0 %v2442
    %3847 = vmatmul.mubr.bf16.gmra.mrb[0].mxu0 %v2440
    %v3848 = vpop.f32.mrb[0].mxu0
    %v3849 = vadd.f32 %v2188, %v3848
    %v3850 = vpop.f32.mrb[0].mxu0
    %v3851 = vadd.f32 %v2190, %v3850
    %v3852 = vpop.f32.mrb[0].mxu0
    %v3853 = vadd.f32 %v2192, %v3852
    %v3854 = vpop.f32.mrb[0].mxu0
    %v3855 = vadd.f32 %v2194, %v3854
    %3856 = vdwg.mxu0
    %3857 = vmatprep.subr.bf16.mxu0 %v3347
    %3858 = vmatpush1.bf16.msra.mxu0 %v3346
    %3859 = vmatprep.subr.bf16.mxu0 %v3355
    %3860 = vmatpush1.bf16.msra.mxu0 %v3354
    %3861 = vmatprep.subr.bf16.mxu0 %v3363
    %3862 = vmatpush1.bf16.msra.mxu0 %v3362
    %3863 = vmatprep.subr.bf16.mxu0 %v3371
    %3864 = vmatpush1.bf16.msra.mxu0 %v3370
    %3865 = vmatprep.subr.bf16.mxu0 %v3379
    %3866 = vmatpush1.bf16.msra.mxu0 %v3378
    %3867 = vmatprep.subr.bf16.mxu0 %v3387
    %3868 = vmatpush1.bf16.msra.mxu0 %v3386
    %3869 = vmatprep.subr.bf16.mxu0 %v3395
    %3870 = vmatpush1.bf16.msra.mxu0 %v3394
    %3871 = vmatprep.subr.bf16.mxu0 %v3403
    %3872 = vmatpush1.bf16.msra.mxu0 %v3402
    %3873 = vmatprep.subr.bf16.mxu0 %v3411
    %3874 = vmatpush1.bf16.msra.mxu0 %v3410
    %3875 = vmatprep.subr.bf16.mxu0 %v3419
    %3876 = vmatpush1.bf16.msra.mxu0 %v3418
    %3877 = vmatprep.subr.bf16.mxu0 %v3427
    %3878 = vmatpush1.bf16.msra.mxu0 %v3426
    %3879 = vmatprep.subr.bf16.mxu0 %v3435
    %3880 = vmatpush1.bf16.msra.mxu0 %v3434
    %3881 = vmatprep.subr.bf16.mxu0 %v3443
    %3882 = vmatpush1.bf16.msra.mxu0 %v3442
    %3883 = vmatprep.subr.bf16.mxu0 %v3451
    %3884 = vmatpush1.bf16.msra.mxu0 %v3450
    %3885 = vmatprep.subr.bf16.mxu0 %v3459
    %3886 = vmatpush1.bf16.msra.mxu0 %v3458
    %3887 = vmatprep.subr.bf16.mxu0 %v3467
    %3888 = vmatpush1.bf16.msra.mxu0 %v3466
    %3889 = vmatprep.mubr.bf16.mxu0 %v2443
    %3890 = vmatmul.mubr.bf16.gmra.mrb[0].mxu0 %v2441
    %v3891 = vpop.f32.mrb[0].mxu0
    %v3892 = vadd.f32 %v3849, %v3891
    %v3893 = vpop.f32.mrb[0].mxu0
    %v3894 = vadd.f32 %v3851, %v3893
    %v3895 = vpop.f32.mrb[0].mxu0
    %v3896 = vadd.f32 %v3853, %v3895
    %v3897 = vpop.f32.mrb[0].mxu0
    %v3898 = vadd.f32 %v3855, %v3897
    %3899 = vdwg.mxu0
    %3900 = vmatprep.subr.bf16.mxu0 %v3221
    %3901 = vmatpush1.bf16.msra.mxu0 %v3220
    %3902 = vmatprep.subr.bf16.mxu0 %v3229
    %3903 = vmatpush1.bf16.msra.mxu0 %v3228
    %3904 = vmatprep.subr.bf16.mxu0 %v3237
    %3905 = vmatpush1.bf16.msra.mxu0 %v3236
    %3906 = vmatprep.subr.bf16.mxu0 %v3245
    %3907 = vmatpush1.bf16.msra.mxu0 %v3244
    %3908 = vmatprep.subr.bf16.mxu0 %v3253
    %3909 = vmatpush1.bf16.msra.mxu0 %v3252
    %3910 = vmatprep.subr.bf16.mxu0 %v3261
    %3911 = vmatpush1.bf16.msra.mxu0 %v3260
    %3912 = vmatprep.subr.bf16.mxu0 %v3269
    %3913 = vmatpush1.bf16.msra.mxu0 %v3268
    %3914 = vmatprep.subr.bf16.mxu0 %v3277
    %3915 = vmatpush1.bf16.msra.mxu0 %v3276
    %3916 = vmatprep.subr.bf16.mxu0 %v3285
    %3917 = vmatpush1.bf16.msra.mxu0 %v3284
    %3918 = vmatprep.subr.bf16.mxu0 %v3293
    %3919 = vmatpush1.bf16.msra.mxu0 %v3292
    %3920 = vmatprep.subr.bf16.mxu0 %v3301
    %3921 = vmatpush1.bf16.msra.mxu0 %v3300
    %3922 = vmatprep.subr.bf16.mxu0 %v3309
    %3923 = vmatpush1.bf16.msra.mxu0 %v3308
    %3924 = vmatprep.subr.bf16.mxu0 %v3317
    %3925 = vmatpush1.bf16.msra.mxu0 %v3316
    %3926 = vmatprep.subr.bf16.mxu0 %v3325
    %3927 = vmatpush1.bf16.msra.mxu0 %v3324
    %3928 = vmatprep.subr.bf16.mxu0 %v3333
    %3929 = vmatpush1.bf16.msra.mxu0 %v3332
    %3930 = vmatprep.subr.bf16.mxu0 %v3341
    %3931 = vmatpush1.bf16.msra.mxu0 %v3340
    %3932 = vmatprep.mubr.bf16.mxu0 %v2442
    %3933 = vmatmul.mubr.bf16.gmra.mrb[0].mxu0 %v2440
    %v3934 = vpop.f32.mrb[0].mxu0
    %v3935 = vadd.f32 %v2274, %v3934
    %v3936 = vpop.f32.mrb[0].mxu0
    %v3937 = vadd.f32 %v2276, %v3936
    %v3938 = vpop.f32.mrb[0].mxu0
    %v3939 = vadd.f32 %v2278, %v3938
    %v3940 = vpop.f32.mrb[0].mxu0
    %v3941 = vadd.f32 %v2280, %v3940
    %3942 = vdwg.mxu0
    %3943 = vmatprep.subr.bf16.mxu0 %v3349
    %3944 = vmatpush1.bf16.msra.mxu0 %v3348
    %3945 = vmatprep.subr.bf16.mxu0 %v3357
    %3946 = vmatpush1.bf16.msra.mxu0 %v3356
    %3947 = vmatprep.subr.bf16.mxu0 %v3365
    %3948 = vmatpush1.bf16.msra.mxu0 %v3364
    %3949 = vmatprep.subr.bf16.mxu0 %v3373
    %3950 = vmatpush1.bf16.msra.mxu0 %v3372
    %3951 = vmatprep.subr.bf16.mxu0 %v3381
    %3952 = vmatpush1.bf16.msra.mxu0 %v3380
    %3953 = vmatprep.subr.bf16.mxu0 %v3389
    %3954 = vmatpush1.bf16.msra.mxu0 %v3388
    %3955 = vmatprep.subr.bf16.mxu0 %v3397
    %3956 = vmatpush1.bf16.msra.mxu0 %v3396
    %3957 = vmatprep.subr.bf16.mxu0 %v3405
    %3958 = vmatpush1.bf16.msra.mxu0 %v3404
    %3959 = vmatprep.subr.bf16.mxu0 %v3413
    %3960 = vmatpush1.bf16.msra.mxu0 %v3412
    %3961 = vmatprep.subr.bf16.mxu0 %v3421
    %3962 = vmatpush1.bf16.msra.mxu0 %v3420
    %3963 = vmatprep.subr.bf16.mxu0 %v3429
    %3964 = vmatpush1.bf16.msra.mxu0 %v3428
    %3965 = vmatprep.subr.bf16.mxu0 %v3437
    %3966 = vmatpush1.bf16.msra.mxu0 %v3436
    %3967 = vmatprep.subr.bf16.mxu0 %v3445
    %3968 = vmatpush1.bf16.msra.mxu0 %v3444
    %3969 = vmatprep.subr.bf16.mxu0 %v3453
    %3970 = vmatpush1.bf16.msra.mxu0 %v3452
    %3971 = vmatprep.subr.bf16.mxu0 %v3461
    %3972 = vmatpush1.bf16.msra.mxu0 %v3460
    %3973 = vmatprep.subr.bf16.mxu0 %v3469
    %3974 = vmatpush1.bf16.msra.mxu0 %v3468
    %3975 = vmatprep.mubr.bf16.mxu0 %v2443
    %3976 = vmatmul.mubr.bf16.gmra.mrb[0].mxu0 %v2441
    %v3977 = vpop.f32.mrb[0].mxu0
    %v3978 = vadd.f32 %v3935, %v3977
    %v3979 = vpop.f32.mrb[0].mxu0
    %v3980 = vadd.f32 %v3937, %v3979
    %v3981 = vpop.f32.mrb[0].mxu0
    %v3982 = vadd.f32 %v3939, %v3981
    %v3983 = vpop.f32.mrb[0].mxu0
    %v3984 = vadd.f32 %v3941, %v3983
    %3985 = vdwg.mxu0
    %3986 = vmatprep.subr.bf16.mxu0 %v3223
    %3987 = vmatpush1.bf16.msra.mxu0 %v3222
    %3988 = vmatprep.subr.bf16.mxu0 %v3231
    %3989 = vmatpush1.bf16.msra.mxu0 %v3230
    %3990 = vmatprep.subr.bf16.mxu0 %v3239
    %3991 = vmatpush1.bf16.msra.mxu0 %v3238
    %3992 = vmatprep.subr.bf16.mxu0 %v3247
    %3993 = vmatpush1.bf16.msra.mxu0 %v3246
    %3994 = vmatprep.subr.bf16.mxu0 %v3255
    %3995 = vmatpush1.bf16.msra.mxu0 %v3254
    %3996 = vmatprep.subr.bf16.mxu0 %v3263
    %3997 = vmatpush1.bf16.msra.mxu0 %v3262
    %3998 = vmatprep.subr.bf16.mxu0 %v3271
    %3999 = vmatpush1.bf16.msra.mxu0 %v3270
    %4000 = vmatprep.subr.bf16.mxu0 %v3279
    %4001 = vmatpush1.bf16.msra.mxu0 %v3278
    %4002 = vmatprep.subr.bf16.mxu0 %v3287
    %4003 = vmatpush1.bf16.msra.mxu0 %v3286
    %4004 = vmatprep.subr.bf16.mxu0 %v3295
    %4005 = vmatpush1.bf16.msra.mxu0 %v3294
    %4006 = vmatprep.subr.bf16.mxu0 %v3303
    %4007 = vmatpush1.bf16.msra.mxu0 %v3302
    %4008 = vmatprep.subr.bf16.mxu0 %v3311
    %4009 = vmatpush1.bf16.msra.mxu0 %v3310
    %4010 = vmatprep.subr.bf16.mxu0 %v3319
    %4011 = vmatpush1.bf16.msra.mxu0 %v3318
    %4012 = vmatprep.subr.bf16.mxu0 %v3327
    %4013 = vmatpush1.bf16.msra.mxu0 %v3326
    %4014 = vmatprep.subr.bf16.mxu0 %v3335
    %4015 = vmatpush1.bf16.msra.mxu0 %v3334
    %4016 = vmatprep.subr.bf16.mxu0 %v3343
    %4017 = vmatpush1.bf16.msra.mxu0 %v3342
    %4018 = vmatprep.mubr.bf16.mxu0 %v2442
    %4019 = vmatmul.mubr.bf16.gmra.mrb[0].mxu0 %v2440
    %v4020 = vpop.f32.mrb[0].mxu0
    %v4021 = vadd.f32 %v2360, %v4020
    %v4022 = vpop.f32.mrb[0].mxu0
    %v4023 = vadd.f32 %v2362, %v4022
    %v4024 = vpop.f32.mrb[0].mxu0
    %v4025 = vadd.f32 %v2364, %v4024
    %v4026 = vpop.f32.mrb[0].mxu0
    %v4027 = vadd.f32 %v2366, %v4026
    %4028 = vdwg.mxu0
    %4029 = vmatprep.subr.bf16.mxu0 %v3351
    %4030 = vmatpush1.bf16.msra.mxu0 %v3350
    %4031 = vmatprep.subr.bf16.mxu0 %v3359
    %4032 = vmatpush1.bf16.msra.mxu0 %v3358
    %4033 = vmatprep.subr.bf16.mxu0 %v3367
    %4034 = vmatpush1.bf16.msra.mxu0 %v3366
    %4035 = vmatprep.subr.bf16.mxu0 %v3375
    %4036 = vmatpush1.bf16.msra.mxu0 %v3374
    %4037 = vmatprep.subr.bf16.mxu0 %v3383
    %4038 = vmatpush1.bf16.msra.mxu0 %v3382
    %4039 = vmatprep.subr.bf16.mxu0 %v3391
    %4040 = vmatpush1.bf16.msra.mxu0 %v3390
    %4041 = vmatprep.subr.bf16.mxu0 %v3399
    %4042 = vmatpush1.bf16.msra.mxu0 %v3398
    %4043 = vmatprep.subr.bf16.mxu0 %v3407
    %4044 = vmatpush1.bf16.msra.mxu0 %v3406
    %4045 = vmatprep.subr.bf16.mxu0 %v3415
    %4046 = vmatpush1.bf16.msra.mxu0 %v3414
    %4047 = vmatprep.subr.bf16.mxu0 %v3423
    %4048 = vmatpush1.bf16.msra.mxu0 %v3422
    %4049 = vmatprep.subr.bf16.mxu0 %v3431
    %4050 = vmatpush1.bf16.msra.mxu0 %v3430
    %4051 = vmatprep.subr.bf16.mxu0 %v3439
    %4052 = vmatpush1.bf16.msra.mxu0 %v3438
    %4053 = vmatprep.subr.bf16.mxu0 %v3447
    %4054 = vmatpush1.bf16.msra.mxu0 %v3446
    %4055 = vmatprep.subr.bf16.mxu0 %v3455
    %4056 = vmatpush1.bf16.msra.mxu0 %v3454
    %4057 = vmatprep.subr.bf16.mxu0 %v3463
    %4058 = vmatpush1.bf16.msra.mxu0 %v3462
    %4059 = vmatprep.subr.bf16.mxu0 %v3471
    %4060 = vmatpush1.bf16.msra.mxu0 %v3470
    %4061 = vmatprep.mubr.bf16.mxu0 %v2443
    %4062 = vmatmul.mubr.bf16.gmra.mrb[0].mxu0 %v2441
    %v4063 = vpop.f32.mrb[0].mxu0
    %v4064 = vadd.f32 %v4021, %v4063
    %v4065 = vpop.f32.mrb[0].mxu0
    %v4066 = vadd.f32 %v4023, %v4065
    %v4067 = vpop.f32.mrb[0].mxu0
    %v4068 = vadd.f32 %v4025, %v4067
    %v4069 = vpop.f32.mrb[0].mxu0
    %v4070 = vadd.f32 %v4027, %v4069
    %4071 = vdwg.mxu0
    %v4072 = vld [vmem:[%s4] sm:$0xff]
    %v4074 = vlaneseq
    %v4075 = vshrl.u32 %v4074, 7
    %v4076 = vsub.s32 0, %v4075
    %v4077 = vrot.slane %v4072, %v4076
    %v4078 = vlaneseq
    %v4079 = vshrl.u32 %v4078, 7
    %v4080 = vsub.s32 1, %v4079
    %v4081 = vrot.slane %v4072, %v4080
    %v4082 = vlaneseq
    %v4083 = vshrl.u32 %v4082, 7
    %v4084 = vsub.s32 2, %v4083
    %v4085 = vrot.slane %v4072, %v4084
    %v4086 = vlaneseq
    %v4087 = vshrl.u32 %v4086, 7
    %v4088 = vsub.s32 3, %v4087
    %v4089 = vrot.slane %v4072, %v4088
    %v4090 = vlaneseq
    %v4091 = vshrl.u32 %v4090, 7
    %v4092 = vsub.s32 4, %v4091
    %v4093 = vrot.slane %v4072, %v4092
    %v4094 = vlaneseq
    %v4095 = vshrl.u32 %v4094, 7
    %v4096 = vsub.s32 5, %v4095
    %v4097 = vrot.slane %v4072, %v4096
    %v4098 = vlaneseq
    %v4099 = vshrl.u32 %v4098, 7
    %v4100 = vsub.s32 6, %v4099
    %v4101 = vrot.slane %v4072, %v4100
    %v4102 = vlaneseq
    %v4103 = vshrl.u32 %v4102, 7
    %v4104 = vsub.s32 7, %v4103
    %v4105 = vrot.slane %v4072, %v4104
    %v4114 = vadd.f32 %v3806, %v4077
    %v4115 = vadd.f32 %v3808, %v4081
    %v4116 = vadd.f32 %v3892, %v4085
    %v4117 = vadd.f32 %v3894, %v4089
    %v4118 = vadd.f32 %v3978, %v4093
    %v4119 = vadd.f32 %v3980, %v4097
    %v4120 = vadd.f32 %v4064, %v4101
    %v4121 = vadd.f32 %v4066, %v4105
    %v4122 = vadd.f32 %v3810, %v4077
    %v4123 = vadd.f32 %v3812, %v4081
    %v4124 = vadd.f32 %v3896, %v4085
    %v4125 = vadd.f32 %v3898, %v4089
    %v4126 = vadd.f32 %v3982, %v4093
    %v4127 = vadd.f32 %v3984, %v4097
    %v4128 = vadd.f32 %v4068, %v4101
    %v4129 = vadd.f32 %v4070, %v4105
    %v4130 = vpack.c.bf16 %v4122, %v4114
    %v4131 = vpack.c.bf16 %v4123, %v4115
    %v4132 = vpack.c.bf16 %v4124, %v4116
    %v4133 = vpack.c.bf16 %v4125, %v4117
    %v4134 = vpack.c.bf16 %v4126, %v4118
    %v4135 = vpack.c.bf16 %v4127, %v4119
    %v4136 = vpack.c.bf16 %v4128, %v4120
    %v4137 = vpack.c.bf16 %v4129, %v4121
    %vm4138 = vcmp.gt.bf16.partialorder %v4130, 0
    %vm4139 = vcmp.gt.bf16.partialorder %v4131, 0
    %vm4140 = vcmp.gt.bf16.partialorder %v4132, 0
    %vm4141 = vcmp.gt.bf16.partialorder %v4133, 0
    %vm4142 = vcmp.gt.bf16.partialorder %v4134, 0
    %vm4143 = vcmp.gt.bf16.partialorder %v4135, 0
    %vm4144 = vcmp.gt.bf16.partialorder %v4136, 0
    %vm4145 = vcmp.gt.bf16.partialorder %v4137, 0
    %v4146 = vmul.bf16 %v4130, 1045249613
    %v4147 = vmul.bf16 %v4131, 1045249613
    %v4148 = vmul.bf16 %v4132, 1045249613
    %v4149 = vmul.bf16 %v4133, 1045249613
    %v4150 = vmul.bf16 %v4134, 1045249613
    %v4151 = vmul.bf16 %v4135, 1045249613
    %v4152 = vmul.bf16 %v4136, 1045249613
    %v4153 = vmul.bf16 %v4137, 1045249613
    %v4154 = vsel %vm4138, %v4130, %v4146
    %v4155 = vsel %vm4139, %v4131, %v4147
    %v4156 = vsel %vm4140, %v4132, %v4148
    %v4157 = vsel %vm4141, %v4133, %v4149
    %v4158 = vsel %vm4142, %v4134, %v4150
    %v4159 = vsel %vm4143, %v4135, %v4151
    %v4160 = vsel %vm4144, %v4136, %v4152
    %v4161 = vsel %vm4145, %v4137, %v4153
    %v4162 = vld [vmem:[#allocation10] sm:$0xff]
    %v4163 = vld [vmem:[#allocation10 + $0x8] sm:$0xff]
    %v4164 = vld [vmem:[#allocation10 + $0x10] sm:$0xff]
    %v4165 = vld [vmem:[#allocation10 + $0x18] sm:$0xff]
    %v4166 = vld [vmem:[#allocation10 + $0x20] sm:$0xff]
    %v4167 = vld [vmem:[#allocation10 + $0x28] sm:$0xff]
    %v4168 = vld [vmem:[#allocation10 + $0x30] sm:$0xff]
    %v4169 = vld [vmem:[#allocation10 + $0x38] sm:$0xff]
    %v4170 = vld [vmem:[#allocation10 + $0x40] sm:$0xff]
    %v4171 = vld [vmem:[#allocation10 + $0x48] sm:$0xff]
    %v4172 = vld [vmem:[#allocation10 + $0x50] sm:$0xff]
    %v4173 = vld [vmem:[#allocation10 + $0x58] sm:$0xff]
    %v4174 = vld [vmem:[#allocation10 + $0x60] sm:$0xff]
    %v4175 = vld [vmem:[#allocation10 + $0x68] sm:$0xff]
    %v4176 = vld [vmem:[#allocation10 + $0x70] sm:$0xff]
    %v4177 = vld [vmem:[#allocation10 + $0x78] sm:$0xff]
    %v4178 = vld [vmem:[#allocation10 + $0x80] sm:$0xff]
    %v4179 = vld [vmem:[#allocation10 + $0x88] sm:$0xff]
    %v4180 = vld [vmem:[#allocation10 + $0x90] sm:$0xff]
    %v4181 = vld [vmem:[#allocation10 + $0x98] sm:$0xff]
    %v4182 = vld [vmem:[#allocation10 + $0xa0] sm:$0xff]
    %v4183 = vld [vmem:[#allocation10 + $0xa8] sm:$0xff]
    %v4184 = vld [vmem:[#allocation10 + $0xb0] sm:$0xff]
    %v4185 = vld [vmem:[#allocation10 + $0xb8] sm:$0xff]
    %v4186 = vld [vmem:[#allocation10 + $0xc0] sm:$0xff]
    %v4187 = vld [vmem:[#allocation10 + $0xc8] sm:$0xff]
    %v4188 = vld [vmem:[#allocation10 + $0xd0] sm:$0xff]
    %v4189 = vld [vmem:[#allocation10 + $0xd8] sm:$0xff]
    %v4190 = vld [vmem:[#allocation10 + $0xe0] sm:$0xff]
    %v4191 = vld [vmem:[#allocation10 + $0xe8] sm:$0xff]
    %v4192 = vld [vmem:[#allocation10 + $0xf0] sm:$0xff]
    %v4193 = vld [vmem:[#allocation10 + $0xf8] sm:$0xff]
    %v4194 = vld [vmem:[#allocation10 + $0x100] sm:$0xff]
    %v4195 = vld [vmem:[#allocation10 + $0x108] sm:$0xff]
    %v4196 = vld [vmem:[#allocation10 + $0x110] sm:$0xff]
    %v4197 = vld [vmem:[#allocation10 + $0x118] sm:$0xff]
    %v4198 = vld [vmem:[#allocation10 + $0x120] sm:$0xff]
    %v4199 = vld [vmem:[#allocation10 + $0x128] sm:$0xff]
    %v4200 = vld [vmem:[#allocation10 + $0x130] sm:$0xff]
    %v4201 = vld [vmem:[#allocation10 + $0x138] sm:$0xff]
    %v4202 = vld [vmem:[#allocation10 + $0x140] sm:$0xff]
    %v4203 = vld [vmem:[#allocation10 + $0x148] sm:$0xff]
    %v4204 = vld [vmem:[#allocation10 + $0x150] sm:$0xff]
    %v4205 = vld [vmem:[#allocation10 + $0x158] sm:$0xff]
    %v4206 = vld [vmem:[#allocation10 + $0x160] sm:$0xff]
    %v4207 = vld [vmem:[#allocation10 + $0x168] sm:$0xff]
    %v4208 = vld [vmem:[#allocation10 + $0x170] sm:$0xff]
    %v4209 = vld [vmem:[#allocation10 + $0x178] sm:$0xff]
    %v4210 = vld [vmem:[#allocation10 + $0x180] sm:$0xff]
    %v4211 = vld [vmem:[#allocation10 + $0x188] sm:$0xff]
    %v4212 = vld [vmem:[#allocation10 + $0x190] sm:$0xff]
    %v4213 = vld [vmem:[#allocation10 + $0x198] sm:$0xff]
    %v4214 = vld [vmem:[#allocation10 + $0x1a0] sm:$0xff]
    %v4215 = vld [vmem:[#allocation10 + $0x1a8] sm:$0xff]
    %v4216 = vld [vmem:[#allocation10 + $0x1b0] sm:$0xff]
    %v4217 = vld [vmem:[#allocation10 + $0x1b8] sm:$0xff]
    %v4218 = vld [vmem:[#allocation10 + $0x1c0] sm:$0xff]
    %v4219 = vld [vmem:[#allocation10 + $0x1c8] sm:$0xff]
    %v4220 = vld [vmem:[#allocation10 + $0x1d0] sm:$0xff]
    %v4221 = vld [vmem:[#allocation10 + $0x1d8] sm:$0xff]
    %v4222 = vld [vmem:[#allocation10 + $0x1e0] sm:$0xff]
    %v4223 = vld [vmem:[#allocation10 + $0x1e8] sm:$0xff]
    %v4224 = vld [vmem:[#allocation10 + $0x1f0] sm:$0xff]
    %v4225 = vld [vmem:[#allocation10 + $0x1f8] sm:$0xff]
    %v4226 = vld [vmem:[#allocation10 + $0x200] sm:$0xff]
    %v4227 = vld [vmem:[#allocation10 + $0x208] sm:$0xff]
    %v4228 = vld [vmem:[#allocation10 + $0x210] sm:$0xff]
    %v4229 = vld [vmem:[#allocation10 + $0x218] sm:$0xff]
    %v4230 = vld [vmem:[#allocation10 + $0x220] sm:$0xff]
    %v4231 = vld [vmem:[#allocation10 + $0x228] sm:$0xff]
    %v4232 = vld [vmem:[#allocation10 + $0x230] sm:$0xff]
    %v4233 = vld [vmem:[#allocation10 + $0x238] sm:$0xff]
    %v4234 = vld [vmem:[#allocation10 + $0x240] sm:$0xff]
    %v4235 = vld [vmem:[#allocation10 + $0x248] sm:$0xff]
    %v4236 = vld [vmem:[#allocation10 + $0x250] sm:$0xff]
    %v4237 = vld [vmem:[#allocation10 + $0x258] sm:$0xff]
    %v4238 = vld [vmem:[#allocation10 + $0x260] sm:$0xff]
    %v4239 = vld [vmem:[#allocation10 + $0x268] sm:$0xff]
    %v4240 = vld [vmem:[#allocation10 + $0x270] sm:$0xff]
    %v4241 = vld [vmem:[#allocation10 + $0x278] sm:$0xff]
    %v4242 = vld [vmem:[#allocation10 + $0x280] sm:$0xff]
    %v4243 = vld [vmem:[#allocation10 + $0x288] sm:$0xff]
    %v4244 = vld [vmem:[#allocation10 + $0x290] sm:$0xff]
    %v4245 = vld [vmem:[#allocation10 + $0x298] sm:$0xff]
    %v4246 = vld [vmem:[#allocation10 + $0x2a0] sm:$0xff]
    %v4247 = vld [vmem:[#allocation10 + $0x2a8] sm:$0xff]
    %v4248 = vld [vmem:[#allocation10 + $0x2b0] sm:$0xff]
    %v4249 = vld [vmem:[#allocation10 + $0x2b8] sm:$0xff]
    %v4250 = vld [vmem:[#allocation10 + $0x2c0] sm:$0xff]
    %v4251 = vld [vmem:[#allocation10 + $0x2c8] sm:$0xff]
    %v4252 = vld [vmem:[#allocation10 + $0x2d0] sm:$0xff]
    %v4253 = vld [vmem:[#allocation10 + $0x2d8] sm:$0xff]
    %v4254 = vld [vmem:[#allocation10 + $0x2e0] sm:$0xff]
    %v4255 = vld [vmem:[#allocation10 + $0x2e8] sm:$0xff]
    %v4256 = vld [vmem:[#allocation10 + $0x2f0] sm:$0xff]
    %v4257 = vld [vmem:[#allocation10 + $0x2f8] sm:$0xff]
    %v4258 = vld [vmem:[#allocation10 + $0x300] sm:$0xff]
    %v4259 = vld [vmem:[#allocation10 + $0x308] sm:$0xff]
    %v4260 = vld [vmem:[#allocation10 + $0x310] sm:$0xff]
    %v4261 = vld [vmem:[#allocation10 + $0x318] sm:$0xff]
    %v4262 = vld [vmem:[#allocation10 + $0x320] sm:$0xff]
    %v4263 = vld [vmem:[#allocation10 + $0x328] sm:$0xff]
    %v4264 = vld [vmem:[#allocation10 + $0x330] sm:$0xff]
    %v4265 = vld [vmem:[#allocation10 + $0x338] sm:$0xff]
    %v4266 = vld [vmem:[#allocation10 + $0x340] sm:$0xff]
    %v4267 = vld [vmem:[#allocation10 + $0x348] sm:$0xff]
    %v4268 = vld [vmem:[#allocation10 + $0x350] sm:$0xff]
    %v4269 = vld [vmem:[#allocation10 + $0x358] sm:$0xff]
    %v4270 = vld [vmem:[#allocation10 + $0x360] sm:$0xff]
    %v4271 = vld [vmem:[#allocation10 + $0x368] sm:$0xff]
    %v4272 = vld [vmem:[#allocation10 + $0x370] sm:$0xff]
    %v4273 = vld [vmem:[#allocation10 + $0x378] sm:$0xff]
    %v4274 = vld [vmem:[#allocation10 + $0x380] sm:$0xff]
    %v4275 = vld [vmem:[#allocation10 + $0x388] sm:$0xff]
    %v4276 = vld [vmem:[#allocation10 + $0x390] sm:$0xff]
    %v4277 = vld [vmem:[#allocation10 + $0x398] sm:$0xff]
    %v4278 = vld [vmem:[#allocation10 + $0x3a0] sm:$0xff]
    %v4279 = vld [vmem:[#allocation10 + $0x3a8] sm:$0xff]
    %v4280 = vld [vmem:[#allocation10 + $0x3b0] sm:$0xff]
    %v4281 = vld [vmem:[#allocation10 + $0x3b8] sm:$0xff]
    %v4282 = vld [vmem:[#allocation10 + $0x3c0] sm:$0xff]
    %v4283 = vld [vmem:[#allocation10 + $0x3c8] sm:$0xff]
    %v4284 = vld [vmem:[#allocation10 + $0x3d0] sm:$0xff]
    %v4285 = vld [vmem:[#allocation10 + $0x3d8] sm:$0xff]
    %v4286 = vld [vmem:[#allocation10 + $0x3e0] sm:$0xff]
    %v4287 = vld [vmem:[#allocation10 + $0x3e8] sm:$0xff]
    %v4288 = vld [vmem:[#allocation10 + $0x3f0] sm:$0xff]
    %v4289 = vld [vmem:[#allocation10 + $0x3f8] sm:$0xff]
    %v4290 = vld [vmem:[#allocation10 + $0x400] sm:$0xff]
    %v4291 = vld [vmem:[#allocation10 + $0x408] sm:$0xff]
    %v4292 = vld [vmem:[#allocation10 + $0x410] sm:$0xff]
    %v4293 = vld [vmem:[#allocation10 + $0x418] sm:$0xff]
    %v4294 = vld [vmem:[#allocation10 + $0x420] sm:$0xff]
    %v4295 = vld [vmem:[#allocation10 + $0x428] sm:$0xff]
    %v4296 = vld [vmem:[#allocation10 + $0x430] sm:$0xff]
    %v4297 = vld [vmem:[#allocation10 + $0x438] sm:$0xff]
    %v4298 = vld [vmem:[#allocation10 + $0x440] sm:$0xff]
    %v4299 = vld [vmem:[#allocation10 + $0x448] sm:$0xff]
    %v4300 = vld [vmem:[#allocation10 + $0x450] sm:$0xff]
    %v4301 = vld [vmem:[#allocation10 + $0x458] sm:$0xff]
    %v4302 = vld [vmem:[#allocation10 + $0x460] sm:$0xff]
    %v4303 = vld [vmem:[#allocation10 + $0x468] sm:$0xff]
    %v4304 = vld [vmem:[#allocation10 + $0x470] sm:$0xff]
    %v4305 = vld [vmem:[#allocation10 + $0x478] sm:$0xff]
    %v4306 = vld [vmem:[#allocation10 + $0x480] sm:$0xff]
    %v4307 = vld [vmem:[#allocation10 + $0x488] sm:$0xff]
    %v4308 = vld [vmem:[#allocation10 + $0x490] sm:$0xff]
    %v4309 = vld [vmem:[#allocation10 + $0x498] sm:$0xff]
    %v4310 = vld [vmem:[#allocation10 + $0x4a0] sm:$0xff]
    %v4311 = vld [vmem:[#allocation10 + $0x4a8] sm:$0xff]
    %v4312 = vld [vmem:[#allocation10 + $0x4b0] sm:$0xff]
    %v4313 = vld [vmem:[#allocation10 + $0x4b8] sm:$0xff]
    %v4314 = vld [vmem:[#allocation10 + $0x4c0] sm:$0xff]
    %v4315 = vld [vmem:[#allocation10 + $0x4c8] sm:$0xff]
    %v4316 = vld [vmem:[#allocation10 + $0x4d0] sm:$0xff]
    %v4317 = vld [vmem:[#allocation10 + $0x4d8] sm:$0xff]
    %v4318 = vld [vmem:[#allocation10 + $0x4e0] sm:$0xff]
    %v4319 = vld [vmem:[#allocation10 + $0x4e8] sm:$0xff]
    %v4320 = vld [vmem:[#allocation10 + $0x4f0] sm:$0xff]
    %v4321 = vld [vmem:[#allocation10 + $0x4f8] sm:$0xff]
    %v4322 = vld [vmem:[#allocation10 + $0x500] sm:$0xff]
    %v4323 = vld [vmem:[#allocation10 + $0x508] sm:$0xff]
    %v4324 = vld [vmem:[#allocation10 + $0x510] sm:$0xff]
    %v4325 = vld [vmem:[#allocation10 + $0x518] sm:$0xff]
    %v4326 = vld [vmem:[#allocation10 + $0x520] sm:$0xff]
    %v4327 = vld [vmem:[#allocation10 + $0x528] sm:$0xff]
    %v4328 = vld [vmem:[#allocation10 + $0x530] sm:$0xff]
    %v4329 = vld [vmem:[#allocation10 + $0x538] sm:$0xff]
    %v4330 = vld [vmem:[#allocation10 + $0x540] sm:$0xff]
    %v4331 = vld [vmem:[#allocation10 + $0x548] sm:$0xff]
    %v4332 = vld [vmem:[#allocation10 + $0x550] sm:$0xff]
    %v4333 = vld [vmem:[#allocation10 + $0x558] sm:$0xff]
    %v4334 = vld [vmem:[#allocation10 + $0x560] sm:$0xff]
    %v4335 = vld [vmem:[#allocation10 + $0x568] sm:$0xff]
    %v4336 = vld [vmem:[#allocation10 + $0x570] sm:$0xff]
    %v4337 = vld [vmem:[#allocation10 + $0x578] sm:$0xff]
    %v4338 = vld [vmem:[#allocation10 + $0x580] sm:$0xff]
    %v4339 = vld [vmem:[#allocation10 + $0x588] sm:$0xff]
    %v4340 = vld [vmem:[#allocation10 + $0x590] sm:$0xff]
    %v4341 = vld [vmem:[#allocation10 + $0x598] sm:$0xff]
    %v4342 = vld [vmem:[#allocation10 + $0x5a0] sm:$0xff]
    %v4343 = vld [vmem:[#allocation10 + $0x5a8] sm:$0xff]
    %v4344 = vld [vmem:[#allocation10 + $0x5b0] sm:$0xff]
    %v4345 = vld [vmem:[#allocation10 + $0x5b8] sm:$0xff]
    %v4346 = vld [vmem:[#allocation10 + $0x5c0] sm:$0xff]
    %v4347 = vld [vmem:[#allocation10 + $0x5c8] sm:$0xff]
    %v4348 = vld [vmem:[#allocation10 + $0x5d0] sm:$0xff]
    %v4349 = vld [vmem:[#allocation10 + $0x5d8] sm:$0xff]
    %v4350 = vld [vmem:[#allocation10 + $0x5e0] sm:$0xff]
    %v4351 = vld [vmem:[#allocation10 + $0x5e8] sm:$0xff]
    %v4352 = vld [vmem:[#allocation10 + $0x5f0] sm:$0xff]
    %v4353 = vld [vmem:[#allocation10 + $0x5f8] sm:$0xff]
    %v4354 = vld [vmem:[#allocation10 + $0x600] sm:$0xff]
    %v4355 = vld [vmem:[#allocation10 + $0x608] sm:$0xff]
    %v4356 = vld [vmem:[#allocation10 + $0x610] sm:$0xff]
    %v4357 = vld [vmem:[#allocation10 + $0x618] sm:$0xff]
    %v4358 = vld [vmem:[#allocation10 + $0x620] sm:$0xff]
    %v4359 = vld [vmem:[#allocation10 + $0x628] sm:$0xff]
    %v4360 = vld [vmem:[#allocation10 + $0x630] sm:$0xff]
    %v4361 = vld [vmem:[#allocation10 + $0x638] sm:$0xff]
    %v4362 = vld [vmem:[#allocation10 + $0x640] sm:$0xff]
    %v4363 = vld [vmem:[#allocation10 + $0x648] sm:$0xff]
    %v4364 = vld [vmem:[#allocation10 + $0x650] sm:$0xff]
    %v4365 = vld [vmem:[#allocation10 + $0x658] sm:$0xff]
    %v4366 = vld [vmem:[#allocation10 + $0x660] sm:$0xff]
    %v4367 = vld [vmem:[#allocation10 + $0x668] sm:$0xff]
    %v4368 = vld [vmem:[#allocation10 + $0x670] sm:$0xff]
    %v4369 = vld [vmem:[#allocation10 + $0x678] sm:$0xff]
    %v4370 = vld [vmem:[#allocation10 + $0x680] sm:$0xff]
    %v4371 = vld [vmem:[#allocation10 + $0x688] sm:$0xff]
    %v4372 = vld [vmem:[#allocation10 + $0x690] sm:$0xff]
    %v4373 = vld [vmem:[#allocation10 + $0x698] sm:$0xff]
    %v4374 = vld [vmem:[#allocation10 + $0x6a0] sm:$0xff]
    %v4375 = vld [vmem:[#allocation10 + $0x6a8] sm:$0xff]
    %v4376 = vld [vmem:[#allocation10 + $0x6b0] sm:$0xff]
    %v4377 = vld [vmem:[#allocation10 + $0x6b8] sm:$0xff]
    %v4378 = vld [vmem:[#allocation10 + $0x6c0] sm:$0xff]
    %v4379 = vld [vmem:[#allocation10 + $0x6c8] sm:$0xff]
    %v4380 = vld [vmem:[#allocation10 + $0x6d0] sm:$0xff]
    %v4381 = vld [vmem:[#allocation10 + $0x6d8] sm:$0xff]
    %v4382 = vld [vmem:[#allocation10 + $0x6e0] sm:$0xff]
    %v4383 = vld [vmem:[#allocation10 + $0x6e8] sm:$0xff]
    %v4384 = vld [vmem:[#allocation10 + $0x6f0] sm:$0xff]
    %v4385 = vld [vmem:[#allocation10 + $0x6f8] sm:$0xff]
    %v4386 = vld [vmem:[#allocation10 + $0x700] sm:$0xff]
    %v4387 = vld [vmem:[#allocation10 + $0x708] sm:$0xff]
    %v4388 = vld [vmem:[#allocation10 + $0x710] sm:$0xff]
    %v4389 = vld [vmem:[#allocation10 + $0x718] sm:$0xff]
    %v4390 = vld [vmem:[#allocation10 + $0x720] sm:$0xff]
    %v4391 = vld [vmem:[#allocation10 + $0x728] sm:$0xff]
    %v4392 = vld [vmem:[#allocation10 + $0x730] sm:$0xff]
    %v4393 = vld [vmem:[#allocation10 + $0x738] sm:$0xff]
    %v4394 = vld [vmem:[#allocation10 + $0x740] sm:$0xff]
    %v4395 = vld [vmem:[#allocation10 + $0x748] sm:$0xff]
    %v4396 = vld [vmem:[#allocation10 + $0x750] sm:$0xff]
    %v4397 = vld [vmem:[#allocation10 + $0x758] sm:$0xff]
    %v4398 = vld [vmem:[#allocation10 + $0x760] sm:$0xff]
    %v4399 = vld [vmem:[#allocation10 + $0x768] sm:$0xff]
    %v4400 = vld [vmem:[#allocation10 + $0x770] sm:$0xff]
    %v4401 = vld [vmem:[#allocation10 + $0x778] sm:$0xff]
    %v4402 = vld [vmem:[#allocation10 + $0x780] sm:$0xff]
    %v4403 = vld [vmem:[#allocation10 + $0x788] sm:$0xff]
    %v4404 = vld [vmem:[#allocation10 + $0x790] sm:$0xff]
    %v4405 = vld [vmem:[#allocation10 + $0x798] sm:$0xff]
    %v4406 = vld [vmem:[#allocation10 + $0x7a0] sm:$0xff]
    %v4407 = vld [vmem:[#allocation10 + $0x7a8] sm:$0xff]
    %v4408 = vld [vmem:[#allocation10 + $0x7b0] sm:$0xff]
    %v4409 = vld [vmem:[#allocation10 + $0x7b8] sm:$0xff]
    %v4410 = vld [vmem:[#allocation10 + $0x7c0] sm:$0xff]
    %v4411 = vld [vmem:[#allocation10 + $0x7c8] sm:$0xff]
    %v4412 = vld [vmem:[#allocation10 + $0x7d0] sm:$0xff]
    %v4413 = vld [vmem:[#allocation10 + $0x7d8] sm:$0xff]
    %v4414 = vld [vmem:[#allocation10 + $0x7e0] sm:$0xff]
    %v4415 = vld [vmem:[#allocation10 + $0x7e8] sm:$0xff]
    %v4416 = vld [vmem:[#allocation10 + $0x7f0] sm:$0xff]
    %v4417 = vld [vmem:[#allocation10 + $0x7f8] sm:$0xff]
    %v4418 = vld [vmem:[%s6] sm:$0xf]
    %v4420 = vlaneseq
    %v4421 = vshrl.u32 %v4420, 7
    %v4422 = vsub.s32 0, %v4421
    %v4423 = vrot.slane %v4418, %v4422
    %v4424 = vlaneseq
    %v4425 = vshrl.u32 %v4424, 7
    %v4426 = vsub.s32 1, %v4425
    %v4427 = vrot.slane %v4418, %v4426
    %v4428 = vlaneseq
    %v4429 = vshrl.u32 %v4428, 7
    %v4430 = vsub.s32 2, %v4429
    %v4431 = vrot.slane %v4418, %v4430
    %v4432 = vlaneseq
    %v4433 = vshrl.u32 %v4432, 7
    %v4434 = vsub.s32 3, %v4433
    %v4435 = vrot.slane %v4418, %v4434
    %v4696 = vunpack.c.l.b16 %v4162
    %v4697 = vunpack.c.h.b16 %v4162
    %v4698 = vunpack.c.l.b16 %v4163
    %v4699 = vunpack.c.h.b16 %v4163
    %v4700 = vunpack.c.l.b16 %v4164
    %v4701 = vunpack.c.h.b16 %v4164
    %v4702 = vunpack.c.l.b16 %v4165
    %v4703 = vunpack.c.h.b16 %v4165
    %v4704 = vunpack.c.l.b16 %v4166
    %v4705 = vunpack.c.h.b16 %v4166
    %v4706 = vunpack.c.l.b16 %v4167
    %v4707 = vunpack.c.h.b16 %v4167
    %v4708 = vunpack.c.l.b16 %v4168
    %v4709 = vunpack.c.h.b16 %v4168
    %v4710 = vunpack.c.l.b16 %v4169
    %v4711 = vunpack.c.h.b16 %v4169
    %v4712 = vunpack.c.l.b16 %v4170
    %v4713 = vunpack.c.h.b16 %v4170
    %v4714 = vunpack.c.l.b16 %v4171
    %v4715 = vunpack.c.h.b16 %v4171
    %v4716 = vunpack.c.l.b16 %v4172
    %v4717 = vunpack.c.h.b16 %v4172
    %v4718 = vunpack.c.l.b16 %v4173
    %v4719 = vunpack.c.h.b16 %v4173
    %v4720 = vunpack.c.l.b16 %v4174
    %v4721 = vunpack.c.h.b16 %v4174
    %v4722 = vunpack.c.l.b16 %v4175
    %v4723 = vunpack.c.h.b16 %v4175
    %v4724 = vunpack.c.l.b16 %v4176
    %v4725 = vunpack.c.h.b16 %v4176
    %v4726 = vunpack.c.l.b16 %v4177
    %v4727 = vunpack.c.h.b16 %v4177
    %v4728 = vunpack.c.l.b16 %v4178
    %v4729 = vunpack.c.h.b16 %v4178
    %v4730 = vunpack.c.l.b16 %v4179
    %v4731 = vunpack.c.h.b16 %v4179
    %v4732 = vunpack.c.l.b16 %v4180
    %v4733 = vunpack.c.h.b16 %v4180
    %v4734 = vunpack.c.l.b16 %v4181
    %v4735 = vunpack.c.h.b16 %v4181
    %v4736 = vunpack.c.l.b16 %v4182
    %v4737 = vunpack.c.h.b16 %v4182
    %v4738 = vunpack.c.l.b16 %v4183
    %v4739 = vunpack.c.h.b16 %v4183
    %v4740 = vunpack.c.l.b16 %v4184
    %v4741 = vunpack.c.h.b16 %v4184
    %v4742 = vunpack.c.l.b16 %v4185
    %v4743 = vunpack.c.h.b16 %v4185
    %v4744 = vunpack.c.l.b16 %v4186
    %v4745 = vunpack.c.h.b16 %v4186
    %v4746 = vunpack.c.l.b16 %v4187
    %v4747 = vunpack.c.h.b16 %v4187
    %v4748 = vunpack.c.l.b16 %v4188
    %v4749 = vunpack.c.h.b16 %v4188
    %v4750 = vunpack.c.l.b16 %v4189
    %v4751 = vunpack.c.h.b16 %v4189
    %v4752 = vunpack.c.l.b16 %v4190
    %v4753 = vunpack.c.h.b16 %v4190
    %v4754 = vunpack.c.l.b16 %v4191
    %v4755 = vunpack.c.h.b16 %v4191
    %v4756 = vunpack.c.l.b16 %v4192
    %v4757 = vunpack.c.h.b16 %v4192
    %v4758 = vunpack.c.l.b16 %v4193
    %v4759 = vunpack.c.h.b16 %v4193
    %v4760 = vunpack.c.l.b16 %v4194
    %v4761 = vunpack.c.h.b16 %v4194
    %v4762 = vunpack.c.l.b16 %v4195
    %v4763 = vunpack.c.h.b16 %v4195
    %v4764 = vunpack.c.l.b16 %v4196
    %v4765 = vunpack.c.h.b16 %v4196
    %v4766 = vunpack.c.l.b16 %v4197
    %v4767 = vunpack.c.h.b16 %v4197
    %v4768 = vunpack.c.l.b16 %v4198
    %v4769 = vunpack.c.h.b16 %v4198
    %v4770 = vunpack.c.l.b16 %v4199
    %v4771 = vunpack.c.h.b16 %v4199
    %v4772 = vunpack.c.l.b16 %v4200
    %v4773 = vunpack.c.h.b16 %v4200
    %v4774 = vunpack.c.l.b16 %v4201
    %v4775 = vunpack.c.h.b16 %v4201
    %v4776 = vunpack.c.l.b16 %v4202
    %v4777 = vunpack.c.h.b16 %v4202
    %v4778 = vunpack.c.l.b16 %v4203
    %v4779 = vunpack.c.h.b16 %v4203
    %v4780 = vunpack.c.l.b16 %v4204
    %v4781 = vunpack.c.h.b16 %v4204
    %v4782 = vunpack.c.l.b16 %v4205
    %v4783 = vunpack.c.h.b16 %v4205
    %v4784 = vunpack.c.l.b16 %v4206
    %v4785 = vunpack.c.h.b16 %v4206
    %v4786 = vunpack.c.l.b16 %v4207
    %v4787 = vunpack.c.h.b16 %v4207
    %v4788 = vunpack.c.l.b16 %v4208
    %v4789 = vunpack.c.h.b16 %v4208
    %v4790 = vunpack.c.l.b16 %v4209
    %v4791 = vunpack.c.h.b16 %v4209
    %v4792 = vunpack.c.l.b16 %v4210
    %v4793 = vunpack.c.h.b16 %v4210
    %v4794 = vunpack.c.l.b16 %v4211
    %v4795 = vunpack.c.h.b16 %v4211
    %v4796 = vunpack.c.l.b16 %v4212
    %v4797 = vunpack.c.h.b16 %v4212
    %v4798 = vunpack.c.l.b16 %v4213
    %v4799 = vunpack.c.h.b16 %v4213
    %v4800 = vunpack.c.l.b16 %v4214
    %v4801 = vunpack.c.h.b16 %v4214
    %v4802 = vunpack.c.l.b16 %v4215
    %v4803 = vunpack.c.h.b16 %v4215
    %v4804 = vunpack.c.l.b16 %v4216
    %v4805 = vunpack.c.h.b16 %v4216
    %v4806 = vunpack.c.l.b16 %v4217
    %v4807 = vunpack.c.h.b16 %v4217
    %v4808 = vunpack.c.l.b16 %v4218
    %v4809 = vunpack.c.h.b16 %v4218
    %v4810 = vunpack.c.l.b16 %v4219
    %v4811 = vunpack.c.h.b16 %v4219
    %v4812 = vunpack.c.l.b16 %v4220
    %v4813 = vunpack.c.h.b16 %v4220
    %v4814 = vunpack.c.l.b16 %v4221
    %v4815 = vunpack.c.h.b16 %v4221
    %v4816 = vunpack.c.l.b16 %v4222
    %v4817 = vunpack.c.h.b16 %v4222
    %v4818 = vunpack.c.l.b16 %v4223
    %v4819 = vunpack.c.h.b16 %v4223
    %v4820 = vunpack.c.l.b16 %v4224
    %v4821 = vunpack.c.h.b16 %v4224
    %v4822 = vunpack.c.l.b16 %v4225
    %v4823 = vunpack.c.h.b16 %v4225
    %v4824 = vunpack.c.l.b16 %v4226
    %v4825 = vunpack.c.h.b16 %v4226
    %v4826 = vunpack.c.l.b16 %v4227
    %v4827 = vunpack.c.h.b16 %v4227
    %v4828 = vunpack.c.l.b16 %v4228
    %v4829 = vunpack.c.h.b16 %v4228
    %v4830 = vunpack.c.l.b16 %v4229
    %v4831 = vunpack.c.h.b16 %v4229
    %v4832 = vunpack.c.l.b16 %v4230
    %v4833 = vunpack.c.h.b16 %v4230
    %v4834 = vunpack.c.l.b16 %v4231
    %v4835 = vunpack.c.h.b16 %v4231
    %v4836 = vunpack.c.l.b16 %v4232
    %v4837 = vunpack.c.h.b16 %v4232
    %v4838 = vunpack.c.l.b16 %v4233
    %v4839 = vunpack.c.h.b16 %v4233
    %v4840 = vunpack.c.l.b16 %v4234
    %v4841 = vunpack.c.h.b16 %v4234
    %v4842 = vunpack.c.l.b16 %v4235
    %v4843 = vunpack.c.h.b16 %v4235
    %v4844 = vunpack.c.l.b16 %v4236
    %v4845 = vunpack.c.h.b16 %v4236
    %v4846 = vunpack.c.l.b16 %v4237
    %v4847 = vunpack.c.h.b16 %v4237
    %v4848 = vunpack.c.l.b16 %v4238
    %v4849 = vunpack.c.h.b16 %v4238
    %v4850 = vunpack.c.l.b16 %v4239
    %v4851 = vunpack.c.h.b16 %v4239
    %v4852 = vunpack.c.l.b16 %v4240
    %v4853 = vunpack.c.h.b16 %v4240
    %v4854 = vunpack.c.l.b16 %v4241
    %v4855 = vunpack.c.h.b16 %v4241
    %v4856 = vunpack.c.l.b16 %v4242
    %v4857 = vunpack.c.h.b16 %v4242
    %v4858 = vunpack.c.l.b16 %v4243
    %v4859 = vunpack.c.h.b16 %v4243
    %v4860 = vunpack.c.l.b16 %v4244
    %v4861 = vunpack.c.h.b16 %v4244
    %v4862 = vunpack.c.l.b16 %v4245
    %v4863 = vunpack.c.h.b16 %v4245
    %v4864 = vunpack.c.l.b16 %v4246
    %v4865 = vunpack.c.h.b16 %v4246
    %v4866 = vunpack.c.l.b16 %v4247
    %v4867 = vunpack.c.h.b16 %v4247
    %v4868 = vunpack.c.l.b16 %v4248
    %v4869 = vunpack.c.h.b16 %v4248
    %v4870 = vunpack.c.l.b16 %v4249
    %v4871 = vunpack.c.h.b16 %v4249
    %v4872 = vunpack.c.l.b16 %v4250
    %v4873 = vunpack.c.h.b16 %v4250
    %v4874 = vunpack.c.l.b16 %v4251
    %v4875 = vunpack.c.h.b16 %v4251
    %v4876 = vunpack.c.l.b16 %v4252
    %v4877 = vunpack.c.h.b16 %v4252
    %v4878 = vunpack.c.l.b16 %v4253
    %v4879 = vunpack.c.h.b16 %v4253
    %v4880 = vunpack.c.l.b16 %v4254
    %v4881 = vunpack.c.h.b16 %v4254
    %v4882 = vunpack.c.l.b16 %v4255
    %v4883 = vunpack.c.h.b16 %v4255
    %v4884 = vunpack.c.l.b16 %v4256
    %v4885 = vunpack.c.h.b16 %v4256
    %v4886 = vunpack.c.l.b16 %v4257
    %v4887 = vunpack.c.h.b16 %v4257
    %v4888 = vunpack.c.l.b16 %v4258
    %v4889 = vunpack.c.h.b16 %v4258
    %v4890 = vunpack.c.l.b16 %v4259
    %v4891 = vunpack.c.h.b16 %v4259
    %v4892 = vunpack.c.l.b16 %v4260
    %v4893 = vunpack.c.h.b16 %v4260
    %v4894 = vunpack.c.l.b16 %v4261
    %v4895 = vunpack.c.h.b16 %v4261
    %v4896 = vunpack.c.l.b16 %v4262
    %v4897 = vunpack.c.h.b16 %v4262
    %v4898 = vunpack.c.l.b16 %v4263
    %v4899 = vunpack.c.h.b16 %v4263
    %v4900 = vunpack.c.l.b16 %v4264
    %v4901 = vunpack.c.h.b16 %v4264
    %v4902 = vunpack.c.l.b16 %v4265
    %v4903 = vunpack.c.h.b16 %v4265
    %v4904 = vunpack.c.l.b16 %v4266
    %v4905 = vunpack.c.h.b16 %v4266
    %v4906 = vunpack.c.l.b16 %v4267
    %v4907 = vunpack.c.h.b16 %v4267
    %v4908 = vunpack.c.l.b16 %v4268
    %v4909 = vunpack.c.h.b16 %v4268
    %v4910 = vunpack.c.l.b16 %v4269
    %v4911 = vunpack.c.h.b16 %v4269
    %v4912 = vunpack.c.l.b16 %v4270
    %v4913 = vunpack.c.h.b16 %v4270
    %v4914 = vunpack.c.l.b16 %v4271
    %v4915 = vunpack.c.h.b16 %v4271
    %v4916 = vunpack.c.l.b16 %v4272
    %v4917 = vunpack.c.h.b16 %v4272
    %v4918 = vunpack.c.l.b16 %v4273
    %v4919 = vunpack.c.h.b16 %v4273
    %v4920 = vunpack.c.l.b16 %v4274
    %v4921 = vunpack.c.h.b16 %v4274
    %v4922 = vunpack.c.l.b16 %v4275
    %v4923 = vunpack.c.h.b16 %v4275
    %v4924 = vunpack.c.l.b16 %v4276
    %v4925 = vunpack.c.h.b16 %v4276
    %v4926 = vunpack.c.l.b16 %v4277
    %v4927 = vunpack.c.h.b16 %v4277
    %v4928 = vunpack.c.l.b16 %v4278
    %v4929 = vunpack.c.h.b16 %v4278
    %v4930 = vunpack.c.l.b16 %v4279
    %v4931 = vunpack.c.h.b16 %v4279
    %v4932 = vunpack.c.l.b16 %v4280
    %v4933 = vunpack.c.h.b16 %v4280
    %v4934 = vunpack.c.l.b16 %v4281
    %v4935 = vunpack.c.h.b16 %v4281
    %v4936 = vunpack.c.l.b16 %v4282
    %v4937 = vunpack.c.h.b16 %v4282
    %v4938 = vunpack.c.l.b16 %v4283
    %v4939 = vunpack.c.h.b16 %v4283
    %v4940 = vunpack.c.l.b16 %v4284
    %v4941 = vunpack.c.h.b16 %v4284
    %v4942 = vunpack.c.l.b16 %v4285
    %v4943 = vunpack.c.h.b16 %v4285
    %v4944 = vunpack.c.l.b16 %v4286
    %v4945 = vunpack.c.h.b16 %v4286
    %v4946 = vunpack.c.l.b16 %v4287
    %v4947 = vunpack.c.h.b16 %v4287
    %v4948 = vunpack.c.l.b16 %v4288
    %v4949 = vunpack.c.h.b16 %v4288
    %v4950 = vunpack.c.l.b16 %v4289
    %v4951 = vunpack.c.h.b16 %v4289
    %v4952 = vunpack.c.l.b16 %v4290
    %v4953 = vunpack.c.h.b16 %v4290
    %v4954 = vunpack.c.l.b16 %v4291
    %v4955 = vunpack.c.h.b16 %v4291
    %v4956 = vunpack.c.l.b16 %v4292
    %v4957 = vunpack.c.h.b16 %v4292
    %v4958 = vunpack.c.l.b16 %v4293
    %v4959 = vunpack.c.h.b16 %v4293
    %v4960 = vunpack.c.l.b16 %v4294
    %v4961 = vunpack.c.h.b16 %v4294
    %v4962 = vunpack.c.l.b16 %v4295
    %v4963 = vunpack.c.h.b16 %v4295
    %v4964 = vunpack.c.l.b16 %v4296
    %v4965 = vunpack.c.h.b16 %v4296
    %v4966 = vunpack.c.l.b16 %v4297
    %v4967 = vunpack.c.h.b16 %v4297
    %v4968 = vunpack.c.l.b16 %v4298
    %v4969 = vunpack.c.h.b16 %v4298
    %v4970 = vunpack.c.l.b16 %v4299
    %v4971 = vunpack.c.h.b16 %v4299
    %v4972 = vunpack.c.l.b16 %v4300
    %v4973 = vunpack.c.h.b16 %v4300
    %v4974 = vunpack.c.l.b16 %v4301
    %v4975 = vunpack.c.h.b16 %v4301
    %v4976 = vunpack.c.l.b16 %v4302
    %v4977 = vunpack.c.h.b16 %v4302
    %v4978 = vunpack.c.l.b16 %v4303
    %v4979 = vunpack.c.h.b16 %v4303
    %v4980 = vunpack.c.l.b16 %v4304
    %v4981 = vunpack.c.h.b16 %v4304
    %v4982 = vunpack.c.l.b16 %v4305
    %v4983 = vunpack.c.h.b16 %v4305
    %v4984 = vunpack.c.l.b16 %v4306
    %v4985 = vunpack.c.h.b16 %v4306
    %v4986 = vunpack.c.l.b16 %v4307
    %v4987 = vunpack.c.h.b16 %v4307
    %v4988 = vunpack.c.l.b16 %v4308
    %v4989 = vunpack.c.h.b16 %v4308
    %v4990 = vunpack.c.l.b16 %v4309
    %v4991 = vunpack.c.h.b16 %v4309
    %v4992 = vunpack.c.l.b16 %v4310
    %v4993 = vunpack.c.h.b16 %v4310
    %v4994 = vunpack.c.l.b16 %v4311
    %v4995 = vunpack.c.h.b16 %v4311
    %v4996 = vunpack.c.l.b16 %v4312
    %v4997 = vunpack.c.h.b16 %v4312
    %v4998 = vunpack.c.l.b16 %v4313
    %v4999 = vunpack.c.h.b16 %v4313
    %v5000 = vunpack.c.l.b16 %v4314
    %v5001 = vunpack.c.h.b16 %v4314
    %v5002 = vunpack.c.l.b16 %v4315
    %v5003 = vunpack.c.h.b16 %v4315
    %v5004 = vunpack.c.l.b16 %v4316
    %v5005 = vunpack.c.h.b16 %v4316
    %v5006 = vunpack.c.l.b16 %v4317
    %v5007 = vunpack.c.h.b16 %v4317
    %v5008 = vunpack.c.l.b16 %v4318
    %v5009 = vunpack.c.h.b16 %v4318
    %v5010 = vunpack.c.l.b16 %v4319
    %v5011 = vunpack.c.h.b16 %v4319
    %v5012 = vunpack.c.l.b16 %v4320
    %v5013 = vunpack.c.h.b16 %v4320
    %v5014 = vunpack.c.l.b16 %v4321
    %v5015 = vunpack.c.h.b16 %v4321
    %v5016 = vunpack.c.l.b16 %v4322
    %v5017 = vunpack.c.h.b16 %v4322
    %v5018 = vunpack.c.l.b16 %v4323
    %v5019 = vunpack.c.h.b16 %v4323
    %v5020 = vunpack.c.l.b16 %v4324
    %v5021 = vunpack.c.h.b16 %v4324
    %v5022 = vunpack.c.l.b16 %v4325
    %v5023 = vunpack.c.h.b16 %v4325
    %v5024 = vunpack.c.l.b16 %v4326
    %v5025 = vunpack.c.h.b16 %v4326
    %v5026 = vunpack.c.l.b16 %v4327
    %v5027 = vunpack.c.h.b16 %v4327
    %v5028 = vunpack.c.l.b16 %v4328
    %v5029 = vunpack.c.h.b16 %v4328
    %v5030 = vunpack.c.l.b16 %v4329
    %v5031 = vunpack.c.h.b16 %v4329
    %v5032 = vunpack.c.l.b16 %v4330
    %v5033 = vunpack.c.h.b16 %v4330
    %v5034 = vunpack.c.l.b16 %v4331
    %v5035 = vunpack.c.h.b16 %v4331
    %v5036 = vunpack.c.l.b16 %v4332
    %v5037 = vunpack.c.h.b16 %v4332
    %v5038 = vunpack.c.l.b16 %v4333
    %v5039 = vunpack.c.h.b16 %v4333
    %v5040 = vunpack.c.l.b16 %v4334
    %v5041 = vunpack.c.h.b16 %v4334
    %v5042 = vunpack.c.l.b16 %v4335
    %v5043 = vunpack.c.h.b16 %v4335
    %v5044 = vunpack.c.l.b16 %v4336
    %v5045 = vunpack.c.h.b16 %v4336
    %v5046 = vunpack.c.l.b16 %v4337
    %v5047 = vunpack.c.h.b16 %v4337
    %v5048 = vunpack.c.l.b16 %v4338
    %v5049 = vunpack.c.h.b16 %v4338
    %v5050 = vunpack.c.l.b16 %v4339
    %v5051 = vunpack.c.h.b16 %v4339
    %v5052 = vunpack.c.l.b16 %v4340
    %v5053 = vunpack.c.h.b16 %v4340
    %v5054 = vunpack.c.l.b16 %v4341
    %v5055 = vunpack.c.h.b16 %v4341
    %v5056 = vunpack.c.l.b16 %v4342
    %v5057 = vunpack.c.h.b16 %v4342
    %v5058 = vunpack.c.l.b16 %v4343
    %v5059 = vunpack.c.h.b16 %v4343
    %v5060 = vunpack.c.l.b16 %v4344
    %v5061 = vunpack.c.h.b16 %v4344
    %v5062 = vunpack.c.l.b16 %v4345
    %v5063 = vunpack.c.h.b16 %v4345
    %v5064 = vunpack.c.l.b16 %v4346
    %v5065 = vunpack.c.h.b16 %v4346
    %v5066 = vunpack.c.l.b16 %v4347
    %v5067 = vunpack.c.h.b16 %v4347
    %v5068 = vunpack.c.l.b16 %v4348
    %v5069 = vunpack.c.h.b16 %v4348
    %v5070 = vunpack.c.l.b16 %v4349
    %v5071 = vunpack.c.h.b16 %v4349
    %v5072 = vunpack.c.l.b16 %v4350
    %v5073 = vunpack.c.h.b16 %v4350
    %v5074 = vunpack.c.l.b16 %v4351
    %v5075 = vunpack.c.h.b16 %v4351
    %v5076 = vunpack.c.l.b16 %v4352
    %v5077 = vunpack.c.h.b16 %v4352
    %v5078 = vunpack.c.l.b16 %v4353
    %v5079 = vunpack.c.h.b16 %v4353
    %v5080 = vunpack.c.l.b16 %v4354
    %v5081 = vunpack.c.h.b16 %v4354
    %v5082 = vunpack.c.l.b16 %v4355
    %v5083 = vunpack.c.h.b16 %v4355
    %v5084 = vunpack.c.l.b16 %v4356
    %v5085 = vunpack.c.h.b16 %v4356
    %v5086 = vunpack.c.l.b16 %v4357
    %v5087 = vunpack.c.h.b16 %v4357
    %v5088 = vunpack.c.l.b16 %v4358
    %v5089 = vunpack.c.h.b16 %v4358
    %v5090 = vunpack.c.l.b16 %v4359
    %v5091 = vunpack.c.h.b16 %v4359
    %v5092 = vunpack.c.l.b16 %v4360
    %v5093 = vunpack.c.h.b16 %v4360
    %v5094 = vunpack.c.l.b16 %v4361
    %v5095 = vunpack.c.h.b16 %v4361
    %v5096 = vunpack.c.l.b16 %v4362
    %v5097 = vunpack.c.h.b16 %v4362
    %v5098 = vunpack.c.l.b16 %v4363
    %v5099 = vunpack.c.h.b16 %v4363
    %v5100 = vunpack.c.l.b16 %v4364
    %v5101 = vunpack.c.h.b16 %v4364
    %v5102 = vunpack.c.l.b16 %v4365
    %v5103 = vunpack.c.h.b16 %v4365
    %v5104 = vunpack.c.l.b16 %v4366
    %v5105 = vunpack.c.h.b16 %v4366
    %v5106 = vunpack.c.l.b16 %v4367
    %v5107 = vunpack.c.h.b16 %v4367
    %v5108 = vunpack.c.l.b16 %v4368
    %v5109 = vunpack.c.h.b16 %v4368
    %v5110 = vunpack.c.l.b16 %v4369
    %v5111 = vunpack.c.h.b16 %v4369
    %v5112 = vunpack.c.l.b16 %v4370
    %v5113 = vunpack.c.h.b16 %v4370
    %v5114 = vunpack.c.l.b16 %v4371
    %v5115 = vunpack.c.h.b16 %v4371
    %v5116 = vunpack.c.l.b16 %v4372
    %v5117 = vunpack.c.h.b16 %v4372
    %v5118 = vunpack.c.l.b16 %v4373
    %v5119 = vunpack.c.h.b16 %v4373
    %v5120 = vunpack.c.l.b16 %v4374
    %v5121 = vunpack.c.h.b16 %v4374
    %v5122 = vunpack.c.l.b16 %v4375
    %v5123 = vunpack.c.h.b16 %v4375
    %v5124 = vunpack.c.l.b16 %v4376
    %v5125 = vunpack.c.h.b16 %v4376
    %v5126 = vunpack.c.l.b16 %v4377
    %v5127 = vunpack.c.h.b16 %v4377
    %v5128 = vunpack.c.l.b16 %v4378
    %v5129 = vunpack.c.h.b16 %v4378
    %v5130 = vunpack.c.l.b16 %v4379
    %v5131 = vunpack.c.h.b16 %v4379
    %v5132 = vunpack.c.l.b16 %v4380
    %v5133 = vunpack.c.h.b16 %v4380
    %v5134 = vunpack.c.l.b16 %v4381
    %v5135 = vunpack.c.h.b16 %v4381
    %v5136 = vunpack.c.l.b16 %v4382
    %v5137 = vunpack.c.h.b16 %v4382
    %v5138 = vunpack.c.l.b16 %v4383
    %v5139 = vunpack.c.h.b16 %v4383
    %v5140 = vunpack.c.l.b16 %v4384
    %v5141 = vunpack.c.h.b16 %v4384
    %v5142 = vunpack.c.l.b16 %v4385
    %v5143 = vunpack.c.h.b16 %v4385
    %v5144 = vunpack.c.l.b16 %v4386
    %v5145 = vunpack.c.h.b16 %v4386
    %v5146 = vunpack.c.l.b16 %v4387
    %v5147 = vunpack.c.h.b16 %v4387
    %v5148 = vunpack.c.l.b16 %v4388
    %v5149 = vunpack.c.h.b16 %v4388
    %v5150 = vunpack.c.l.b16 %v4389
    %v5151 = vunpack.c.h.b16 %v4389
    %v5152 = vunpack.c.l.b16 %v4390
    %v5153 = vunpack.c.h.b16 %v4390
    %v5154 = vunpack.c.l.b16 %v4391
    %v5155 = vunpack.c.h.b16 %v4391
    %v5156 = vunpack.c.l.b16 %v4392
    %v5157 = vunpack.c.h.b16 %v4392
    %v5158 = vunpack.c.l.b16 %v4393
    %v5159 = vunpack.c.h.b16 %v4393
    %v5160 = vunpack.c.l.b16 %v4394
    %v5161 = vunpack.c.h.b16 %v4394
    %v5162 = vunpack.c.l.b16 %v4395
    %v5163 = vunpack.c.h.b16 %v4395
    %v5164 = vunpack.c.l.b16 %v4396
    %v5165 = vunpack.c.h.b16 %v4396
    %v5166 = vunpack.c.l.b16 %v4397
    %v5167 = vunpack.c.h.b16 %v4397
    %v5168 = vunpack.c.l.b16 %v4398
    %v5169 = vunpack.c.h.b16 %v4398
    %v5170 = vunpack.c.l.b16 %v4399
    %v5171 = vunpack.c.h.b16 %v4399
    %v5172 = vunpack.c.l.b16 %v4400
    %v5173 = vunpack.c.h.b16 %v4400
    %v5174 = vunpack.c.l.b16 %v4401
    %v5175 = vunpack.c.h.b16 %v4401
    %v5176 = vunpack.c.l.b16 %v4402
    %v5177 = vunpack.c.h.b16 %v4402
    %v5178 = vunpack.c.l.b16 %v4403
    %v5179 = vunpack.c.h.b16 %v4403
    %v5180 = vunpack.c.l.b16 %v4404
    %v5181 = vunpack.c.h.b16 %v4404
    %v5182 = vunpack.c.l.b16 %v4405
    %v5183 = vunpack.c.h.b16 %v4405
    %v5184 = vunpack.c.l.b16 %v4406
    %v5185 = vunpack.c.h.b16 %v4406
    %v5186 = vunpack.c.l.b16 %v4407
    %v5187 = vunpack.c.h.b16 %v4407
    %v5188 = vunpack.c.l.b16 %v4408
    %v5189 = vunpack.c.h.b16 %v4408
    %v5190 = vunpack.c.l.b16 %v4409
    %v5191 = vunpack.c.h.b16 %v4409
    %v5192 = vunpack.c.l.b16 %v4410
    %v5193 = vunpack.c.h.b16 %v4410
    %v5194 = vunpack.c.l.b16 %v4411
    %v5195 = vunpack.c.h.b16 %v4411
    %v5196 = vunpack.c.l.b16 %v4412
    %v5197 = vunpack.c.h.b16 %v4412
    %v5198 = vunpack.c.l.b16 %v4413
    %v5199 = vunpack.c.h.b16 %v4413
    %v5200 = vunpack.c.l.b16 %v4414
    %v5201 = vunpack.c.h.b16 %v4414
    %v5202 = vunpack.c.l.b16 %v4415
    %v5203 = vunpack.c.h.b16 %v4415
    %v5204 = vunpack.c.l.b16 %v4416
    %v5205 = vunpack.c.h.b16 %v4416
    %v5206 = vunpack.c.l.b16 %v4417
    %v5207 = vunpack.c.h.b16 %v4417
    %v5208 = vpack.c.b16 %v4700, %v4696
    %v5209 = vpack.c.b16 %v4701, %v4697
    %v5210 = vpack.c.b16 %v4702, %v4698
    %v5211 = vpack.c.b16 %v4703, %v4699
    %v5212 = vpack.c.b16 %v4708, %v4704
    %v5213 = vpack.c.b16 %v4709, %v4705
    %v5214 = vpack.c.b16 %v4710, %v4706
    %v5215 = vpack.c.b16 %v4711, %v4707
    %v5216 = vpack.c.b16 %v4716, %v4712
    %v5217 = vpack.c.b16 %v4717, %v4713
    %v5218 = vpack.c.b16 %v4718, %v4714
    %v5219 = vpack.c.b16 %v4719, %v4715
    %v5220 = vpack.c.b16 %v4724, %v4720
    %v5221 = vpack.c.b16 %v4725, %v4721
    %v5222 = vpack.c.b16 %v4726, %v4722
    %v5223 = vpack.c.b16 %v4727, %v4723
    %v5224 = vpack.c.b16 %v4732, %v4728
    %v5225 = vpack.c.b16 %v4733, %v4729
    %v5226 = vpack.c.b16 %v4734, %v4730
    %v5227 = vpack.c.b16 %v4735, %v4731
    %v5228 = vpack.c.b16 %v4740, %v4736
    %v5229 = vpack.c.b16 %v4741, %v4737
    %v5230 = vpack.c.b16 %v4742, %v4738
    %v5231 = vpack.c.b16 %v4743, %v4739
    %v5232 = vpack.c.b16 %v4748, %v4744
    %v5233 = vpack.c.b16 %v4749, %v4745
    %v5234 = vpack.c.b16 %v4750, %v4746
    %v5235 = vpack.c.b16 %v4751, %v4747
    %v5236 = vpack.c.b16 %v4756, %v4752
    %v5237 = vpack.c.b16 %v4757, %v4753
    %v5238 = vpack.c.b16 %v4758, %v4754
    %v5239 = vpack.c.b16 %v4759, %v4755
    %v5240 = vpack.c.b16 %v4764, %v4760
    %v5241 = vpack.c.b16 %v4765, %v4761
    %v5242 = vpack.c.b16 %v4766, %v4762
    %v5243 = vpack.c.b16 %v4767, %v4763
    %v5244 = vpack.c.b16 %v4772, %v4768
    %v5245 = vpack.c.b16 %v4773, %v4769
    %v5246 = vpack.c.b16 %v4774, %v4770
    %v5247 = vpack.c.b16 %v4775, %v4771
    %v5248 = vpack.c.b16 %v4780, %v4776
    %v5249 = vpack.c.b16 %v4781, %v4777
    %v5250 = vpack.c.b16 %v4782, %v4778
    %v5251 = vpack.c.b16 %v4783, %v4779
    %v5252 = vpack.c.b16 %v4788, %v4784
    %v5253 = vpack.c.b16 %v4789, %v4785
    %v5254 = vpack.c.b16 %v4790, %v4786
    %v5255 = vpack.c.b16 %v4791, %v4787
    %v5256 = vpack.c.b16 %v4796, %v4792
    %v5257 = vpack.c.b16 %v4797, %v4793
    %v5258 = vpack.c.b16 %v4798, %v4794
    %v5259 = vpack.c.b16 %v4799, %v4795
    %v5260 = vpack.c.b16 %v4804, %v4800
    %v5261 = vpack.c.b16 %v4805, %v4801
    %v5262 = vpack.c.b16 %v4806, %v4802
    %v5263 = vpack.c.b16 %v4807, %v4803
    %v5264 = vpack.c.b16 %v4812, %v4808
    %v5265 = vpack.c.b16 %v4813, %v4809
    %v5266 = vpack.c.b16 %v4814, %v4810
    %v5267 = vpack.c.b16 %v4815, %v4811
    %v5268 = vpack.c.b16 %v4820, %v4816
    %v5269 = vpack.c.b16 %v4821, %v4817
    %v5270 = vpack.c.b16 %v4822, %v4818
    %v5271 = vpack.c.b16 %v4823, %v4819
    %v5272 = vpack.c.b16 %v4828, %v4824
    %v5273 = vpack.c.b16 %v4829, %v4825
    %v5274 = vpack.c.b16 %v4830, %v4826
    %v5275 = vpack.c.b16 %v4831, %v4827
    %v5276 = vpack.c.b16 %v4836, %v4832
    %v5277 = vpack.c.b16 %v4837, %v4833
    %v5278 = vpack.c.b16 %v4838, %v4834
    %v5279 = vpack.c.b16 %v4839, %v4835
    %v5280 = vpack.c.b16 %v4844, %v4840
    %v5281 = vpack.c.b16 %v4845, %v4841
    %v5282 = vpack.c.b16 %v4846, %v4842
    %v5283 = vpack.c.b16 %v4847, %v4843
    %v5284 = vpack.c.b16 %v4852, %v4848
    %v5285 = vpack.c.b16 %v4853, %v4849
    %v5286 = vpack.c.b16 %v4854, %v4850
    %v5287 = vpack.c.b16 %v4855, %v4851
    %v5288 = vpack.c.b16 %v4860, %v4856
    %v5289 = vpack.c.b16 %v4861, %v4857
    %v5290 = vpack.c.b16 %v4862, %v4858
    %v5291 = vpack.c.b16 %v4863, %v4859
    %v5292 = vpack.c.b16 %v4868, %v4864
    %v5293 = vpack.c.b16 %v4869, %v4865
    %v5294 = vpack.c.b16 %v4870, %v4866
    %v5295 = vpack.c.b16 %v4871, %v4867
    %v5296 = vpack.c.b16 %v4876, %v4872
    %v5297 = vpack.c.b16 %v4877, %v4873
    %v5298 = vpack.c.b16 %v4878, %v4874
    %v5299 = vpack.c.b16 %v4879, %v4875
    %v5300 = vpack.c.b16 %v4884, %v4880
    %v5301 = vpack.c.b16 %v4885, %v4881
    %v5302 = vpack.c.b16 %v4886, %v4882
    %v5303 = vpack.c.b16 %v4887, %v4883
    %v5304 = vpack.c.b16 %v4892, %v4888
    %v5305 = vpack.c.b16 %v4893, %v4889
    %v5306 = vpack.c.b16 %v4894, %v4890
    %v5307 = vpack.c.b16 %v4895, %v4891
    %v5308 = vpack.c.b16 %v4900, %v4896
    %v5309 = vpack.c.b16 %v4901, %v4897
    %v5310 = vpack.c.b16 %v4902, %v4898
    %v5311 = vpack.c.b16 %v4903, %v4899
    %v5312 = vpack.c.b16 %v4908, %v4904
    %v5313 = vpack.c.b16 %v4909, %v4905
    %v5314 = vpack.c.b16 %v4910, %v4906
    %v5315 = vpack.c.b16 %v4911, %v4907
    %v5316 = vpack.c.b16 %v4916, %v4912
    %v5317 = vpack.c.b16 %v4917, %v4913
    %v5318 = vpack.c.b16 %v4918, %v4914
    %v5319 = vpack.c.b16 %v4919, %v4915
    %v5320 = vpack.c.b16 %v4924, %v4920
    %v5321 = vpack.c.b16 %v4925, %v4921
    %v5322 = vpack.c.b16 %v4926, %v4922
    %v5323 = vpack.c.b16 %v4927, %v4923
    %v5324 = vpack.c.b16 %v4932, %v4928
    %v5325 = vpack.c.b16 %v4933, %v4929
    %v5326 = vpack.c.b16 %v4934, %v4930
    %v5327 = vpack.c.b16 %v4935, %v4931
    %v5328 = vpack.c.b16 %v4940, %v4936
    %v5329 = vpack.c.b16 %v4941, %v4937
    %v5330 = vpack.c.b16 %v4942, %v4938
    %v5331 = vpack.c.b16 %v4943, %v4939
    %v5332 = vpack.c.b16 %v4948, %v4944
    %v5333 = vpack.c.b16 %v4949, %v4945
    %v5334 = vpack.c.b16 %v4950, %v4946
    %v5335 = vpack.c.b16 %v4951, %v4947
    %v5336 = vpack.c.b16 %v4956, %v4952
    %v5337 = vpack.c.b16 %v4957, %v4953
    %v5338 = vpack.c.b16 %v4958, %v4954
    %v5339 = vpack.c.b16 %v4959, %v4955
    %v5340 = vpack.c.b16 %v4964, %v4960
    %v5341 = vpack.c.b16 %v4965, %v4961
    %v5342 = vpack.c.b16 %v4966, %v4962
    %v5343 = vpack.c.b16 %v4967, %v4963
    %v5344 = vpack.c.b16 %v4972, %v4968
    %v5345 = vpack.c.b16 %v4973, %v4969
    %v5346 = vpack.c.b16 %v4974, %v4970
    %v5347 = vpack.c.b16 %v4975, %v4971
    %v5348 = vpack.c.b16 %v4980, %v4976
    %v5349 = vpack.c.b16 %v4981, %v4977
    %v5350 = vpack.c.b16 %v4982, %v4978
    %v5351 = vpack.c.b16 %v4983, %v4979
    %v5352 = vpack.c.b16 %v4988, %v4984
    %v5353 = vpack.c.b16 %v4989, %v4985
    %v5354 = vpack.c.b16 %v4990, %v4986
    %v5355 = vpack.c.b16 %v4991, %v4987
    %v5356 = vpack.c.b16 %v4996, %v4992
    %v5357 = vpack.c.b16 %v4997, %v4993
    %v5358 = vpack.c.b16 %v4998, %v4994
    %v5359 = vpack.c.b16 %v4999, %v4995
    %v5360 = vpack.c.b16 %v5004, %v5000
    %v5361 = vpack.c.b16 %v5005, %v5001
    %v5362 = vpack.c.b16 %v5006, %v5002
    %v5363 = vpack.c.b16 %v5007, %v5003
    %v5364 = vpack.c.b16 %v5012, %v5008
    %v5365 = vpack.c.b16 %v5013, %v5009
    %v5366 = vpack.c.b16 %v5014, %v5010
    %v5367 = vpack.c.b16 %v5015, %v5011
    %v5368 = vpack.c.b16 %v5020, %v5016
    %v5369 = vpack.c.b16 %v5021, %v5017
    %v5370 = vpack.c.b16 %v5022, %v5018
    %v5371 = vpack.c.b16 %v5023, %v5019
    %v5372 = vpack.c.b16 %v5028, %v5024
    %v5373 = vpack.c.b16 %v5029, %v5025
    %v5374 = vpack.c.b16 %v5030, %v5026
    %v5375 = vpack.c.b16 %v5031, %v5027
    %v5376 = vpack.c.b16 %v5036, %v5032
    %v5377 = vpack.c.b16 %v5037, %v5033
    %v5378 = vpack.c.b16 %v5038, %v5034
    %v5379 = vpack.c.b16 %v5039, %v5035
    %v5380 = vpack.c.b16 %v5044, %v5040
    %v5381 = vpack.c.b16 %v5045, %v5041
    %v5382 = vpack.c.b16 %v5046, %v5042
    %v5383 = vpack.c.b16 %v5047, %v5043
    %v5384 = vpack.c.b16 %v5052, %v5048
    %v5385 = vpack.c.b16 %v5053, %v5049
    %v5386 = vpack.c.b16 %v5054, %v5050
    %v5387 = vpack.c.b16 %v5055, %v5051
    %v5388 = vpack.c.b16 %v5060, %v5056
    %v5389 = vpack.c.b16 %v5061, %v5057
    %v5390 = vpack.c.b16 %v5062, %v5058
    %v5391 = vpack.c.b16 %v5063, %v5059
    %v5392 = vpack.c.b16 %v5068, %v5064
    %v5393 = vpack.c.b16 %v5069, %v5065
    %v5394 = vpack.c.b16 %v5070, %v5066
    %v5395 = vpack.c.b16 %v5071, %v5067
    %v5396 = vpack.c.b16 %v5076, %v5072
    %v5397 = vpack.c.b16 %v5077, %v5073
    %v5398 = vpack.c.b16 %v5078, %v5074
    %v5399 = vpack.c.b16 %v5079, %v5075
    %v5400 = vpack.c.b16 %v5084, %v5080
    %v5401 = vpack.c.b16 %v5085, %v5081
    %v5402 = vpack.c.b16 %v5086, %v5082
    %v5403 = vpack.c.b16 %v5087, %v5083
    %v5404 = vpack.c.b16 %v5092, %v5088
    %v5405 = vpack.c.b16 %v5093, %v5089
    %v5406 = vpack.c.b16 %v5094, %v5090
    %v5407 = vpack.c.b16 %v5095, %v5091
    %v5408 = vpack.c.b16 %v5100, %v5096
    %v5409 = vpack.c.b16 %v5101, %v5097
    %v5410 = vpack.c.b16 %v5102, %v5098
    %v5411 = vpack.c.b16 %v5103, %v5099
    %v5412 = vpack.c.b16 %v5108, %v5104
    %v5413 = vpack.c.b16 %v5109, %v5105
    %v5414 = vpack.c.b16 %v5110, %v5106
    %v5415 = vpack.c.b16 %v5111, %v5107
    %v5416 = vpack.c.b16 %v5116, %v5112
    %v5417 = vpack.c.b16 %v5117, %v5113
    %v5418 = vpack.c.b16 %v5118, %v5114
    %v5419 = vpack.c.b16 %v5119, %v5115
    %v5420 = vpack.c.b16 %v5124, %v5120
    %v5421 = vpack.c.b16 %v5125, %v5121
    %v5422 = vpack.c.b16 %v5126, %v5122
    %v5423 = vpack.c.b16 %v5127, %v5123
    %v5424 = vpack.c.b16 %v5132, %v5128
    %v5425 = vpack.c.b16 %v5133, %v5129
    %v5426 = vpack.c.b16 %v5134, %v5130
    %v5427 = vpack.c.b16 %v5135, %v5131
    %v5428 = vpack.c.b16 %v5140, %v5136
    %v5429 = vpack.c.b16 %v5141, %v5137
    %v5430 = vpack.c.b16 %v5142, %v5138
    %v5431 = vpack.c.b16 %v5143, %v5139
    %v5432 = vpack.c.b16 %v5148, %v5144
    %v5433 = vpack.c.b16 %v5149, %v5145
    %v5434 = vpack.c.b16 %v5150, %v5146
    %v5435 = vpack.c.b16 %v5151, %v5147
    %v5436 = vpack.c.b16 %v5156, %v5152
    %v5437 = vpack.c.b16 %v5157, %v5153
    %v5438 = vpack.c.b16 %v5158, %v5154
    %v5439 = vpack.c.b16 %v5159, %v5155
    %v5440 = vpack.c.b16 %v5164, %v5160
    %v5441 = vpack.c.b16 %v5165, %v5161
    %v5442 = vpack.c.b16 %v5166, %v5162
    %v5443 = vpack.c.b16 %v5167, %v5163
    %v5444 = vpack.c.b16 %v5172, %v5168
    %v5445 = vpack.c.b16 %v5173, %v5169
    %v5446 = vpack.c.b16 %v5174, %v5170
    %v5447 = vpack.c.b16 %v5175, %v5171
    %v5448 = vpack.c.b16 %v5180, %v5176
    %v5449 = vpack.c.b16 %v5181, %v5177
    %v5450 = vpack.c.b16 %v5182, %v5178
    %v5451 = vpack.c.b16 %v5183, %v5179
    %v5452 = vpack.c.b16 %v5188, %v5184
    %v5453 = vpack.c.b16 %v5189, %v5185
    %v5454 = vpack.c.b16 %v5190, %v5186
    %v5455 = vpack.c.b16 %v5191, %v5187
    %v5456 = vpack.c.b16 %v5196, %v5192
    %v5457 = vpack.c.b16 %v5197, %v5193
    %v5458 = vpack.c.b16 %v5198, %v5194
    %v5459 = vpack.c.b16 %v5199, %v5195
    %v5460 = vpack.c.b16 %v5204, %v5200
    %v5461 = vpack.c.b16 %v5205, %v5201
    %v5462 = vpack.c.b16 %v5206, %v5202
    %v5463 = vpack.c.b16 %v5207, %v5203
    %5720 = vmatprep.subr.bf16.mxu0 %v5209
    %5721 = vmatpush1.bf16.msra.mxu0 %v5208
    %5722 = vmatprep.subr.bf16.mxu0 %v5213
    %5723 = vmatpush1.bf16.msra.mxu0 %v5212
    %5724 = vmatprep.subr.bf16.mxu0 %v5217
    %5725 = vmatpush1.bf16.msra.mxu0 %v5216
    %5726 = vmatprep.subr.bf16.mxu0 %v5221
    %5727 = vmatpush1.bf16.msra.mxu0 %v5220
    %5728 = vmatprep.subr.bf16.mxu0 %v5225
    %5729 = vmatpush1.bf16.msra.mxu0 %v5224
    %5730 = vmatprep.subr.bf16.mxu0 %v5229
    %5731 = vmatpush1.bf16.msra.mxu0 %v5228
    %5732 = vmatprep.subr.bf16.mxu0 %v5233
    %5733 = vmatpush1.bf16.msra.mxu0 %v5232
    %5734 = vmatprep.subr.bf16.mxu0 %v5237
    %5735 = vmatpush1.bf16.msra.mxu0 %v5236
    %5736 = vmatprep.subr.bf16.mxu0 %v5241
    %5737 = vmatpush1.bf16.msra.mxu0 %v5240
    %5738 = vmatprep.subr.bf16.mxu0 %v5245
    %5739 = vmatpush1.bf16.msra.mxu0 %v5244
    %5740 = vmatprep.subr.bf16.mxu0 %v5249
    %5741 = vmatpush1.bf16.msra.mxu0 %v5248
    %5742 = vmatprep.subr.bf16.mxu0 %v5253
    %5743 = vmatpush1.bf16.msra.mxu0 %v5252
    %5744 = vmatprep.subr.bf16.mxu0 %v5257
    %5745 = vmatpush1.bf16.msra.mxu0 %v5256
    %5746 = vmatprep.subr.bf16.mxu0 %v5261
    %5747 = vmatpush1.bf16.msra.mxu0 %v5260
    %5748 = vmatprep.subr.bf16.mxu0 %v5265
    %5749 = vmatpush1.bf16.msra.mxu0 %v5264
    %5750 = vmatprep.subr.bf16.mxu0 %v5269
    %5751 = vmatpush1.bf16.msra.mxu0 %v5268
    %5752 = vmatprep.mubr.bf16.mxu0 %v4155
    %5753 = vmatmul.mubr.bf16.gmra.mrb[0].mxu0 %v4154
    %v5754 = vpop.f32.mrb[0].mxu0
    %v5755 = vadd.f32 %v4423, %v5754
    %v5756 = vpop.f32.mrb[0].mxu0
    %v5757 = vadd.f32 %v4427, %v5756
    %v5758 = vpop.f32.mrb[0].mxu0
    %v5759 = vadd.f32 %v4423, %v5758
    %v5760 = vpop.f32.mrb[0].mxu0
    %v5761 = vadd.f32 %v4427, %v5760
    %5762 = vdwg.mxu0
    %5763 = vmatprep.subr.bf16.mxu0 %v5273
    %5764 = vmatpush1.bf16.msra.mxu0 %v5272
    %5765 = vmatprep.subr.bf16.mxu0 %v5277
    %5766 = vmatpush1.bf16.msra.mxu0 %v5276
    %5767 = vmatprep.subr.bf16.mxu0 %v5281
    %5768 = vmatpush1.bf16.msra.mxu0 %v5280
    %5769 = vmatprep.subr.bf16.mxu0 %v5285
    %5770 = vmatpush1.bf16.msra.mxu0 %v5284
    %5771 = vmatprep.subr.bf16.mxu0 %v5289
    %5772 = vmatpush1.bf16.msra.mxu0 %v5288
    %5773 = vmatprep.subr.bf16.mxu0 %v5293
    %5774 = vmatpush1.bf16.msra.mxu0 %v5292
    %5775 = vmatprep.subr.bf16.mxu0 %v5297
    %5776 = vmatpush1.bf16.msra.mxu0 %v5296
    %5777 = vmatprep.subr.bf16.mxu0 %v5301
    %5778 = vmatpush1.bf16.msra.mxu0 %v5300
    %5779 = vmatprep.subr.bf16.mxu0 %v5305
    %5780 = vmatpush1.bf16.msra.mxu0 %v5304
    %5781 = vmatprep.subr.bf16.mxu0 %v5309
    %5782 = vmatpush1.bf16.msra.mxu0 %v5308
    %5783 = vmatprep.subr.bf16.mxu0 %v5313
    %5784 = vmatpush1.bf16.msra.mxu0 %v5312
    %5785 = vmatprep.subr.bf16.mxu0 %v5317
    %5786 = vmatpush1.bf16.msra.mxu0 %v5316
    %5787 = vmatprep.subr.bf16.mxu0 %v5321
    %5788 = vmatpush1.bf16.msra.mxu0 %v5320
    %5789 = vmatprep.subr.bf16.mxu0 %v5325
    %5790 = vmatpush1.bf16.msra.mxu0 %v5324
    %5791 = vmatprep.subr.bf16.mxu0 %v5329
    %5792 = vmatpush1.bf16.msra.mxu0 %v5328
    %5793 = vmatprep.subr.bf16.mxu0 %v5333
    %5794 = vmatpush1.bf16.msra.mxu0 %v5332
    %5795 = vmatprep.mubr.bf16.mxu0 %v4157
    %5796 = vmatmul.mubr.bf16.gmra.mrb[0].mxu0 %v4156
    %v5797 = vpop.f32.mrb[0].mxu0
    %v5798 = vadd.f32 %v5755, %v5797
    %v5799 = vpop.f32.mrb[0].mxu0
    %v5800 = vadd.f32 %v5757, %v5799
    %v5801 = vpop.f32.mrb[0].mxu0
    %v5802 = vadd.f32 %v5759, %v5801
    %v5803 = vpop.f32.mrb[0].mxu0
    %v5804 = vadd.f32 %v5761, %v5803
    %5805 = vdwg.mxu0
    %5806 = vmatprep.subr.bf16.mxu0 %v5337
    %5807 = vmatpush1.bf16.msra.mxu0 %v5336
    %5808 = vmatprep.subr.bf16.mxu0 %v5341
    %5809 = vmatpush1.bf16.msra.mxu0 %v5340
    %5810 = vmatprep.subr.bf16.mxu0 %v5345
    %5811 = vmatpush1.bf16.msra.mxu0 %v5344
    %5812 = vmatprep.subr.bf16.mxu0 %v5349
    %5813 = vmatpush1.bf16.msra.mxu0 %v5348
    %5814 = vmatprep.subr.bf16.mxu0 %v5353
    %5815 = vmatpush1.bf16.msra.mxu0 %v5352
    %5816 = vmatprep.subr.bf16.mxu0 %v5357
    %5817 = vmatpush1.bf16.msra.mxu0 %v5356
    %5818 = vmatprep.subr.bf16.mxu0 %v5361
    %5819 = vmatpush1.bf16.msra.mxu0 %v5360
    %5820 = vmatprep.subr.bf16.mxu0 %v5365
    %5821 = vmatpush1.bf16.msra.mxu0 %v5364
    %5822 = vmatprep.subr.bf16.mxu0 %v5369
    %5823 = vmatpush1.bf16.msra.mxu0 %v5368
    %5824 = vmatprep.subr.bf16.mxu0 %v5373
    %5825 = vmatpush1.bf16.msra.mxu0 %v5372
    %5826 = vmatprep.subr.bf16.mxu0 %v5377
    %5827 = vmatpush1.bf16.msra.mxu0 %v5376
    %5828 = vmatprep.subr.bf16.mxu0 %v5381
    %5829 = vmatpush1.bf16.msra.mxu0 %v5380
    %5830 = vmatprep.subr.bf16.mxu0 %v5385
    %5831 = vmatpush1.bf16.msra.mxu0 %v5384
    %5832 = vmatprep.subr.bf16.mxu0 %v5389
    %5833 = vmatpush1.bf16.msra.mxu0 %v5388
    %5834 = vmatprep.subr.bf16.mxu0 %v5393
    %5835 = vmatpush1.bf16.msra.mxu0 %v5392
    %5836 = vmatprep.subr.bf16.mxu0 %v5397
    %5837 = vmatpush1.bf16.msra.mxu0 %v5396
    %5838 = vmatprep.mubr.bf16.mxu0 %v4159
    %5839 = vmatmul.mubr.bf16.gmra.mrb[0].mxu0 %v4158
    %v5840 = vpop.f32.mrb[0].mxu0
    %v5841 = vadd.f32 %v5798, %v5840
    %v5842 = vpop.f32.mrb[0].mxu0
    %v5843 = vadd.f32 %v5800, %v5842
    %v5844 = vpop.f32.mrb[0].mxu0
    %v5845 = vadd.f32 %v5802, %v5844
    %v5846 = vpop.f32.mrb[0].mxu0
    %v5847 = vadd.f32 %v5804, %v5846
    %5848 = vdwg.mxu0
    %5849 = vmatprep.subr.bf16.mxu0 %v5401
    %5850 = vmatpush1.bf16.msra.mxu0 %v5400
    %5851 = vmatprep.subr.bf16.mxu0 %v5405
    %5852 = vmatpush1.bf16.msra.mxu0 %v5404
    %5853 = vmatprep.subr.bf16.mxu0 %v5409
    %5854 = vmatpush1.bf16.msra.mxu0 %v5408
    %5855 = vmatprep.subr.bf16.mxu0 %v5413
    %5856 = vmatpush1.bf16.msra.mxu0 %v5412
    %5857 = vmatprep.subr.bf16.mxu0 %v5417
    %5858 = vmatpush1.bf16.msra.mxu0 %v5416
    %5859 = vmatprep.subr.bf16.mxu0 %v5421
    %5860 = vmatpush1.bf16.msra.mxu0 %v5420
    %5861 = vmatprep.subr.bf16.mxu0 %v5425
    %5862 = vmatpush1.bf16.msra.mxu0 %v5424
    %5863 = vmatprep.subr.bf16.mxu0 %v5429
    %5864 = vmatpush1.bf16.msra.mxu0 %v5428
    %5865 = vmatprep.subr.bf16.mxu0 %v5433
    %5866 = vmatpush1.bf16.msra.mxu0 %v5432
    %5867 = vmatprep.subr.bf16.mxu0 %v5437
    %5868 = vmatpush1.bf16.msra.mxu0 %v5436
    %5869 = vmatprep.subr.bf16.mxu0 %v5441
    %5870 = vmatpush1.bf16.msra.mxu0 %v5440
    %5871 = vmatprep.subr.bf16.mxu0 %v5445
    %5872 = vmatpush1.bf16.msra.mxu0 %v5444
    %5873 = vmatprep.subr.bf16.mxu0 %v5449
    %5874 = vmatpush1.bf16.msra.mxu0 %v5448
    %5875 = vmatprep.subr.bf16.mxu0 %v5453
    %5876 = vmatpush1.bf16.msra.mxu0 %v5452
    %5877 = vmatprep.subr.bf16.mxu0 %v5457
    %5878 = vmatpush1.bf16.msra.mxu0 %v5456
    %5879 = vmatprep.subr.bf16.mxu0 %v5461
    %5880 = vmatpush1.bf16.msra.mxu0 %v5460
    %5881 = vmatprep.mubr.bf16.mxu0 %v4161
    %5882 = vmatmul.mubr.bf16.gmra.mrb[0].mxu0 %v4160
    %v5883 = vpop.f32.mrb[0].mxu0
    %v5884 = vadd.f32 %v5841, %v5883
    %v5885 = vpop.f32.mrb[0].mxu0
    %v5886 = vadd.f32 %v5843, %v5885
    %v5887 = vpop.f32.mrb[0].mxu0
    %v5888 = vadd.f32 %v5845, %v5887
    %v5889 = vpop.f32.mrb[0].mxu0
    %v5890 = vadd.f32 %v5847, %v5889
    %5891 = vdwg.mxu0
    %5892 = vmatprep.subr.bf16.mxu0 %v5211
    %5893 = vmatpush1.bf16.msra.mxu0 %v5210
    %5894 = vmatprep.subr.bf16.mxu0 %v5215
    %5895 = vmatpush1.bf16.msra.mxu0 %v5214
    %5896 = vmatprep.subr.bf16.mxu0 %v5219
    %5897 = vmatpush1.bf16.msra.mxu0 %v5218
    %5898 = vmatprep.subr.bf16.mxu0 %v5223
    %5899 = vmatpush1.bf16.msra.mxu0 %v5222
    %5900 = vmatprep.subr.bf16.mxu0 %v5227
    %5901 = vmatpush1.bf16.msra.mxu0 %v5226
    %5902 = vmatprep.subr.bf16.mxu0 %v5231
    %5903 = vmatpush1.bf16.msra.mxu0 %v5230
    %5904 = vmatprep.subr.bf16.mxu0 %v5235
    %5905 = vmatpush1.bf16.msra.mxu0 %v5234
    %5906 = vmatprep.subr.bf16.mxu0 %v5239
    %5907 = vmatpush1.bf16.msra.mxu0 %v5238
    %5908 = vmatprep.subr.bf16.mxu0 %v5243
    %5909 = vmatpush1.bf16.msra.mxu0 %v5242
    %5910 = vmatprep.subr.bf16.mxu0 %v5247
    %5911 = vmatpush1.bf16.msra.mxu0 %v5246
    %5912 = vmatprep.subr.bf16.mxu0 %v5251
    %5913 = vmatpush1.bf16.msra.mxu0 %v5250
    %5914 = vmatprep.subr.bf16.mxu0 %v5255
    %5915 = vmatpush1.bf16.msra.mxu0 %v5254
    %5916 = vmatprep.subr.bf16.mxu0 %v5259
    %5917 = vmatpush1.bf16.msra.mxu0 %v5258
    %5918 = vmatprep.subr.bf16.mxu0 %v5263
    %5919 = vmatpush1.bf16.msra.mxu0 %v5262
    %5920 = vmatprep.subr.bf16.mxu0 %v5267
    %5921 = vmatpush1.bf16.msra.mxu0 %v5266
    %5922 = vmatprep.subr.bf16.mxu0 %v5271
    %5923 = vmatpush1.bf16.msra.mxu0 %v5270
    %5924 = vmatprep.mubr.bf16.mxu0 %v4155
    %5925 = vmatmul.mubr.bf16.gmra.mrb[0].mxu0 %v4154
    %v5926 = vpop.f32.mrb[0].mxu0
    %v5927 = vadd.f32 %v4431, %v5926
    %v5928 = vpop.f32.mrb[0].mxu0
    %v5929 = vadd.f32 %v4435, %v5928
    %v5930 = vpop.f32.mrb[0].mxu0
    %v5931 = vadd.f32 %v4431, %v5930
    %v5932 = vpop.f32.mrb[0].mxu0
    %v5933 = vadd.f32 %v4435, %v5932
    %5934 = vdwg.mxu0
    %5935 = vmatprep.subr.bf16.mxu0 %v5275
    %5936 = vmatpush1.bf16.msra.mxu0 %v5274
    %5937 = vmatprep.subr.bf16.mxu0 %v5279
    %5938 = vmatpush1.bf16.msra.mxu0 %v5278
    %5939 = vmatprep.subr.bf16.mxu0 %v5283
    %5940 = vmatpush1.bf16.msra.mxu0 %v5282
    %5941 = vmatprep.subr.bf16.mxu0 %v5287
    %5942 = vmatpush1.bf16.msra.mxu0 %v5286
    %5943 = vmatprep.subr.bf16.mxu0 %v5291
    %5944 = vmatpush1.bf16.msra.mxu0 %v5290
    %5945 = vmatprep.subr.bf16.mxu0 %v5295
    %5946 = vmatpush1.bf16.msra.mxu0 %v5294
    %5947 = vmatprep.subr.bf16.mxu0 %v5299
    %5948 = vmatpush1.bf16.msra.mxu0 %v5298
    %5949 = vmatprep.subr.bf16.mxu0 %v5303
    %5950 = vmatpush1.bf16.msra.mxu0 %v5302
    %5951 = vmatprep.subr.bf16.mxu0 %v5307
    %5952 = vmatpush1.bf16.msra.mxu0 %v5306
    %5953 = vmatprep.subr.bf16.mxu0 %v5311
    %5954 = vmatpush1.bf16.msra.mxu0 %v5310
    %5955 = vmatprep.subr.bf16.mxu0 %v5315
    %5956 = vmatpush1.bf16.msra.mxu0 %v5314
    %5957 = vmatprep.subr.bf16.mxu0 %v5319
    %5958 = vmatpush1.bf16.msra.mxu0 %v5318
    %5959 = vmatprep.subr.bf16.mxu0 %v5323
    %5960 = vmatpush1.bf16.msra.mxu0 %v5322
    %5961 = vmatprep.subr.bf16.mxu0 %v5327
    %5962 = vmatpush1.bf16.msra.mxu0 %v5326
    %5963 = vmatprep.subr.bf16.mxu0 %v5331
    %5964 = vmatpush1.bf16.msra.mxu0 %v5330
    %5965 = vmatprep.subr.bf16.mxu0 %v5335
    %5966 = vmatpush1.bf16.msra.mxu0 %v5334
    %5967 = vmatprep.mubr.bf16.mxu0 %v4157
    %5968 = vmatmul.mubr.bf16.gmra.mrb[0].mxu0 %v4156
    %v5969 = vpop.f32.mrb[0].mxu0
    %v5970 = vadd.f32 %v5927, %v5969
    %v5971 = vpop.f32.mrb[0].mxu0
    %v5972 = vadd.f32 %v5929, %v5971
    %v5973 = vpop.f32.mrb[0].mxu0
    %v5974 = vadd.f32 %v5931, %v5973
    %v5975 = vpop.f32.mrb[0].mxu0
    %v5976 = vadd.f32 %v5933, %v5975
    %5977 = vdwg.mxu0
    %5978 = vmatprep.subr.bf16.mxu0 %v5339
    %5979 = vmatpush1.bf16.msra.mxu0 %v5338
    %5980 = vmatprep.subr.bf16.mxu0 %v5343
    %5981 = vmatpush1.bf16.msra.mxu0 %v5342
    %5982 = vmatprep.subr.bf16.mxu0 %v5347
    %5983 = vmatpush1.bf16.msra.mxu0 %v5346
    %5984 = vmatprep.subr.bf16.mxu0 %v5351
    %5985 = vmatpush1.bf16.msra.mxu0 %v5350
    %5986 = vmatprep.subr.bf16.mxu0 %v5355
    %5987 = vmatpush1.bf16.msra.mxu0 %v5354
    %5988 = vmatprep.subr.bf16.mxu0 %v5359
    %5989 = vmatpush1.bf16.msra.mxu0 %v5358
    %5990 = vmatprep.subr.bf16.mxu0 %v5363
    %5991 = vmatpush1.bf16.msra.mxu0 %v5362
    %5992 = vmatprep.subr.bf16.mxu0 %v5367
    %5993 = vmatpush1.bf16.msra.mxu0 %v5366
    %5994 = vmatprep.subr.bf16.mxu0 %v5371
    %5995 = vmatpush1.bf16.msra.mxu0 %v5370
    %5996 = vmatprep.subr.bf16.mxu0 %v5375
    %5997 = vmatpush1.bf16.msra.mxu0 %v5374
    %5998 = vmatprep.subr.bf16.mxu0 %v5379
    %5999 = vmatpush1.bf16.msra.mxu0 %v5378
    %6000 = vmatprep.subr.bf16.mxu0 %v5383
    %6001 = vmatpush1.bf16.msra.mxu0 %v5382
    %6002 = vmatprep.subr.bf16.mxu0 %v5387
    %6003 = vmatpush1.bf16.msra.mxu0 %v5386
    %6004 = vmatprep.subr.bf16.mxu0 %v5391
    %6005 = vmatpush1.bf16.msra.mxu0 %v5390
    %6006 = vmatprep.subr.bf16.mxu0 %v5395
    %6007 = vmatpush1.bf16.msra.mxu0 %v5394
    %6008 = vmatprep.subr.bf16.mxu0 %v5399
    %6009 = vmatpush1.bf16.msra.mxu0 %v5398
    %6010 = vmatprep.mubr.bf16.mxu0 %v4159
    %6011 = vmatmul.mubr.bf16.gmra.mrb[0].mxu0 %v4158
    %v6012 = vpop.f32.mrb[0].mxu0
    %v6013 = vadd.f32 %v5970, %v6012
    %v6014 = vpop.f32.mrb[0].mxu0
    %v6015 = vadd.f32 %v5972, %v6014
    %v6016 = vpop.f32.mrb[0].mxu0
    %v6017 = vadd.f32 %v5974, %v6016
    %v6018 = vpop.f32.mrb[0].mxu0
    %v6019 = vadd.f32 %v5976, %v6018
    %6020 = vdwg.mxu0
    %6021 = vmatprep.subr.bf16.mxu0 %v5403
    %6022 = vmatpush1.bf16.msra.mxu0 %v5402
    %6023 = vmatprep.subr.bf16.mxu0 %v5407
    %6024 = vmatpush1.bf16.msra.mxu0 %v5406
    %6025 = vmatprep.subr.bf16.mxu0 %v5411
    %6026 = vmatpush1.bf16.msra.mxu0 %v5410
    %6027 = vmatprep.subr.bf16.mxu0 %v5415
    %6028 = vmatpush1.bf16.msra.mxu0 %v5414
    %6029 = vmatprep.subr.bf16.mxu0 %v5419
    %6030 = vmatpush1.bf16.msra.mxu0 %v5418
    %6031 = vmatprep.subr.bf16.mxu0 %v5423
    %6032 = vmatpush1.bf16.msra.mxu0 %v5422
    %6033 = vmatprep.subr.bf16.mxu0 %v5427
    %6034 = vmatpush1.bf16.msra.mxu0 %v5426
    %6035 = vmatprep.subr.bf16.mxu0 %v5431
    %6036 = vmatpush1.bf16.msra.mxu0 %v5430
    %6037 = vmatprep.subr.bf16.mxu0 %v5435
    %6038 = vmatpush1.bf16.msra.mxu0 %v5434
    %6039 = vmatprep.subr.bf16.mxu0 %v5439
    %6040 = vmatpush1.bf16.msra.mxu0 %v5438
    %6041 = vmatprep.subr.bf16.mxu0 %v5443
    %6042 = vmatpush1.bf16.msra.mxu0 %v5442
    %6043 = vmatprep.subr.bf16.mxu0 %v5447
    %6044 = vmatpush1.bf16.msra.mxu0 %v5446
    %6045 = vmatprep.subr.bf16.mxu0 %v5451
    %6046 = vmatpush1.bf16.msra.mxu0 %v5450
    %6047 = vmatprep.subr.bf16.mxu0 %v5455
    %6048 = vmatpush1.bf16.msra.mxu0 %v5454
    %6049 = vmatprep.subr.bf16.mxu0 %v5459
    %6050 = vmatpush1.bf16.msra.mxu0 %v5458
    %6051 = vmatprep.subr.bf16.mxu0 %v5463
    %6052 = vmatpush1.bf16.msra.mxu0 %v5462
    %6053 = vmatprep.mubr.bf16.mxu0 %v4161
    %6054 = vmatmul.mubr.bf16.gmra.mrb[0].mxu0 %v4160
    %v6055 = vpop.f32.mrb[0].mxu0
    %v6056 = vadd.f32 %v6013, %v6055
    %v6057 = vpop.f32.mrb[0].mxu0
    %v6058 = vadd.f32 %v6015, %v6057
    %v6059 = vpop.f32.mrb[0].mxu0
    %v6060 = vadd.f32 %v6017, %v6059
    %v6061 = vpop.f32.mrb[0].mxu0
    %v6062 = vadd.f32 %v6019, %v6061
    %6063 = vdwg.mxu0
    %v6064 = vpack.c.bf16 %v5888, %v5884
    %v6065 = vpack.c.bf16 %v5890, %v5886
    %v6066 = vpack.c.bf16 %v6060, %v6056
    %v6067 = vpack.c.bf16 %v6062, %v6058
    %vm6068 = vcmp.gt.bf16.partialorder %v6064, 0
    %vm6069 = vcmp.gt.bf16.partialorder %v6065, 0
    %vm6070 = vcmp.gt.bf16.partialorder %v6066, 0
    %vm6071 = vcmp.gt.bf16.partialorder %v6067, 0
    %v6072 = vmul.bf16 %v6064, 1045249613
    %v6073 = vmul.bf16 %v6065, 1045249613
    %v6074 = vmul.bf16 %v6066, 1045249613
    %v6075 = vmul.bf16 %v6067, 1045249613
    %v6076 = vsel %vm6068, %v6064, %v6072
    %v6077 = vsel %vm6069, %v6065, %v6073
    %v6078 = vsel %vm6070, %v6066, %v6074
    %v6079 = vsel %vm6071, %v6067, %v6075
    %v6080 = vld [vmem:[#allocation11] sm:$0xff]
    %v6081 = vld [vmem:[#allocation11 + $0x8] sm:$0xff]
    %v6082 = vld [vmem:[#allocation11 + $0x10] sm:$0xff]
    %v6083 = vld [vmem:[#allocation11 + $0x18] sm:$0xff]
    %v6084 = vld [vmem:[#allocation11 + $0x20] sm:$0xff]
    %v6085 = vld [vmem:[#allocation11 + $0x28] sm:$0xff]
    %v6086 = vld [vmem:[#allocation11 + $0x30] sm:$0xff]
    %v6087 = vld [vmem:[#allocation11 + $0x38] sm:$0xff]
    %v6088 = vld [vmem:[#allocation11 + $0x40] sm:$0xff]
    %v6089 = vld [vmem:[#allocation11 + $0x48] sm:$0xff]
    %v6090 = vld [vmem:[#allocation11 + $0x50] sm:$0xff]
    %v6091 = vld [vmem:[#allocation11 + $0x58] sm:$0xff]
    %v6092 = vld [vmem:[#allocation11 + $0x60] sm:$0xff]
    %v6093 = vld [vmem:[#allocation11 + $0x68] sm:$0xff]
    %v6094 = vld [vmem:[#allocation11 + $0x70] sm:$0xff]
    %v6095 = vld [vmem:[#allocation11 + $0x78] sm:$0xff]
    %v6096 = vld [vmem:[#allocation11 + $0x80] sm:$0xff]
    %v6097 = vld [vmem:[#allocation11 + $0x88] sm:$0xff]
    %v6098 = vld [vmem:[#allocation11 + $0x90] sm:$0xff]
    %v6099 = vld [vmem:[#allocation11 + $0x98] sm:$0xff]
    %v6100 = vld [vmem:[#allocation11 + $0xa0] sm:$0xff]
    %v6101 = vld [vmem:[#allocation11 + $0xa8] sm:$0xff]
    %v6102 = vld [vmem:[#allocation11 + $0xb0] sm:$0xff]
    %v6103 = vld [vmem:[#allocation11 + $0xb8] sm:$0xff]
    %v6104 = vld [vmem:[#allocation11 + $0xc0] sm:$0xff]
    %v6105 = vld [vmem:[#allocation11 + $0xc8] sm:$0xff]
    %v6106 = vld [vmem:[#allocation11 + $0xd0] sm:$0xff]
    %v6107 = vld [vmem:[#allocation11 + $0xd8] sm:$0xff]
    %v6108 = vld [vmem:[#allocation11 + $0xe0] sm:$0xff]
    %v6109 = vld [vmem:[#allocation11 + $0xe8] sm:$0xff]
    %v6110 = vld [vmem:[#allocation11 + $0xf0] sm:$0xff]
    %v6111 = vld [vmem:[#allocation11 + $0xf8] sm:$0xff]
    %v6112 = vld [vmem:[#allocation11 + $0x100] sm:$0xff]
    %v6113 = vld [vmem:[#allocation11 + $0x108] sm:$0xff]
    %v6114 = vld [vmem:[#allocation11 + $0x110] sm:$0xff]
    %v6115 = vld [vmem:[#allocation11 + $0x118] sm:$0xff]
    %v6116 = vld [vmem:[#allocation11 + $0x120] sm:$0xff]
    %v6117 = vld [vmem:[#allocation11 + $0x128] sm:$0xff]
    %v6118 = vld [vmem:[#allocation11 + $0x130] sm:$0xff]
    %v6119 = vld [vmem:[#allocation11 + $0x138] sm:$0xff]
    %v6120 = vld [vmem:[#allocation11 + $0x140] sm:$0xff]
    %v6121 = vld [vmem:[#allocation11 + $0x148] sm:$0xff]
    %v6122 = vld [vmem:[#allocation11 + $0x150] sm:$0xff]
    %v6123 = vld [vmem:[#allocation11 + $0x158] sm:$0xff]
    %v6124 = vld [vmem:[#allocation11 + $0x160] sm:$0xff]
    %v6125 = vld [vmem:[#allocation11 + $0x168] sm:$0xff]
    %v6126 = vld [vmem:[#allocation11 + $0x170] sm:$0xff]
    %v6127 = vld [vmem:[#allocation11 + $0x178] sm:$0xff]
    %v6128 = vld [vmem:[#allocation11 + $0x180] sm:$0xff]
    %v6129 = vld [vmem:[#allocation11 + $0x188] sm:$0xff]
    %v6130 = vld [vmem:[#allocation11 + $0x190] sm:$0xff]
    %v6131 = vld [vmem:[#allocation11 + $0x198] sm:$0xff]
    %v6132 = vld [vmem:[#allocation11 + $0x1a0] sm:$0xff]
    %v6133 = vld [vmem:[#allocation11 + $0x1a8] sm:$0xff]
    %v6134 = vld [vmem:[#allocation11 + $0x1b0] sm:$0xff]
    %v6135 = vld [vmem:[#allocation11 + $0x1b8] sm:$0xff]
    %v6136 = vld [vmem:[#allocation11 + $0x1c0] sm:$0xff]
    %v6137 = vld [vmem:[#allocation11 + $0x1c8] sm:$0xff]
    %v6138 = vld [vmem:[#allocation11 + $0x1d0] sm:$0xff]
    %v6139 = vld [vmem:[#allocation11 + $0x1d8] sm:$0xff]
    %v6140 = vld [vmem:[#allocation11 + $0x1e0] sm:$0xff]
    %v6141 = vld [vmem:[#allocation11 + $0x1e8] sm:$0xff]
    %v6142 = vld [vmem:[#allocation11 + $0x1f0] sm:$0xff]
    %v6143 = vld [vmem:[#allocation11 + $0x1f8] sm:$0xff]
    %v6144 = vld [vmem:[%s8] sm:$0x3]
    %v6146 = vlaneseq
    %v6147 = vshrl.u32 %v6146, 7
    %v6148 = vsub.s32 0, %v6147
    %v6149 = vrot.slane %v6144, %v6148
    %v6150 = vlaneseq
    %v6151 = vshrl.u32 %v6150, 7
    %v6152 = vsub.s32 1, %v6151
    %v6153 = vrot.slane %v6144, %v6152
    %v6220 = vunpack.c.l.b16 %v6080
    %v6221 = vunpack.c.h.b16 %v6080
    %v6222 = vunpack.c.l.b16 %v6081
    %v6223 = vunpack.c.h.b16 %v6081
    %v6224 = vunpack.c.l.b16 %v6082
    %v6225 = vunpack.c.h.b16 %v6082
    %v6226 = vunpack.c.l.b16 %v6083
    %v6227 = vunpack.c.h.b16 %v6083
    %v6228 = vunpack.c.l.b16 %v6084
    %v6229 = vunpack.c.h.b16 %v6084
    %v6230 = vunpack.c.l.b16 %v6085
    %v6231 = vunpack.c.h.b16 %v6085
    %v6232 = vunpack.c.l.b16 %v6086
    %v6233 = vunpack.c.h.b16 %v6086
    %v6234 = vunpack.c.l.b16 %v6087
    %v6235 = vunpack.c.h.b16 %v6087
    %v6236 = vunpack.c.l.b16 %v6088
    %v6237 = vunpack.c.h.b16 %v6088
    %v6238 = vunpack.c.l.b16 %v6089
    %v6239 = vunpack.c.h.b16 %v6089
    %v6240 = vunpack.c.l.b16 %v6090
    %v6241 = vunpack.c.h.b16 %v6090
    %v6242 = vunpack.c.l.b16 %v6091
    %v6243 = vunpack.c.h.b16 %v6091
    %v6244 = vunpack.c.l.b16 %v6092
    %v6245 = vunpack.c.h.b16 %v6092
    %v6246 = vunpack.c.l.b16 %v6093
    %v6247 = vunpack.c.h.b16 %v6093
    %v6248 = vunpack.c.l.b16 %v6094
    %v6249 = vunpack.c.h.b16 %v6094
    %v6250 = vunpack.c.l.b16 %v6095
    %v6251 = vunpack.c.h.b16 %v6095
    %v6252 = vunpack.c.l.b16 %v6096
    %v6253 = vunpack.c.h.b16 %v6096
    %v6254 = vunpack.c.l.b16 %v6097
    %v6255 = vunpack.c.h.b16 %v6097
    %v6256 = vunpack.c.l.b16 %v6098
    %v6257 = vunpack.c.h.b16 %v6098
    %v6258 = vunpack.c.l.b16 %v6099
    %v6259 = vunpack.c.h.b16 %v6099
    %v6260 = vunpack.c.l.b16 %v6100
    %v6261 = vunpack.c.h.b16 %v6100
    %v6262 = vunpack.c.l.b16 %v6101
    %v6263 = vunpack.c.h.b16 %v6101
    %v6264 = vunpack.c.l.b16 %v6102
    %v6265 = vunpack.c.h.b16 %v6102
    %v6266 = vunpack.c.l.b16 %v6103
    %v6267 = vunpack.c.h.b16 %v6103
    %v6268 = vunpack.c.l.b16 %v6104
    %v6269 = vunpack.c.h.b16 %v6104
    %v6270 = vunpack.c.l.b16 %v6105
    %v6271 = vunpack.c.h.b16 %v6105
    %v6272 = vunpack.c.l.b16 %v6106
    %v6273 = vunpack.c.h.b16 %v6106
    %v6274 = vunpack.c.l.b16 %v6107
    %v6275 = vunpack.c.h.b16 %v6107
    %v6276 = vunpack.c.l.b16 %v6108
    %v6277 = vunpack.c.h.b16 %v6108
    %v6278 = vunpack.c.l.b16 %v6109
    %v6279 = vunpack.c.h.b16 %v6109
    %v6280 = vunpack.c.l.b16 %v6110
    %v6281 = vunpack.c.h.b16 %v6110
    %v6282 = vunpack.c.l.b16 %v6111
    %v6283 = vunpack.c.h.b16 %v6111
    %v6284 = vunpack.c.l.b16 %v6112
    %v6285 = vunpack.c.h.b16 %v6112
    %v6286 = vunpack.c.l.b16 %v6113
    %v6287 = vunpack.c.h.b16 %v6113
    %v6288 = vunpack.c.l.b16 %v6114
    %v6289 = vunpack.c.h.b16 %v6114
    %v6290 = vunpack.c.l.b16 %v6115
    %v6291 = vunpack.c.h.b16 %v6115
    %v6292 = vunpack.c.l.b16 %v6116
    %v6293 = vunpack.c.h.b16 %v6116
    %v6294 = vunpack.c.l.b16 %v6117
    %v6295 = vunpack.c.h.b16 %v6117
    %v6296 = vunpack.c.l.b16 %v6118
    %v6297 = vunpack.c.h.b16 %v6118
    %v6298 = vunpack.c.l.b16 %v6119
    %v6299 = vunpack.c.h.b16 %v6119
    %v6300 = vunpack.c.l.b16 %v6120
    %v6301 = vunpack.c.h.b16 %v6120
    %v6302 = vunpack.c.l.b16 %v6121
    %v6303 = vunpack.c.h.b16 %v6121
    %v6304 = vunpack.c.l.b16 %v6122
    %v6305 = vunpack.c.h.b16 %v6122
    %v6306 = vunpack.c.l.b16 %v6123
    %v6307 = vunpack.c.h.b16 %v6123
    %v6308 = vunpack.c.l.b16 %v6124
    %v6309 = vunpack.c.h.b16 %v6124
    %v6310 = vunpack.c.l.b16 %v6125
    %v6311 = vunpack.c.h.b16 %v6125
    %v6312 = vunpack.c.l.b16 %v6126
    %v6313 = vunpack.c.h.b16 %v6126
    %v6314 = vunpack.c.l.b16 %v6127
    %v6315 = vunpack.c.h.b16 %v6127
    %v6316 = vunpack.c.l.b16 %v6128
    %v6317 = vunpack.c.h.b16 %v6128
    %v6318 = vunpack.c.l.b16 %v6129
    %v6319 = vunpack.c.h.b16 %v6129
    %v6320 = vunpack.c.l.b16 %v6130
    %v6321 = vunpack.c.h.b16 %v6130
    %v6322 = vunpack.c.l.b16 %v6131
    %v6323 = vunpack.c.h.b16 %v6131
    %v6324 = vunpack.c.l.b16 %v6132
    %v6325 = vunpack.c.h.b16 %v6132
    %v6326 = vunpack.c.l.b16 %v6133
    %v6327 = vunpack.c.h.b16 %v6133
    %v6328 = vunpack.c.l.b16 %v6134
    %v6329 = vunpack.c.h.b16 %v6134
    %v6330 = vunpack.c.l.b16 %v6135
    %v6331 = vunpack.c.h.b16 %v6135
    %v6332 = vunpack.c.l.b16 %v6136
    %v6333 = vunpack.c.h.b16 %v6136
    %v6334 = vunpack.c.l.b16 %v6137
    %v6335 = vunpack.c.h.b16 %v6137
    %v6336 = vunpack.c.l.b16 %v6138
    %v6337 = vunpack.c.h.b16 %v6138
    %v6338 = vunpack.c.l.b16 %v6139
    %v6339 = vunpack.c.h.b16 %v6139
    %v6340 = vunpack.c.l.b16 %v6140
    %v6341 = vunpack.c.h.b16 %v6140
    %v6342 = vunpack.c.l.b16 %v6141
    %v6343 = vunpack.c.h.b16 %v6141
    %v6344 = vunpack.c.l.b16 %v6142
    %v6345 = vunpack.c.h.b16 %v6142
    %v6346 = vunpack.c.l.b16 %v6143
    %v6347 = vunpack.c.h.b16 %v6143
    %v6348 = vpack.c.b16 %v6222, %v6220
    %v6349 = vpack.c.b16 %v6223, %v6221
    %v6350 = vpack.c.b16 %v6226, %v6224
    %v6351 = vpack.c.b16 %v6227, %v6225
    %v6352 = vpack.c.b16 %v6230, %v6228
    %v6353 = vpack.c.b16 %v6231, %v6229
    %v6354 = vpack.c.b16 %v6234, %v6232
    %v6355 = vpack.c.b16 %v6235, %v6233
    %v6356 = vpack.c.b16 %v6238, %v6236
    %v6357 = vpack.c.b16 %v6239, %v6237
    %v6358 = vpack.c.b16 %v6242, %v6240
    %v6359 = vpack.c.b16 %v6243, %v6241
    %v6360 = vpack.c.b16 %v6246, %v6244
    %v6361 = vpack.c.b16 %v6247, %v6245
    %v6362 = vpack.c.b16 %v6250, %v6248
    %v6363 = vpack.c.b16 %v6251, %v6249
    %v6364 = vpack.c.b16 %v6254, %v6252
    %v6365 = vpack.c.b16 %v6255, %v6253
    %v6366 = vpack.c.b16 %v6258, %v6256
    %v6367 = vpack.c.b16 %v6259, %v6257
    %v6368 = vpack.c.b16 %v6262, %v6260
    %v6369 = vpack.c.b16 %v6263, %v6261
    %v6370 = vpack.c.b16 %v6266, %v6264
    %v6371 = vpack.c.b16 %v6267, %v6265
    %v6372 = vpack.c.b16 %v6270, %v6268
    %v6373 = vpack.c.b16 %v6271, %v6269
    %v6374 = vpack.c.b16 %v6274, %v6272
    %v6375 = vpack.c.b16 %v6275, %v6273
    %v6376 = vpack.c.b16 %v6278, %v6276
    %v6377 = vpack.c.b16 %v6279, %v6277
    %v6378 = vpack.c.b16 %v6282, %v6280
    %v6379 = vpack.c.b16 %v6283, %v6281
    %v6380 = vpack.c.b16 %v6286, %v6284
    %v6381 = vpack.c.b16 %v6287, %v6285
    %v6382 = vpack.c.b16 %v6290, %v6288
    %v6383 = vpack.c.b16 %v6291, %v6289
    %v6384 = vpack.c.b16 %v6294, %v6292
    %v6385 = vpack.c.b16 %v6295, %v6293
    %v6386 = vpack.c.b16 %v6298, %v6296
    %v6387 = vpack.c.b16 %v6299, %v6297
    %v6388 = vpack.c.b16 %v6302, %v6300
    %v6389 = vpack.c.b16 %v6303, %v6301
    %v6390 = vpack.c.b16 %v6306, %v6304
    %v6391 = vpack.c.b16 %v6307, %v6305
    %v6392 = vpack.c.b16 %v6310, %v6308
    %v6393 = vpack.c.b16 %v6311, %v6309
    %v6394 = vpack.c.b16 %v6314, %v6312
    %v6395 = vpack.c.b16 %v6315, %v6313
    %v6396 = vpack.c.b16 %v6318, %v6316
    %v6397 = vpack.c.b16 %v6319, %v6317
    %v6398 = vpack.c.b16 %v6322, %v6320
    %v6399 = vpack.c.b16 %v6323, %v6321
    %v6400 = vpack.c.b16 %v6326, %v6324
    %v6401 = vpack.c.b16 %v6327, %v6325
    %v6402 = vpack.c.b16 %v6330, %v6328
    %v6403 = vpack.c.b16 %v6331, %v6329
    %v6404 = vpack.c.b16 %v6334, %v6332
    %v6405 = vpack.c.b16 %v6335, %v6333
    %v6406 = vpack.c.b16 %v6338, %v6336
    %v6407 = vpack.c.b16 %v6339, %v6337
    %v6408 = vpack.c.b16 %v6342, %v6340
    %v6409 = vpack.c.b16 %v6343, %v6341
    %v6410 = vpack.c.b16 %v6346, %v6344
    %v6411 = vpack.c.b16 %v6347, %v6345
    %6476 = vmatprep.subr.bf16.mxu0 %v6349
    %6477 = vmatpush1.bf16.msra.mxu0 %v6348
    %6478 = vmatprep.subr.bf16.mxu0 %v6351
    %6479 = vmatpush1.bf16.msra.mxu0 %v6350
    %6480 = vmatprep.subr.bf16.mxu0 %v6353
    %6481 = vmatpush1.bf16.msra.mxu0 %v6352
    %6482 = vmatprep.subr.bf16.mxu0 %v6355
    %6483 = vmatpush1.bf16.msra.mxu0 %v6354
    %6484 = vmatprep.subr.bf16.mxu0 %v6357
    %6485 = vmatpush1.bf16.msra.mxu0 %v6356
    %6486 = vmatprep.subr.bf16.mxu0 %v6359
    %6487 = vmatpush1.bf16.msra.mxu0 %v6358
    %6488 = vmatprep.subr.bf16.mxu0 %v6361
    %6489 = vmatpush1.bf16.msra.mxu0 %v6360
    %6490 = vmatprep.subr.bf16.mxu0 %v6363
    %6491 = vmatpush1.bf16.msra.mxu0 %v6362
    %6492 = vmatprep.subr.bf16.mxu0 %v6365
    %6493 = vmatpush1.bf16.msra.mxu0 %v6364
    %6494 = vmatprep.subr.bf16.mxu0 %v6367
    %6495 = vmatpush1.bf16.msra.mxu0 %v6366
    %6496 = vmatprep.subr.bf16.mxu0 %v6369
    %6497 = vmatpush1.bf16.msra.mxu0 %v6368
    %6498 = vmatprep.subr.bf16.mxu0 %v6371
    %6499 = vmatpush1.bf16.msra.mxu0 %v6370
    %6500 = vmatprep.subr.bf16.mxu0 %v6373
    %6501 = vmatpush1.bf16.msra.mxu0 %v6372
    %6502 = vmatprep.subr.bf16.mxu0 %v6375
    %6503 = vmatpush1.bf16.msra.mxu0 %v6374
    %6504 = vmatprep.subr.bf16.mxu0 %v6377
    %6505 = vmatpush1.bf16.msra.mxu0 %v6376
    %6506 = vmatprep.subr.bf16.mxu0 %v6379
    %6507 = vmatpush1.bf16.msra.mxu0 %v6378
    %6508 = vmatprep.mubr.bf16.mxu0 %v6077
    %6509 = vmatmul.mubr.bf16.gmra.mrb[0].mxu0 %v6076
    %v6510 = vpop.f32.mrb[0].mxu0
    %v6511 = vadd.f32 %v6149, %v6510
    %v6512 = vpop.f32.mrb[0].mxu0
    %v6513 = vadd.f32 %v6153, %v6512
    %v6514 = vpop.f32.mrb[0].mxu0
    %v6515 = vadd.f32 %v6149, %v6514
    %v6516 = vpop.f32.mrb[0].mxu0
    %v6517 = vadd.f32 %v6153, %v6516
    %6518 = vdwg.mxu0
    %6519 = vmatprep.subr.bf16.mxu0 %v6381
    %6520 = vmatpush1.bf16.msra.mxu0 %v6380
    %6521 = vmatprep.subr.bf16.mxu0 %v6383
    %6522 = vmatpush1.bf16.msra.mxu0 %v6382
    %6523 = vmatprep.subr.bf16.mxu0 %v6385
    %6524 = vmatpush1.bf16.msra.mxu0 %v6384
    %6525 = vmatprep.subr.bf16.mxu0 %v6387
    %6526 = vmatpush1.bf16.msra.mxu0 %v6386
    %6527 = vmatprep.subr.bf16.mxu0 %v6389
    %6528 = vmatpush1.bf16.msra.mxu0 %v6388
    %6529 = vmatprep.subr.bf16.mxu0 %v6391
    %6530 = vmatpush1.bf16.msra.mxu0 %v6390
    %6531 = vmatprep.subr.bf16.mxu0 %v6393
    %6532 = vmatpush1.bf16.msra.mxu0 %v6392
    %6533 = vmatprep.subr.bf16.mxu0 %v6395
    %6534 = vmatpush1.bf16.msra.mxu0 %v6394
    %6535 = vmatprep.subr.bf16.mxu0 %v6397
    %6536 = vmatpush1.bf16.msra.mxu0 %v6396
    %6537 = vmatprep.subr.bf16.mxu0 %v6399
    %6538 = vmatpush1.bf16.msra.mxu0 %v6398
    %6539 = vmatprep.subr.bf16.mxu0 %v6401
    %6540 = vmatpush1.bf16.msra.mxu0 %v6400
    %6541 = vmatprep.subr.bf16.mxu0 %v6403
    %6542 = vmatpush1.bf16.msra.mxu0 %v6402
    %6543 = vmatprep.subr.bf16.mxu0 %v6405
    %6544 = vmatpush1.bf16.msra.mxu0 %v6404
    %6545 = vmatprep.subr.bf16.mxu0 %v6407
    %6546 = vmatpush1.bf16.msra.mxu0 %v6406
    %6547 = vmatprep.subr.bf16.mxu0 %v6409
    %6548 = vmatpush1.bf16.msra.mxu0 %v6408
    %6549 = vmatprep.subr.bf16.mxu0 %v6411
    %6550 = vmatpush1.bf16.msra.mxu0 %v6410
    %6551 = vmatprep.mubr.bf16.mxu0 %v6079
    %6552 = vmatmul.mubr.bf16.gmra.mrb[0].mxu0 %v6078
    %v6553 = vpop.f32.mrb[0].mxu0
    %v6554 = vadd.f32 %v6511, %v6553
    %v6555 = vpop.f32.mrb[0].mxu0
    %v6556 = vadd.f32 %v6513, %v6555
    %v6557 = vpop.f32.mrb[0].mxu0
    %v6558 = vadd.f32 %v6515, %v6557
    %v6559 = vpop.f32.mrb[0].mxu0
    %v6560 = vadd.f32 %v6517, %v6559
    %6561 = vdwg.mxu0
    %v6562 = vpack.c.bf16 %v6558, %v6554
    %v6563 = vpack.c.bf16 %v6560, %v6556
    %vm6564 = vcmp.gt.bf16.partialorder %v6562, 0
    %vm6565 = vcmp.gt.bf16.partialorder %v6563, 0
    %v6566 = vmul.bf16 %v6562, 1045249613
    %v6567 = vmul.bf16 %v6563, 1045249613
    %v6568 = vsel %vm6564, %v6562, %v6566
    %v6569 = vsel %vm6565, %v6563, %v6567
    %v6570 = vld [vmem:[#allocation13] sm:$0xf]
    %v6571 = vld [vmem:[#allocation13 + $0x4] sm:$0xf]
    %v6572 = vld [vmem:[#allocation13 + $0x8] sm:$0xf]
    %v6573 = vld [vmem:[#allocation13 + $0xc] sm:$0xf]
    %v6574 = vld [vmem:[#allocation13 + $0x10] sm:$0xf]
    %v6575 = vld [vmem:[#allocation13 + $0x14] sm:$0xf]
    %v6576 = vld [vmem:[#allocation13 + $0x18] sm:$0xf]
    %v6577 = vld [vmem:[#allocation13 + $0x1c] sm:$0xf]
    %v6578 = vld [vmem:[#allocation13 + $0x20] sm:$0xf]
    %v6579 = vld [vmem:[#allocation13 + $0x24] sm:$0xf]
    %v6580 = vld [vmem:[#allocation13 + $0x28] sm:$0xf]
    %v6581 = vld [vmem:[#allocation13 + $0x2c] sm:$0xf]
    %v6582 = vld [vmem:[#allocation13 + $0x30] sm:$0xf]
    %v6583 = vld [vmem:[#allocation13 + $0x34] sm:$0xf]
    %v6584 = vld [vmem:[#allocation13 + $0x38] sm:$0xf]
    %v6585 = vld [vmem:[#allocation13 + $0x3c] sm:$0xf]
    %v6586 = vld [vmem:[#allocation13 + $0x40] sm:$0xf]
    %v6587 = vld [vmem:[#allocation13 + $0x44] sm:$0xf]
    %v6588 = vld [vmem:[#allocation13 + $0x48] sm:$0xf]
    %v6589 = vld [vmem:[#allocation13 + $0x4c] sm:$0xf]
    %v6590 = vld [vmem:[#allocation13 + $0x50] sm:$0xf]
    %v6591 = vld [vmem:[#allocation13 + $0x54] sm:$0xf]
    %v6592 = vld [vmem:[#allocation13 + $0x58] sm:$0xf]
    %v6593 = vld [vmem:[#allocation13 + $0x5c] sm:$0xf]
    %v6594 = vld [vmem:[#allocation13 + $0x60] sm:$0xf]
    %v6595 = vld [vmem:[#allocation13 + $0x64] sm:$0xf]
    %v6596 = vld [vmem:[#allocation13 + $0x68] sm:$0xf]
    %v6597 = vld [vmem:[#allocation13 + $0x6c] sm:$0xf]
    %v6598 = vld [vmem:[#allocation13 + $0x70] sm:$0xf]
    %v6599 = vld [vmem:[#allocation13 + $0x74] sm:$0xf]
    %v6600 = vld [vmem:[#allocation13 + $0x78] sm:$0xf]
    %v6601 = vld [vmem:[#allocation13 + $0x7c] sm:$0xf]
    %v6602 = vld [vmem:[%s10] sm:$0x1]
    %v6604 = vlaneseq
    %v6605 = vshrl.u32 %v6604, 7
    %v6606 = vsub.s32 0, %v6605
    %v6607 = vrot.slane %v6602, %v6606
    %v6641 = vunpack.c.l.b16 %v6570
    %v6642 = vunpack.c.l.b16 %v6571
    %v6643 = vunpack.c.l.b16 %v6572
    %v6644 = vunpack.c.l.b16 %v6573
    %v6645 = vunpack.c.l.b16 %v6574
    %v6646 = vunpack.c.l.b16 %v6575
    %v6647 = vunpack.c.l.b16 %v6576
    %v6648 = vunpack.c.l.b16 %v6577
    %v6649 = vunpack.c.l.b16 %v6578
    %v6650 = vunpack.c.l.b16 %v6579
    %v6651 = vunpack.c.l.b16 %v6580
    %v6652 = vunpack.c.l.b16 %v6581
    %v6653 = vunpack.c.l.b16 %v6582
    %v6654 = vunpack.c.l.b16 %v6583
    %v6655 = vunpack.c.l.b16 %v6584
    %v6656 = vunpack.c.l.b16 %v6585
    %v6657 = vunpack.c.l.b16 %v6586
    %v6658 = vunpack.c.l.b16 %v6587
    %v6659 = vunpack.c.l.b16 %v6588
    %v6660 = vunpack.c.l.b16 %v6589
    %v6661 = vunpack.c.l.b16 %v6590
    %v6662 = vunpack.c.l.b16 %v6591
    %v6663 = vunpack.c.l.b16 %v6592
    %v6664 = vunpack.c.l.b16 %v6593
    %v6665 = vunpack.c.l.b16 %v6594
    %v6666 = vunpack.c.l.b16 %v6595
    %v6667 = vunpack.c.l.b16 %v6596
    %v6668 = vunpack.c.l.b16 %v6597
    %v6669 = vunpack.c.l.b16 %v6598
    %v6670 = vunpack.c.l.b16 %v6599
    %v6671 = vunpack.c.l.b16 %v6600
    %v6672 = vunpack.c.l.b16 %v6601
    %v6673 = vpack.c.b16 %v6642, %v6641
    %v6674 = vpack.c.b16 %v6644, %v6643
    %v6675 = vpack.c.b16 %v6646, %v6645
    %v6676 = vpack.c.b16 %v6648, %v6647
    %v6677 = vpack.c.b16 %v6650, %v6649
    %v6678 = vpack.c.b16 %v6652, %v6651
    %v6679 = vpack.c.b16 %v6654, %v6653
    %v6680 = vpack.c.b16 %v6656, %v6655
    %v6681 = vpack.c.b16 %v6658, %v6657
    %v6682 = vpack.c.b16 %v6660, %v6659
    %v6683 = vpack.c.b16 %v6662, %v6661
    %v6684 = vpack.c.b16 %v6664, %v6663
    %v6685 = vpack.c.b16 %v6666, %v6665
    %v6686 = vpack.c.b16 %v6668, %v6667
    %v6687 = vpack.c.b16 %v6670, %v6669
    %v6688 = vpack.c.b16 %v6672, %v6671
    %6705 = vmatprep.subr.bf16.mxu0 0
    %6706 = vmatpush1.bf16.msra.mxu0 %v6673
    %6707 = vmatprep.subr.bf16.mxu0 0
    %6708 = vmatpush1.bf16.msra.mxu0 %v6674
    %6709 = vmatprep.subr.bf16.mxu0 0
    %6710 = vmatpush1.bf16.msra.mxu0 %v6675
    %6711 = vmatprep.subr.bf16.mxu0 0
    %6712 = vmatpush1.bf16.msra.mxu0 %v6676
    %6713 = vmatprep.subr.bf16.mxu0 0
    %6714 = vmatpush1.bf16.msra.mxu0 %v6677
    %6715 = vmatprep.subr.bf16.mxu0 0
    %6716 = vmatpush1.bf16.msra.mxu0 %v6678
    %6717 = vmatprep.subr.bf16.mxu0 0
    %6718 = vmatpush1.bf16.msra.mxu0 %v6679
    %6719 = vmatprep.subr.bf16.mxu0 0
    %6720 = vmatpush1.bf16.msra.mxu0 %v6680
    %6721 = vmatprep.subr.bf16.mxu0 0
    %6722 = vmatpush1.bf16.msra.mxu0 %v6681
    %6723 = vmatprep.subr.bf16.mxu0 0
    %6724 = vmatpush1.bf16.msra.mxu0 %v6682
    %6725 = vmatprep.subr.bf16.mxu0 0
    %6726 = vmatpush1.bf16.msra.mxu0 %v6683
    %6727 = vmatprep.subr.bf16.mxu0 0
    %6728 = vmatpush1.bf16.msra.mxu0 %v6684
    %6729 = vmatprep.subr.bf16.mxu0 0
    %6730 = vmatpush1.bf16.msra.mxu0 %v6685
    %6731 = vmatprep.subr.bf16.mxu0 0
    %6732 = vmatpush1.bf16.msra.mxu0 %v6686
    %6733 = vmatprep.subr.bf16.mxu0 0
    %6734 = vmatpush1.bf16.msra.mxu0 %v6687
    %6735 = vmatprep.subr.bf16.mxu0 0
    %6736 = vmatpush1.bf16.msra.mxu0 %v6688
    %6737 = vmatprep.mubr.bf16.mxu0 %v6569
    %6738 = vmatmul.mubr.bf16.gmra.mrb[0].mxu0 %v6568
    %v6739 = vpop.f32.mrb[0].mxu0
    %v6740 = vadd.f32 %v6607, %v6739
    %v6741 = vpop.f32.mrb[0].mxu0
    %v6742 = vpop.f32.mrb[0].mxu0
    %v6743 = vadd.f32 %v6607, %v6742
    %v6744 = vpop.f32.mrb[0].mxu0
    %6745 = vdwg.mxu0
    %v6746 = vxor.u32 %v6740, 2147483648
    %v6747 = vxor.u32 %v6743, 2147483648
    %v6748 = vmul.f32 %v6746, 1.442695
    %v6749 = vpow.pop %v6748
    %v6750 = vmul.f32 %v6747, 1.442695
    %v6751 = vpow.pop %v6750
    %v6752 = vadd.f32 %v6749, 1.0
    %v6753 = vadd.f32 %v6751, 1.0
    %v6754 = vrcp.pop %v6752
    %v6755 = vmul.f32 1.0, %v6754
    %v6756 = vrcp.pop %v6753
    %v6757 = vmul.f32 1.0, %v6756
    %v6758 = vpack.c.bf16 %v6757, %v6755
    %v6760 = vcombine.high %v6758, %v6758
    %v6762 = vunpack.c.l.s4 1966171168
    %v6763 = vunpack.c.0.s8 %v6762
    %v6764 = vlaneseq
    %v6765 = vshrl.u32 %v6764, 7
    %v6766 = vsub.s32 %v6763, %v6765
    %v6767 = vrot.slane %v6758, %v6766
    %v6769 = vunpack.c.l.s4 1966171168
    %v6770 = vunpack.c.0.s8 %v6769
    %v6771 = vlaneseq
    %v6772 = vshrl.u32 %v6771, 7
    %v6773 = vsub.s32 %v6770, %v6772
    %v6774 = vrot.slane %v6760, %v6773
    %v6775 = vcombine.high %v6767, %v6767
    %v6776 = vcombine.high %v6774, %v6774
    %v6778 = vunpack.c.l.s4 1966171168
    %v6779 = vunpack.c.0.s8 %v6778
    %v6780 = vlaneseq
    %v6781 = vshrl.u32 %v6780, 7
    %v6782 = vsub.s32 %v6779, %v6781
    %v6783 = vrot.slane %v6767, %v6782
    %v6785 = vunpack.c.l.s4 1966171168
    %v6786 = vunpack.c.0.s8 %v6785
    %v6787 = vlaneseq
    %v6788 = vshrl.u32 %v6787, 7
    %v6789 = vsub.s32 %v6786, %v6788
    %v6790 = vrot.slane %v6774, %v6789
    %v6792 = vunpack.c.l.s4 1966171168
    %v6793 = vunpack.c.0.s8 %v6792
    %v6794 = vlaneseq
    %v6795 = vshrl.u32 %v6794, 7
    %v6796 = vsub.s32 %v6793, %v6795
    %v6797 = vrot.slane %v6775, %v6796
    %v6799 = vunpack.c.l.s4 1966171168
    %v6800 = vunpack.c.0.s8 %v6799
    %v6801 = vlaneseq
    %v6802 = vshrl.u32 %v6801, 7
    %v6803 = vsub.s32 %v6800, %v6802
    %v6804 = vrot.slane %v6776, %v6803
    %v6805 = vcombine.high %v6783, %v6783
    %v6806 = vcombine.high %v6790, %v6790
    %v6807 = vcombine.high %v6797, %v6797
    %v6808 = vcombine.high %v6804, %v6804
    %6817 = vst [vmem:[#allocation14] sm:$0x1] %v6783
    %6818 = vst [vmem:[#allocation14 + $0x1] sm:$0x1] %v6797
    %6819 = vst [vmem:[#allocation14 + $0x2] sm:$0x1] %v6805
    %6820 = vst [vmem:[#allocation14 + $0x3] sm:$0x1] %v6807
    %6821 = vst [vmem:[#allocation14 + $0x4] sm:$0x1] %v6790
    %6822 = vst [vmem:[#allocation14 + $0x5] sm:$0x1] %v6804
    %6823 = vst [vmem:[#allocation14 + $0x6] sm:$0x1] %v6806
    %6824 = vst [vmem:[#allocation14 + $0x7] sm:$0x1] %v6808
    // Predicated region
    $region74: #{tpu_custom_call.1} parent=1 // pred_check
      _
    $region75: #{tpu_custom_call.1} parent=1 // pred_check_branch
      %6826 = sbr.rel (0) target = $region77
    $region76: #{tpu_custom_call.1} parent=1 // pred_region
      %s6828 = ssub.s32 128, 16
      %6829 = vsyncadd [#allocation4], %s6828
      %s6830 = sshll.u32 [#allocation14], 4
      %s6831 = int_to_ptr.vmem [resolvable:$true] %s6830
      %6836 = dma.vmem_to_hbm [thread:$0]  %s6831, 16, %s11, [#allocation4], 16, 16, 1
    $region77: #{tpu_custom_call.1} parent=1 // pred_fallthru
      _
    // Predicated region
    $region78: #{tpu_custom_call.1} parent=1 // pred_check
      _
    $region79: #{tpu_custom_call.1} parent=1 // pred_check_branch
      %6838 = sbr.rel (0) target = $region81
    $region80: #{tpu_custom_call.1} parent=1 // pred_region
      %6839 = dma.done [#allocation4], 128
    $region81: #{tpu_custom_call.1} parent=1 // pred_fallthru
      _
    %6840 = vsyncpa [#allocation3], 1
    %6841 = vsyncpa [#allocation6], 1
    %6842 = vsyncpa [#allocation9], 1
    %6843 = vsyncpa [#allocation12], 1
    %6844 = vsyncpa [#allocation4], 1

</llo_original>
